<compile_context>
chip_gen: v5e
topology: v5e:2x2
jax: 0.10.0
libtpu: 0.0.40
codegen_flags: <defaults>
</compile_context>

<pallas_src>
import jax
import jax.numpy as jnp
from jax.experimental import pallas as pl
from jax.experimental.pallas import tpu as pltpu

# Logical and lane-dense (padded) layer dims.
D_IN, D_IN_PAD = 28 * 28, 896      # 896 = 7 * 128
D_HID, D_HID_PAD = 500, 512
D_OUT, D_OUT_PAD = 10, 128


def _mlp_kernel(x_ref,
                w1_ref, b1_ref, w2_ref, b2_ref, w3_ref, b3_ref,
                w4_ref, b4_ref, w5_ref, b5_ref,
                o_ref):
    # bf16 matmul inputs, f32 MXU accumulation; elementwise math kept in f32.
    h = x_ref[...]                                             # bf16 (TB, 896)

    h = jnp.dot(h, w1_ref[...], preferred_element_type=jnp.float32) + b1_ref[...]
    h = jnp.maximum(h, 0.0).astype(jnp.bfloat16)

    h = jnp.dot(h, w2_ref[...], preferred_element_type=jnp.float32) + b2_ref[...]
    h = jnp.maximum(h, 0.0).astype(jnp.bfloat16)

    h = jnp.dot(h, w3_ref[...], preferred_element_type=jnp.float32) + b3_ref[...]
    h = jnp.maximum(h, 0.0).astype(jnp.bfloat16)

    h = jnp.dot(h, w4_ref[...], preferred_element_type=jnp.float32) + b4_ref[...]
    h = jnp.maximum(h, 0.0).astype(jnp.bfloat16)

    h = jnp.dot(h, w5_ref[...], preferred_element_type=jnp.float32) + b5_ref[...]
    o_ref[...] = h.astype(o_ref.dtype)                         # lane-dense store


def _round_up(v, m):
    return (v + m - 1) // m * m


def all_fc_forward(x, padded_params):
    """x: (B, 1, 28, 28) or (B, 784). padded_params: 5x (w bf16 padded, b f32 padded).
    Returns (B, 10) float32."""
    B = x.shape[0]
    x2d = x.reshape(B, -1).astype(jnp.float32)
    assert x2d.shape[1] == D_IN

    # Batch tile: large tiles fill the MXU rows; small batches pad to a
    # sublane multiple (8).
    tile_b = 256 if B >= 256 else max(8, _round_up(B, 8))
    b_pad = _round_up(B, tile_b)
    num_tiles = b_pad // tile_b

    # Lane-dense bf16 activations: pad features 784->896 and batch B->b_pad.
    x_p = jnp.zeros((b_pad, D_IN_PAD), jnp.bfloat16)
    x_p = x_p.at[:B, :D_IN].set(x2d.astype(jnp.bfloat16))

    const_map = lambda i: (0, 0)          # weights/biases resident across grid
    flat_args = [x_p]
    in_specs = [pl.BlockSpec((tile_b, D_IN_PAD), lambda i: (i, 0))]
    for w, b in padded_params:
        flat_args += [w, b]
        in_specs += [pl.BlockSpec(w.shape, const_map),
                     pl.BlockSpec(b.shape, const_map)]

    flops = 2 * b_pad * (D_IN_PAD * D_HID_PAD
                         + 3 * D_HID_PAD * D_HID_PAD
                         + D_HID_PAD * D_OUT_PAD)
    bytes_accessed = (x_p.size * 2
                      + sum(w.size * 2 + b.size * 4 for w, b in padded_params)
                      + b_pad * D_OUT_PAD * 4)

    out = pl.pallas_call(
        _mlp_kernel,
        out_shape=jax.ShapeDtypeStruct((b_pad, D_OUT_PAD), jnp.float32),
        grid=(num_tiles,),
        in_specs=in_specs,
        out_specs=pl.BlockSpec((tile_b, D_OUT_PAD), lambda i: (i, 0)),
        compiler_params=pltpu.CompilerParams(
            dimension_semantics=("parallel",),
            vmem_limit_bytes=32 << 20),
        cost_estimate=pl.CostEstimate(
            flops=flops, transcendentals=0, bytes_accessed=bytes_accessed),
    )(*flat_args)
    return out[:B, :D_OUT]


def init_params(key):
    """PyTorch nn.Linear default init (uniform +-1/sqrt(fan_in)), f32, unpadded.
    Weights stored (in, out) so y = x @ W + b matches nn.Linear."""
    dims = [(D_IN, D_HID), (D_HID, D_HID), (D_HID, D_HID),
            (D_HID, D_HID), (D_HID, D_OUT)]
    params = []
    for fan_in, fan_out in dims:
        key, kw, kb = jax.random.split(key, 3)
        bound = 1.0 / jnp.sqrt(jnp.float32(fan_in))
        w = jax.random.uniform(kw, (fan_in, fan_out), jnp.float32, -bound, bound)
        b = jax.random.uniform(kb, (fan_out,), jnp.float32, -bound, bound)
        params.append((w, b))
    return params


def pad_params(params):
    """Zero-pad every layer to lane-dense shapes; weights -> bf16, biases stay f32."""
    pad_dims = ([(D_IN_PAD, D_HID_PAD)] + [(D_HID_PAD, D_HID_PAD)] * 3
                + [(D_HID_PAD, D_OUT_PAD)])
    out = []
    for (w, b), (pi, po) in zip(params, pad_dims):
        wp = jnp.zeros((pi, po), jnp.bfloat16)
        wp = wp.at[:w.shape[0], :w.shape[1]].set(w.astype(jnp.bfloat16))
        bp = jnp.zeros((1, po), jnp.float32).at[0, :b.shape[0]].set(b)
        out.append((wp, bp))
    return out


if __name__ == "__main__":
    key = jax.random.PRNGKey(0)
    k_in, k_p = jax.random.split(key)

    B = 2
    x = jax.random.normal(k_in, (B, 1, 28, 28), dtype=jnp.float32)
    params = init_params(k_p)
    padded_params = pad_params(params)

    out = jax.block_until_ready(all_fc_forward(x, padded_params))
    assert out.shape == (B, D_OUT)

    # Reference 1: mirror of kernel arithmetic (bf16 inputs, f32 accumulation).
    h = jnp.zeros((B, D_IN_PAD), jnp.bfloat16)
    h = h.at[:, :D_IN].set(x.reshape(B, -1).astype(jnp.bfloat16))
    for i, (w, b) in enumerate(padded_params):
        h = jnp.dot(h, w, preferred_element_type=jnp.float32) + b
        if i < 4:
            h = jnp.maximum(h, 0.0).astype(jnp.bfloat16)
    ref_mirror = h[:, :D_OUT]
    assert jnp.allclose(out, ref_mirror, atol=1e-2, rtol=1e-2)

    # Reference 2: original f32 module semantics (loose tol: bf16 weights/acts).
    h32 = x.reshape(B, -1)
    for i, (w, b) in enumerate(params):
        h32 = h32 @ w + b
        if i < 4:
            h32 = jnp.maximum(h32, 0.0)
    assert jnp.allclose(out, h32, atol=1e-1, rtol=1e-1)

    print("KERNEL_OK")
</pallas_src>

<mosaic_0001>
module attributes {stable_mosaic.version = 11 : i64} {
  func.func @_mlp_kernel(%arg0: i32, %arg1: memref<8x896xbf16, #tpu.memory_space<vmem>>, %arg2: memref<896x512xbf16, #tpu.memory_space<vmem>>, %arg3: memref<1x512xf32, #tpu.memory_space<vmem>>, %arg4: memref<512x512xbf16, #tpu.memory_space<vmem>>, %arg5: memref<1x512xf32, #tpu.memory_space<vmem>>, %arg6: memref<512x512xbf16, #tpu.memory_space<vmem>>, %arg7: memref<1x512xf32, #tpu.memory_space<vmem>>, %arg8: memref<512x512xbf16, #tpu.memory_space<vmem>>, %arg9: memref<1x512xf32, #tpu.memory_space<vmem>>, %arg10: memref<512x128xbf16, #tpu.memory_space<vmem>>, %arg11: memref<1x128xf32, #tpu.memory_space<vmem>>, %arg12: memref<8x128xf32, #tpu.memory_space<vmem>>) attributes {dimension_semantics = [#tpu.dimension_semantics<parallel>], iteration_bounds = array<i64: 1>, scalar_prefetch = 0 : i64, scratch_operands = 0 : i64, tpu.core_type = #tpu.core_type<tc>, window_params = [{transform_indices = @transform_0, window_bounds = array<i64: 8, 896>}, {pipeline_mode = #tpu.pipeline_mode<synchronous>, transform_indices = @transform_1, window_bounds = array<i64: 896, 512>}, {pipeline_mode = #tpu.pipeline_mode<synchronous>, transform_indices = @transform_2, window_bounds = array<i64: 1, 512>}, {pipeline_mode = #tpu.pipeline_mode<synchronous>, transform_indices = @transform_3, window_bounds = array<i64: 512, 512>}, {pipeline_mode = #tpu.pipeline_mode<synchronous>, transform_indices = @transform_4, window_bounds = array<i64: 1, 512>}, {pipeline_mode = #tpu.pipeline_mode<synchronous>, transform_indices = @transform_5, window_bounds = array<i64: 512, 512>}, {pipeline_mode = #tpu.pipeline_mode<synchronous>, transform_indices = @transform_6, window_bounds = array<i64: 1, 512>}, {pipeline_mode = #tpu.pipeline_mode<synchronous>, transform_indices = @transform_7, window_bounds = array<i64: 512, 512>}, {pipeline_mode = #tpu.pipeline_mode<synchronous>, transform_indices = @transform_8, window_bounds = array<i64: 1, 512>}, {pipeline_mode = #tpu.pipeline_mode<synchronous>, transform_indices = @transform_9, window_bounds = array<i64: 512, 128>}, {pipeline_mode = #tpu.pipeline_mode<synchronous>, transform_indices = @transform_10, window_bounds = array<i64: 1, 128>}, {transform_indices = @transform_11, window_bounds = array<i64: 8, 128>}]} {
    %c0 = arith.constant 0 : index
    %c0_0 = arith.constant 0 : index
    %0 = vector.load %arg1[%c0, %c0_0] : memref<8x896xbf16, #tpu.memory_space<vmem>>, vector<8x896xbf16>
    %c0_1 = arith.constant 0 : index
    %c0_2 = arith.constant 0 : index
    %1 = vector.load %arg2[%c0_1, %c0_2] : memref<896x512xbf16, #tpu.memory_space<vmem>>, vector<896x512xbf16>
    %cst = arith.constant dense<0.000000e+00> : vector<8x512xf32>
    %2 = tpu.matmul %0, %1, %cst {dimension_numbers = #tpu.dot_dimension_numbers<[1], [0], [0], [1], [0, 0, 1, 1], [], []>} : vector<8x896xbf16>, vector<896x512xbf16>, vector<8x512xf32> -> vector<8x512xf32>
    %c0_3 = arith.constant 0 : index
    %c0_4 = arith.constant 0 : index
    %3 = vector.load %arg3[%c0_3, %c0_4] : memref<1x512xf32, #tpu.memory_space<vmem>>, vector<1x512xf32>
    %4 = vector.broadcast %3 : vector<1x512xf32> to vector<8x512xf32>
    %5 = arith.addf %2, %4 : vector<8x512xf32>
    %cst_5 = arith.constant 0.000000e+00 : f32
    %6 = vector.broadcast %cst_5 : f32 to vector<8x512xf32>
    %7 = arith.maximumf %5, %6 : vector<8x512xf32>
    %8 = arith.truncf %7 : vector<8x512xf32> to vector<8x512xbf16>
    %c0_6 = arith.constant 0 : index
    %c0_7 = arith.constant 0 : index
    %9 = vector.load %arg4[%c0_6, %c0_7] : memref<512x512xbf16, #tpu.memory_space<vmem>>, vector<512x512xbf16>
    %cst_8 = arith.constant dense<0.000000e+00> : vector<8x512xf32>
    %10 = tpu.matmul %8, %9, %cst_8 {dimension_numbers = #tpu.dot_dimension_numbers<[1], [0], [0], [1], [0, 0, 1, 1], [], []>} : vector<8x512xbf16>, vector<512x512xbf16>, vector<8x512xf32> -> vector<8x512xf32>
    %c0_9 = arith.constant 0 : index
    %c0_10 = arith.constant 0 : index
    %11 = vector.load %arg5[%c0_9, %c0_10] : memref<1x512xf32, #tpu.memory_space<vmem>>, vector<1x512xf32>
    %12 = vector.broadcast %11 : vector<1x512xf32> to vector<8x512xf32>
    %13 = arith.addf %10, %12 : vector<8x512xf32>
    %cst_11 = arith.constant 0.000000e+00 : f32
    %14 = vector.broadcast %cst_11 : f32 to vector<8x512xf32>
    %15 = arith.maximumf %13, %14 : vector<8x512xf32>
    %16 = arith.truncf %15 : vector<8x512xf32> to vector<8x512xbf16>
    %c0_12 = arith.constant 0 : index
    %c0_13 = arith.constant 0 : index
    %17 = vector.load %arg6[%c0_12, %c0_13] : memref<512x512xbf16, #tpu.memory_space<vmem>>, vector<512x512xbf16>
    %cst_14 = arith.constant dense<0.000000e+00> : vector<8x512xf32>
    %18 = tpu.matmul %16, %17, %cst_14 {dimension_numbers = #tpu.dot_dimension_numbers<[1], [0], [0], [1], [0, 0, 1, 1], [], []>} : vector<8x512xbf16>, vector<512x512xbf16>, vector<8x512xf32> -> vector<8x512xf32>
    %c0_15 = arith.constant 0 : index
    %c0_16 = arith.constant 0 : index
    %19 = vector.load %arg7[%c0_15, %c0_16] : memref<1x512xf32, #tpu.memory_space<vmem>>, vector<1x512xf32>
    %20 = vector.broadcast %19 : vector<1x512xf32> to vector<8x512xf32>
    %21 = arith.addf %18, %20 : vector<8x512xf32>
    %cst_17 = arith.constant 0.000000e+00 : f32
    %22 = vector.broadcast %cst_17 : f32 to vector<8x512xf32>
    %23 = arith.maximumf %21, %22 : vector<8x512xf32>
    %24 = arith.truncf %23 : vector<8x512xf32> to vector<8x512xbf16>
    %c0_18 = arith.constant 0 : index
    %c0_19 = arith.constant 0 : index
    %25 = vector.load %arg8[%c0_18, %c0_19] : memref<512x512xbf16, #tpu.memory_space<vmem>>, vector<512x512xbf16>
    %cst_20 = arith.constant dense<0.000000e+00> : vector<8x512xf32>
    %26 = tpu.matmul %24, %25, %cst_20 {dimension_numbers = #tpu.dot_dimension_numbers<[1], [0], [0], [1], [0, 0, 1, 1], [], []>} : vector<8x512xbf16>, vector<512x512xbf16>, vector<8x512xf32> -> vector<8x512xf32>
    %c0_21 = arith.constant 0 : index
    %c0_22 = arith.constant 0 : index
    %27 = vector.load %arg9[%c0_21, %c0_22] : memref<1x512xf32, #tpu.memory_space<vmem>>, vector<1x512xf32>
    %28 = vector.broadcast %27 : vector<1x512xf32> to vector<8x512xf32>
    %29 = arith.addf %26, %28 : vector<8x512xf32>
    %cst_23 = arith.constant 0.000000e+00 : f32
    %30 = vector.broadcast %cst_23 : f32 to vector<8x512xf32>
    %31 = arith.maximumf %29, %30 : vector<8x512xf32>
    %32 = arith.truncf %31 : vector<8x512xf32> to vector<8x512xbf16>
    %c0_24 = arith.constant 0 : index
    %c0_25 = arith.constant 0 : index
    %33 = vector.load %arg10[%c0_24, %c0_25] : memref<512x128xbf16, #tpu.memory_space<vmem>>, vector<512x128xbf16>
    %cst_26 = arith.constant dense<0.000000e+00> : vector<8x128xf32>
    %34 = tpu.matmul %32, %33, %cst_26 {dimension_numbers = #tpu.dot_dimension_numbers<[1], [0], [0], [1], [0, 0, 1, 1], [], []>} : vector<8x512xbf16>, vector<512x128xbf16>, vector<8x128xf32> -> vector<8x128xf32>
    %c0_27 = arith.constant 0 : index
    %c0_28 = arith.constant 0 : index
    %35 = vector.load %arg11[%c0_27, %c0_28] : memref<1x128xf32, #tpu.memory_space<vmem>>, vector<1x128xf32>
    %36 = vector.broadcast %35 : vector<1x128xf32> to vector<8x128xf32>
    %37 = arith.addf %34, %36 : vector<8x128xf32>
    %c0_29 = arith.constant 0 : index
    %c0_30 = arith.constant 0 : index
    %38 = vector.load %arg12[%c0_29, %c0_30] : memref<8x128xf32, #tpu.memory_space<vmem>>, vector<8x128xf32>
    tpu.vector_store %arg12[%c0_29, %c0_30], %37 {strides = array<i32>} : memref<8x128xf32, #tpu.memory_space<vmem>>, vector<8x128xf32>,
    return
  }
  func.func @transform_0(%arg0: i32) -> (i32, i32) {
    %c0_i32 = arith.constant 0 : i32
    %c0_i32_0 = arith.constant 0 : i32
    return %arg0, %c0_i32 : i32, i32
  }
  func.func @transform_1(%arg0: i32) -> (i32, i32) {
    %c0_i32 = arith.constant 0 : i32
    %c0_i32_0 = arith.constant 0 : i32
    %c0_i32_1 = arith.constant 0 : i32
    return %c0_i32, %c0_i32_0 : i32, i32
  }
  func.func @transform_2(%arg0: i32) -> (i32, i32) {
    %c0_i32 = arith.constant 0 : i32
    %c0_i32_0 = arith.constant 0 : i32
    %c0_i32_1 = arith.constant 0 : i32
    return %c0_i32, %c0_i32_0 : i32, i32
  }
  func.func @transform_3(%arg0: i32) -> (i32, i32) {
    %c0_i32 = arith.constant 0 : i32
    %c0_i32_0 = arith.constant 0 : i32
    %c0_i32_1 = arith.constant 0 : i32
    return %c0_i32, %c0_i32_0 : i32, i32
  }
  func.func @transform_4(%arg0: i32) -> (i32, i32) {
    %c0_i32 = arith.constant 0 : i32
    %c0_i32_0 = arith.constant 0 : i32
    %c0_i32_1 = arith.constant 0 : i32
    return %c0_i32, %c0_i32_0 : i32, i32
  }
  func.func @transform_5(%arg0: i32) -> (i32, i32) {
    %c0_i32 = arith.constant 0 : i32
    %c0_i32_0 = arith.constant 0 : i32
    %c0_i32_1 = arith.constant 0 : i32
    return %c0_i32, %c0_i32_0 : i32, i32
  }
  func.func @transform_6(%arg0: i32) -> (i32, i32) {
    %c0_i32 = arith.constant 0 : i32
    %c0_i32_0 = arith.constant 0 : i32
    %c0_i32_1 = arith.constant 0 : i32
    return %c0_i32, %c0_i32_0 : i32, i32
  }
  func.func @transform_7(%arg0: i32) -> (i32, i32) {
    %c0_i32 = arith.constant 0 : i32
    %c0_i32_0 = arith.constant 0 : i32
    %c0_i32_1 = arith.constant 0 : i32
    return %c0_i32, %c0_i32_0 : i32, i32
  }
  func.func @transform_8(%arg0: i32) -> (i32, i32) {
    %c0_i32 = arith.constant 0 : i32
    %c0_i32_0 = arith.constant 0 : i32
    %c0_i32_1 = arith.constant 0 : i32
    return %c0_i32, %c0_i32_0 : i32, i32
  }
  func.func @transform_9(%arg0: i32) -> (i32, i32) {
    %c0_i32 = arith.constant 0 : i32
    %c0_i32_0 = arith.constant 0 : i32
    %c0_i32_1 = arith.constant 0 : i32
    return %c0_i32, %c0_i32_0 : i32, i32
  }
  func.func @transform_10(%arg0: i32) -> (i32, i32) {
    %c0_i32 = arith.constant 0 : i32
    %c0_i32_0 = arith.constant 0 : i32
    %c0_i32_1 = arith.constant 0 : i32
    return %c0_i32, %c0_i32_0 : i32, i32
  }
  func.func @transform_11(%arg0: i32) -> (i32, i32) {
    %c0_i32 = arith.constant 0 : i32
    %c0_i32_0 = arith.constant 0 : i32
    return %arg0, %c0_i32 : i32, i32
  }
}

</mosaic_0001>

<llo_original>
// kernel: tpu_custom_call.1
$region0: #{tpu_custom_call.1}
  #allocation0 [shape = 'u32[]', space=smem, size = 0x4, offset = 0x4, fixed_abs, tag = 'smem constant byte address 0x4 - core index']
  #allocation1 [shape = 'u32[72,128]{1,0:T(1,128)}', space=vmem, size = 0x9000, scoped, tag = 'internal scratch']
  %s0 = inlined_call_operand.hbm [shape: bf16[8,896], index: 0, kind: input, shape index: {}]
  %s1 = inlined_call_operand.hbm [shape: bf16[896,512], index: 1, kind: input, shape index: {}]
  %s2 = inlined_call_operand.hbm [shape: f32[1,512], index: 2, kind: input, shape index: {}]
  %s3 = inlined_call_operand.hbm [shape: bf16[512,512], index: 3, kind: input, shape index: {}]
  %s4 = inlined_call_operand.hbm [shape: f32[1,512], index: 4, kind: input, shape index: {}]
  %s5 = inlined_call_operand.hbm [shape: bf16[512,512], index: 5, kind: input, shape index: {}]
  %s6 = inlined_call_operand.vmem [shape: f32[1,512], index: 6, kind: input, shape index: {}]
  %s7 = inlined_call_operand.hbm [shape: bf16[512,512], index: 7, kind: input, shape index: {}]
  %s8 = inlined_call_operand.hbm [shape: f32[1,512], index: 8, kind: input, shape index: {}]
  %s9 = inlined_call_operand.hbm [shape: bf16[512,128], index: 9, kind: input, shape index: {}]
  %s10 = inlined_call_operand.vmem [shape: f32[1,128], index: 10, kind: input, shape index: {}]
  %s11 = inlined_call_operand.hbm [shape: f32[8,128], index: 11, kind: output, shape index: {}]
  %s12 = sld [smem:[#allocation0]]
  $region90: #{tpu_custom_call.1} parent=0
    _
  %s14 = ssub.s32 1, %s12
  %s15 = scalar_select 0, %s14, %s12
  $region1: #{tpu_custom_call.1} parent=0
    #allocation2 [shape = 'u8[14336]{0}', space=vmem, size = 0x3800, scoped, tag = 'input window, operand 0, single buffered']
    #allocation3 [shape = 's32[1]{0}', space=sflag, size = 0x4, scoped, tag = 'scoped memory for tpu_custom_call.1']
    #allocation4 [shape = 's32[1]{0}', space=sflag, size = 0x4, scoped, tag = 'scoped memory for tpu_custom_call.1']
    #allocation5 [shape = 'u8[917504]{0}', space=vmem, size = 0xe0000, scoped, tag = 'input window, operand 1, single buffered']
    #allocation6 [shape = 's32[1]{0}', space=sflag, size = 0x4, scoped, tag = 'scoped memory for tpu_custom_call.1']
    #allocation7 [shape = 'u8[2048]{0}', space=vmem, size = 0x800, scoped, tag = 'input window, operand 2, single buffered']
    #allocation8 [shape = 'u8[524288]{0}', space=vmem, size = 0x80000, scoped, tag = 'input window, operand 3, single buffered']
    #allocation9 [shape = 's32[1]{0}', space=sflag, size = 0x4, scoped, tag = 'scoped memory for tpu_custom_call.1']
    #allocation10 [shape = 'u8[2048]{0}', space=vmem, size = 0x800, scoped, tag = 'input window, operand 4, single buffered']
    #allocation11 [shape = 'u8[524288]{0}', space=vmem, size = 0x80000, scoped, tag = 'input window, operand 5, single buffered']
    #allocation12 [shape = 's32[1]{0}', space=sflag, size = 0x4, scoped, tag = 'scoped memory for tpu_custom_call.1']
    #allocation13 [shape = 'u8[524288]{0}', space=vmem, size = 0x80000, scoped, tag = 'input window, operand 7, single buffered']
    #allocation14 [shape = 'u8[2048]{0}', space=vmem, size = 0x800, scoped, tag = 'input window, operand 8, single buffered']
    #allocation15 [shape = 's32[1]{0}', space=sflag, size = 0x4, scoped, tag = 'scoped memory for tpu_custom_call.1']
    #allocation16 [shape = 'u8[131072]{0}', space=vmem, size = 0x20000, scoped, tag = 'input window, operand 9, single buffered']
    #allocation17 [shape = 'u8[4096]{0}', space=vmem, size = 0x1000, scoped, tag = 'output window, operand 0, single buffered']
    %16 = vsyncpa [#allocation3], 0
    %17 = vsyncpa [#allocation6], 0
    %18 = vsyncpa [#allocation9], 0
    %19 = vsyncpa [#allocation12], 0
    %20 = vsyncpa [#allocation15], 0
    %21 = vsyncpa [#allocation4], 0
    // Predicated region
    $region2: #{tpu_custom_call.1} parent=1 // pred_check
      _
    $region3: #{tpu_custom_call.1} parent=1 // pred_check_branch
      %23 = sbr.rel (0) target = $region5
    $region4: #{tpu_custom_call.1} parent=1 // pred_region
      %25 = vsyncadd [#allocation3], 0
      %s27 = sshll.u32 %s0, 4
      %s28 = int_to_ptr.hbm [resolvable:$true] %s27
      %s29 = sshll.u32 [#allocation2], 4
      %s30 = int_to_ptr.vmem [resolvable:$true] %s29
      %32 = dma.hbm_to_vmem [thread:$0]  %s28, 448, %s30, [#allocation3]
    $region5: #{tpu_custom_call.1} parent=1 // pred_fallthru
      _
    // Predicated region
    $region6: #{tpu_custom_call.1} parent=1 // pred_check
      _
    $region7: #{tpu_custom_call.1} parent=1 // pred_check_branch
      %34 = sbr.rel (0) target = $region9
    $region8: #{tpu_custom_call.1} parent=1 // pred_region
      %36 = vsyncadd [#allocation6], 0
      %s37 = sshll.u32 %s1, 4
      %s38 = int_to_ptr.hbm [resolvable:$true] %s37
      %s39 = sshll.u32 [#allocation5], 4
      %s40 = int_to_ptr.vmem [resolvable:$true] %s39
      %45 = dma.hbm_to_vmem [thread:$0]  %s38, 28672, %s40, [#allocation6], 256, 256, 16
    $region9: #{tpu_custom_call.1} parent=1 // pred_fallthru
      _
    // Predicated region
    $region10: #{tpu_custom_call.1} parent=1 // pred_check
      _
    $region11: #{tpu_custom_call.1} parent=1 // pred_check_branch
      %47 = sbr.rel (0) target = $region13
    $region12: #{tpu_custom_call.1} parent=1 // pred_region
      %49 = vsyncadd [#allocation6], 0
      %s51 = sshll.u32 %s2, 4
      %s52 = int_to_ptr.hbm [resolvable:$true] %s51
      %s53 = sshll.u32 [#allocation7], 4
      %s54 = int_to_ptr.vmem [resolvable:$true] %s53
      %56 = dma.hbm_to_vmem [thread:$0]  %s52, 64, %s54, [#allocation6]
    $region13: #{tpu_custom_call.1} parent=1 // pred_fallthru
      _
    // Predicated region
    $region14: #{tpu_custom_call.1} parent=1 // pred_check
      _
    $region15: #{tpu_custom_call.1} parent=1 // pred_check_branch
      %58 = sbr.rel (0) target = $region17
    $region16: #{tpu_custom_call.1} parent=1 // pred_region
      %60 = vsyncadd [#allocation9], 0
      %s61 = sshll.u32 %s3, 4
      %s62 = int_to_ptr.hbm [resolvable:$true] %s61
      %s63 = sshll.u32 [#allocation8], 4
      %s64 = int_to_ptr.vmem [resolvable:$true] %s63
      %69 = dma.hbm_to_vmem [thread:$0]  %s62, 16384, %s64, [#allocation9], 256, 256, 16
    $region17: #{tpu_custom_call.1} parent=1 // pred_fallthru
      _
    // Predicated region
    $region18: #{tpu_custom_call.1} parent=1 // pred_check
      _
    $region19: #{tpu_custom_call.1} parent=1 // pred_check_branch
      %71 = sbr.rel (0) target = $region21
    $region20: #{tpu_custom_call.1} parent=1 // pred_region
      %73 = vsyncadd [#allocation9], 0
      %s75 = sshll.u32 %s4, 4
      %s76 = int_to_ptr.hbm [resolvable:$true] %s75
      %s77 = sshll.u32 [#allocation10], 4
      %s78 = int_to_ptr.vmem [resolvable:$true] %s77
      %80 = dma.hbm_to_vmem [thread:$0]  %s76, 64, %s78, [#allocation9]
    $region21: #{tpu_custom_call.1} parent=1 // pred_fallthru
      _
    // Predicated region
    $region22: #{tpu_custom_call.1} parent=1 // pred_check
      _
    $region23: #{tpu_custom_call.1} parent=1 // pred_check_branch
      %82 = sbr.rel (0) target = $region25
    $region24: #{tpu_custom_call.1} parent=1 // pred_region
      %84 = vsyncadd [#allocation12], 0
      %s85 = sshll.u32 %s5, 4
      %s86 = int_to_ptr.hbm [resolvable:$true] %s85
      %s87 = sshll.u32 [#allocation11], 4
      %s88 = int_to_ptr.vmem [resolvable:$true] %s87
      %93 = dma.hbm_to_vmem [thread:$0]  %s86, 16384, %s88, [#allocation12], 256, 256, 16
    $region25: #{tpu_custom_call.1} parent=1 // pred_fallthru
      _
    // Predicated region
    $region26: #{tpu_custom_call.1} parent=1 // pred_check
      _
    $region27: #{tpu_custom_call.1} parent=1 // pred_check_branch
      %95 = sbr.rel (0) target = $region29
    $region28: #{tpu_custom_call.1} parent=1 // pred_region
      _
    $region29: #{tpu_custom_call.1} parent=1 // pred_fallthru
      _
    // Predicated region
    $region30: #{tpu_custom_call.1} parent=1 // pred_check
      _
    $region31: #{tpu_custom_call.1} parent=1 // pred_check_branch
      %97 = sbr.rel (0) target = $region33
    $region32: #{tpu_custom_call.1} parent=1 // pred_region
      %99 = vsyncadd [#allocation12], 0
      %s100 = sshll.u32 %s7, 4
      %s101 = int_to_ptr.hbm [resolvable:$true] %s100
      %s102 = sshll.u32 [#allocation13], 4
      %s103 = int_to_ptr.vmem [resolvable:$true] %s102
      %108 = dma.hbm_to_vmem [thread:$0]  %s101, 16384, %s103, [#allocation12], 256, 256, 16
    $region33: #{tpu_custom_call.1} parent=1 // pred_fallthru
      _
    // Predicated region
    $region34: #{tpu_custom_call.1} parent=1 // pred_check
      _
    $region35: #{tpu_custom_call.1} parent=1 // pred_check_branch
      %110 = sbr.rel (0) target = $region37
    $region36: #{tpu_custom_call.1} parent=1 // pred_region
      %112 = vsyncadd [#allocation15], 0
      %s114 = sshll.u32 %s8, 4
      %s115 = int_to_ptr.hbm [resolvable:$true] %s114
      %s116 = sshll.u32 [#allocation14], 4
      %s117 = int_to_ptr.vmem [resolvable:$true] %s116
      %119 = dma.hbm_to_vmem [thread:$0]  %s115, 64, %s117, [#allocation15]
    $region37: #{tpu_custom_call.1} parent=1 // pred_fallthru
      _
    // Predicated region
    $region38: #{tpu_custom_call.1} parent=1 // pred_check
      _
    $region39: #{tpu_custom_call.1} parent=1 // pred_check_branch
      %121 = sbr.rel (0) target = $region41
    $region40: #{tpu_custom_call.1} parent=1 // pred_region
      %123 = vsyncadd [#allocation15], 0
      %s124 = sshll.u32 %s9, 4
      %s125 = int_to_ptr.hbm [resolvable:$true] %s124
      %s126 = sshll.u32 [#allocation16], 4
      %s127 = int_to_ptr.vmem [resolvable:$true] %s126
      %132 = dma.hbm_to_vmem [thread:$0]  %s125, 4096, %s127, [#allocation15], 64, 64, 4
    $region41: #{tpu_custom_call.1} parent=1 // pred_fallthru
      _
    // Predicated region
    $region42: #{tpu_custom_call.1} parent=1 // pred_check
      _
    $region43: #{tpu_custom_call.1} parent=1 // pred_check_branch
      %134 = sbr.rel (0) target = $region45
    $region44: #{tpu_custom_call.1} parent=1 // pred_region
      _
    $region45: #{tpu_custom_call.1} parent=1 // pred_fallthru
      _
    // Predicated region
    $region46: #{tpu_custom_call.1} parent=1 // pred_check
      _
    $region47: #{tpu_custom_call.1} parent=1 // pred_check_branch
      %136 = sbr.rel (0) target = $region49
    $region48: #{tpu_custom_call.1} parent=1 // pred_region
      %138 = dma.done [#allocation3], 448
    $region49: #{tpu_custom_call.1} parent=1 // pred_fallthru
      _
    // Predicated region
    $region50: #{tpu_custom_call.1} parent=1 // pred_check
      _
    $region51: #{tpu_custom_call.1} parent=1 // pred_check_branch
      %140 = sbr.rel (0) target = $region53
    $region52: #{tpu_custom_call.1} parent=1 // pred_region
      %142 = dma.done [#allocation6], 28672
    $region53: #{tpu_custom_call.1} parent=1 // pred_fallthru
      _
    // Predicated region
    $region54: #{tpu_custom_call.1} parent=1 // pred_check
      _
    $region55: #{tpu_custom_call.1} parent=1 // pred_check_branch
      %144 = sbr.rel (0) target = $region57
    $region56: #{tpu_custom_call.1} parent=1 // pred_region
      %146 = dma.done [#allocation6], 64
    $region57: #{tpu_custom_call.1} parent=1 // pred_fallthru
      _
    // Predicated region
    $region58: #{tpu_custom_call.1} parent=1 // pred_check
      _
    $region59: #{tpu_custom_call.1} parent=1 // pred_check_branch
      %148 = sbr.rel (0) target = $region61
    $region60: #{tpu_custom_call.1} parent=1 // pred_region
      %150 = dma.done [#allocation9], 16384
    $region61: #{tpu_custom_call.1} parent=1 // pred_fallthru
      _
    // Predicated region
    $region62: #{tpu_custom_call.1} parent=1 // pred_check
      _
    $region63: #{tpu_custom_call.1} parent=1 // pred_check_branch
      %152 = sbr.rel (0) target = $region65
    $region64: #{tpu_custom_call.1} parent=1 // pred_region
      %154 = dma.done [#allocation9], 64
    $region65: #{tpu_custom_call.1} parent=1 // pred_fallthru
      _
    // Predicated region
    $region66: #{tpu_custom_call.1} parent=1 // pred_check
      _
    $region67: #{tpu_custom_call.1} parent=1 // pred_check_branch
      %156 = sbr.rel (0) target = $region69
    $region68: #{tpu_custom_call.1} parent=1 // pred_region
      %158 = dma.done [#allocation12], 16384
    $region69: #{tpu_custom_call.1} parent=1 // pred_fallthru
      _
    // Predicated region
    $region70: #{tpu_custom_call.1} parent=1 // pred_check
      _
    $region71: #{tpu_custom_call.1} parent=1 // pred_check_branch
      %160 = sbr.rel (0) target = $region73
    $region72: #{tpu_custom_call.1} parent=1 // pred_region
      %162 = dma.done [#allocation12], 16384
    $region73: #{tpu_custom_call.1} parent=1 // pred_fallthru
      _
    // Predicated region
    $region74: #{tpu_custom_call.1} parent=1 // pred_check
      _
    $region75: #{tpu_custom_call.1} parent=1 // pred_check_branch
      %164 = sbr.rel (0) target = $region77
    $region76: #{tpu_custom_call.1} parent=1 // pred_region
      %166 = dma.done [#allocation15], 64
    $region77: #{tpu_custom_call.1} parent=1 // pred_fallthru
      _
    // Predicated region
    $region78: #{tpu_custom_call.1} parent=1 // pred_check
      _
    $region79: #{tpu_custom_call.1} parent=1 // pred_check_branch
      %168 = sbr.rel (0) target = $region81
    $region80: #{tpu_custom_call.1} parent=1 // pred_region
      %170 = dma.done [#allocation15], 4096
    $region81: #{tpu_custom_call.1} parent=1 // pred_fallthru
      _
    %v171 = vld [vmem:[#allocation2] sm:$0xff]
    %v172 = vld [vmem:[#allocation2 + $0x8] sm:$0xff]
    %v173 = vld [vmem:[#allocation2 + $0x10] sm:$0xff]
    %v174 = vld [vmem:[#allocation2 + $0x18] sm:$0xf]
    %v175 = vld [vmem:[#allocation5] sm:$0xff]
    %v176 = vld [vmem:[#allocation5 + $0x8] sm:$0xff]
    %v177 = vld [vmem:[#allocation5 + $0x10] sm:$0xff]
    %v178 = vld [vmem:[#allocation5 + $0x18] sm:$0xff]
    %v179 = vld [vmem:[#allocation5 + $0x20] sm:$0xff]
    %v180 = vld [vmem:[#allocation5 + $0x28] sm:$0xff]
    %v181 = vld [vmem:[#allocation5 + $0x30] sm:$0xff]
    %v182 = vld [vmem:[#allocation5 + $0x38] sm:$0xff]
    %v183 = vld [vmem:[#allocation5 + $0x40] sm:$0xff]
    %v184 = vld [vmem:[#allocation5 + $0x48] sm:$0xff]
    %v185 = vld [vmem:[#allocation5 + $0x50] sm:$0xff]
    %v186 = vld [vmem:[#allocation5 + $0x58] sm:$0xff]
    %v187 = vld [vmem:[#allocation5 + $0x60] sm:$0xff]
    %v188 = vld [vmem:[#allocation5 + $0x68] sm:$0xff]
    %v189 = vld [vmem:[#allocation5 + $0x70] sm:$0xff]
    %v190 = vld [vmem:[#allocation5 + $0x78] sm:$0xff]
    %v191 = vld [vmem:[#allocation5 + $0x80] sm:$0xff]
    %v192 = vld [vmem:[#allocation5 + $0x88] sm:$0xff]
    %v193 = vld [vmem:[#allocation5 + $0x90] sm:$0xff]
    %v194 = vld [vmem:[#allocation5 + $0x98] sm:$0xff]
    %v195 = vld [vmem:[#allocation5 + $0xa0] sm:$0xff]
    %v196 = vld [vmem:[#allocation5 + $0xa8] sm:$0xff]
    %v197 = vld [vmem:[#allocation5 + $0xb0] sm:$0xff]
    %v198 = vld [vmem:[#allocation5 + $0xb8] sm:$0xff]
    %v199 = vld [vmem:[#allocation5 + $0xc0] sm:$0xff]
    %v200 = vld [vmem:[#allocation5 + $0xc8] sm:$0xff]
    %v201 = vld [vmem:[#allocation5 + $0xd0] sm:$0xff]
    %v202 = vld [vmem:[#allocation5 + $0xd8] sm:$0xff]
    %v203 = vld [vmem:[#allocation5 + $0xe0] sm:$0xff]
    %v204 = vld [vmem:[#allocation5 + $0xe8] sm:$0xff]
    %v205 = vld [vmem:[#allocation5 + $0xf0] sm:$0xff]
    %v206 = vld [vmem:[#allocation5 + $0xf8] sm:$0xff]
    %v207 = vld [vmem:[#allocation5 + $0x100] sm:$0xff]
    %v208 = vld [vmem:[#allocation5 + $0x108] sm:$0xff]
    %v209 = vld [vmem:[#allocation5 + $0x110] sm:$0xff]
    %v210 = vld [vmem:[#allocation5 + $0x118] sm:$0xff]
    %v211 = vld [vmem:[#allocation5 + $0x120] sm:$0xff]
    %v212 = vld [vmem:[#allocation5 + $0x128] sm:$0xff]
    %v213 = vld [vmem:[#allocation5 + $0x130] sm:$0xff]
    %v214 = vld [vmem:[#allocation5 + $0x138] sm:$0xff]
    %v215 = vld [vmem:[#allocation5 + $0x140] sm:$0xff]
    %v216 = vld [vmem:[#allocation5 + $0x148] sm:$0xff]
    %v217 = vld [vmem:[#allocation5 + $0x150] sm:$0xff]
    %v218 = vld [vmem:[#allocation5 + $0x158] sm:$0xff]
    %v219 = vld [vmem:[#allocation5 + $0x160] sm:$0xff]
    %v220 = vld [vmem:[#allocation5 + $0x168] sm:$0xff]
    %v221 = vld [vmem:[#allocation5 + $0x170] sm:$0xff]
    %v222 = vld [vmem:[#allocation5 + $0x178] sm:$0xff]
    %v223 = vld [vmem:[#allocation5 + $0x180] sm:$0xff]
    %v224 = vld [vmem:[#allocation5 + $0x188] sm:$0xff]
    %v225 = vld [vmem:[#allocation5 + $0x190] sm:$0xff]
    %v226 = vld [vmem:[#allocation5 + $0x198] sm:$0xff]
    %v227 = vld [vmem:[#allocation5 + $0x1a0] sm:$0xff]
    %v228 = vld [vmem:[#allocation5 + $0x1a8] sm:$0xff]
    %v229 = vld [vmem:[#allocation5 + $0x1b0] sm:$0xff]
    %v230 = vld [vmem:[#allocation5 + $0x1b8] sm:$0xff]
    %v231 = vld [vmem:[#allocation5 + $0x1c0] sm:$0xff]
    %v232 = vld [vmem:[#allocation5 + $0x1c8] sm:$0xff]
    %v233 = vld [vmem:[#allocation5 + $0x1d0] sm:$0xff]
    %v234 = vld [vmem:[#allocation5 + $0x1d8] sm:$0xff]
    %v235 = vld [vmem:[#allocation5 + $0x1e0] sm:$0xff]
    %v236 = vld [vmem:[#allocation5 + $0x1e8] sm:$0xff]
    %v237 = vld [vmem:[#allocation5 + $0x1f0] sm:$0xff]
    %v238 = vld [vmem:[#allocation5 + $0x1f8] sm:$0xff]
    %v239 = vld [vmem:[#allocation5 + $0x200] sm:$0xff]
    %v240 = vld [vmem:[#allocation5 + $0x208] sm:$0xff]
    %v241 = vld [vmem:[#allocation5 + $0x210] sm:$0xff]
    %v242 = vld [vmem:[#allocation5 + $0x218] sm:$0xff]
    %v243 = vld [vmem:[#allocation5 + $0x220] sm:$0xff]
    %v244 = vld [vmem:[#allocation5 + $0x228] sm:$0xff]
    %v245 = vld [vmem:[#allocation5 + $0x230] sm:$0xff]
    %v246 = vld [vmem:[#allocation5 + $0x238] sm:$0xff]
    %v247 = vld [vmem:[#allocation5 + $0x240] sm:$0xff]
    %v248 = vld [vmem:[#allocation5 + $0x248] sm:$0xff]
    %v249 = vld [vmem:[#allocation5 + $0x250] sm:$0xff]
    %v250 = vld [vmem:[#allocation5 + $0x258] sm:$0xff]
    %v251 = vld [vmem:[#allocation5 + $0x260] sm:$0xff]
    %v252 = vld [vmem:[#allocation5 + $0x268] sm:$0xff]
    %v253 = vld [vmem:[#allocation5 + $0x270] sm:$0xff]
    %v254 = vld [vmem:[#allocation5 + $0x278] sm:$0xff]
    %v255 = vld [vmem:[#allocation5 + $0x280] sm:$0xff]
    %v256 = vld [vmem:[#allocation5 + $0x288] sm:$0xff]
    %v257 = vld [vmem:[#allocation5 + $0x290] sm:$0xff]
    %v258 = vld [vmem:[#allocation5 + $0x298] sm:$0xff]
    %v259 = vld [vmem:[#allocation5 + $0x2a0] sm:$0xff]
    %v260 = vld [vmem:[#allocation5 + $0x2a8] sm:$0xff]
    %v261 = vld [vmem:[#allocation5 + $0x2b0] sm:$0xff]
    %v262 = vld [vmem:[#allocation5 + $0x2b8] sm:$0xff]
    %v263 = vld [vmem:[#allocation5 + $0x2c0] sm:$0xff]
    %v264 = vld [vmem:[#allocation5 + $0x2c8] sm:$0xff]
    %v265 = vld [vmem:[#allocation5 + $0x2d0] sm:$0xff]
    %v266 = vld [vmem:[#allocation5 + $0x2d8] sm:$0xff]
    %v267 = vld [vmem:[#allocation5 + $0x2e0] sm:$0xff]
    %v268 = vld [vmem:[#allocation5 + $0x2e8] sm:$0xff]
    %v269 = vld [vmem:[#allocation5 + $0x2f0] sm:$0xff]
    %v270 = vld [vmem:[#allocation5 + $0x2f8] sm:$0xff]
    %v271 = vld [vmem:[#allocation5 + $0x300] sm:$0xff]
    %v272 = vld [vmem:[#allocation5 + $0x308] sm:$0xff]
    %v273 = vld [vmem:[#allocation5 + $0x310] sm:$0xff]
    %v274 = vld [vmem:[#allocation5 + $0x318] sm:$0xff]
    %v275 = vld [vmem:[#allocation5 + $0x320] sm:$0xff]
    %v276 = vld [vmem:[#allocation5 + $0x328] sm:$0xff]
    %v277 = vld [vmem:[#allocation5 + $0x330] sm:$0xff]
    %v278 = vld [vmem:[#allocation5 + $0x338] sm:$0xff]
    %v279 = vld [vmem:[#allocation5 + $0x340] sm:$0xff]
    %v280 = vld [vmem:[#allocation5 + $0x348] sm:$0xff]
    %v281 = vld [vmem:[#allocation5 + $0x350] sm:$0xff]
    %v282 = vld [vmem:[#allocation5 + $0x358] sm:$0xff]
    %v283 = vld [vmem:[#allocation5 + $0x360] sm:$0xff]
    %v284 = vld [vmem:[#allocation5 + $0x368] sm:$0xff]
    %v285 = vld [vmem:[#allocation5 + $0x370] sm:$0xff]
    %v286 = vld [vmem:[#allocation5 + $0x378] sm:$0xff]
    %v287 = vld [vmem:[#allocation5 + $0x380] sm:$0xff]
    %v288 = vld [vmem:[#allocation5 + $0x388] sm:$0xff]
    %v289 = vld [vmem:[#allocation5 + $0x390] sm:$0xff]
    %v290 = vld [vmem:[#allocation5 + $0x398] sm:$0xff]
    %v291 = vld [vmem:[#allocation5 + $0x3a0] sm:$0xff]
    %v292 = vld [vmem:[#allocation5 + $0x3a8] sm:$0xff]
    %v293 = vld [vmem:[#allocation5 + $0x3b0] sm:$0xff]
    %v294 = vld [vmem:[#allocation5 + $0x3b8] sm:$0xff]
    %v295 = vld [vmem:[#allocation5 + $0x3c0] sm:$0xff]
    %v296 = vld [vmem:[#allocation5 + $0x3c8] sm:$0xff]
    %v297 = vld [vmem:[#allocation5 + $0x3d0] sm:$0xff]
    %v298 = vld [vmem:[#allocation5 + $0x3d8] sm:$0xff]
    %v299 = vld [vmem:[#allocation5 + $0x3e0] sm:$0xff]
    %v300 = vld [vmem:[#allocation5 + $0x3e8] sm:$0xff]
    %v301 = vld [vmem:[#allocation5 + $0x3f0] sm:$0xff]
    %v302 = vld [vmem:[#allocation5 + $0x3f8] sm:$0xff]
    %v303 = vld [vmem:[#allocation5 + $0x400] sm:$0xff]
    %v304 = vld [vmem:[#allocation5 + $0x408] sm:$0xff]
    %v305 = vld [vmem:[#allocation5 + $0x410] sm:$0xff]
    %v306 = vld [vmem:[#allocation5 + $0x418] sm:$0xff]
    %v307 = vld [vmem:[#allocation5 + $0x420] sm:$0xff]
    %v308 = vld [vmem:[#allocation5 + $0x428] sm:$0xff]
    %v309 = vld [vmem:[#allocation5 + $0x430] sm:$0xff]
    %v310 = vld [vmem:[#allocation5 + $0x438] sm:$0xff]
    %v311 = vld [vmem:[#allocation5 + $0x440] sm:$0xff]
    %v312 = vld [vmem:[#allocation5 + $0x448] sm:$0xff]
    %v313 = vld [vmem:[#allocation5 + $0x450] sm:$0xff]
    %v314 = vld [vmem:[#allocation5 + $0x458] sm:$0xff]
    %v315 = vld [vmem:[#allocation5 + $0x460] sm:$0xff]
    %v316 = vld [vmem:[#allocation5 + $0x468] sm:$0xff]
    %v317 = vld [vmem:[#allocation5 + $0x470] sm:$0xff]
    %v318 = vld [vmem:[#allocation5 + $0x478] sm:$0xff]
    %v319 = vld [vmem:[#allocation5 + $0x480] sm:$0xff]
    %v320 = vld [vmem:[#allocation5 + $0x488] sm:$0xff]
    %v321 = vld [vmem:[#allocation5 + $0x490] sm:$0xff]
    %v322 = vld [vmem:[#allocation5 + $0x498] sm:$0xff]
    %v323 = vld [vmem:[#allocation5 + $0x4a0] sm:$0xff]
    %v324 = vld [vmem:[#allocation5 + $0x4a8] sm:$0xff]
    %v325 = vld [vmem:[#allocation5 + $0x4b0] sm:$0xff]
    %v326 = vld [vmem:[#allocation5 + $0x4b8] sm:$0xff]
    %v327 = vld [vmem:[#allocation5 + $0x4c0] sm:$0xff]
    %v328 = vld [vmem:[#allocation5 + $0x4c8] sm:$0xff]
    %v329 = vld [vmem:[#allocation5 + $0x4d0] sm:$0xff]
    %v330 = vld [vmem:[#allocation5 + $0x4d8] sm:$0xff]
    %v331 = vld [vmem:[#allocation5 + $0x4e0] sm:$0xff]
    %v332 = vld [vmem:[#allocation5 + $0x4e8] sm:$0xff]
    %v333 = vld [vmem:[#allocation5 + $0x4f0] sm:$0xff]
    %v334 = vld [vmem:[#allocation5 + $0x4f8] sm:$0xff]
    %v335 = vld [vmem:[#allocation5 + $0x500] sm:$0xff]
    %v336 = vld [vmem:[#allocation5 + $0x508] sm:$0xff]
    %v337 = vld [vmem:[#allocation5 + $0x510] sm:$0xff]
    %v338 = vld [vmem:[#allocation5 + $0x518] sm:$0xff]
    %v339 = vld [vmem:[#allocation5 + $0x520] sm:$0xff]
    %v340 = vld [vmem:[#allocation5 + $0x528] sm:$0xff]
    %v341 = vld [vmem:[#allocation5 + $0x530] sm:$0xff]
    %v342 = vld [vmem:[#allocation5 + $0x538] sm:$0xff]
    %v343 = vld [vmem:[#allocation5 + $0x540] sm:$0xff]
    %v344 = vld [vmem:[#allocation5 + $0x548] sm:$0xff]
    %v345 = vld [vmem:[#allocation5 + $0x550] sm:$0xff]
    %v346 = vld [vmem:[#allocation5 + $0x558] sm:$0xff]
    %v347 = vld [vmem:[#allocation5 + $0x560] sm:$0xff]
    %v348 = vld [vmem:[#allocation5 + $0x568] sm:$0xff]
    %v349 = vld [vmem:[#allocation5 + $0x570] sm:$0xff]
    %v350 = vld [vmem:[#allocation5 + $0x578] sm:$0xff]
    %v351 = vld [vmem:[#allocation5 + $0x580] sm:$0xff]
    %v352 = vld [vmem:[#allocation5 + $0x588] sm:$0xff]
    %v353 = vld [vmem:[#allocation5 + $0x590] sm:$0xff]
    %v354 = vld [vmem:[#allocation5 + $0x598] sm:$0xff]
    %v355 = vld [vmem:[#allocation5 + $0x5a0] sm:$0xff]
    %v356 = vld [vmem:[#allocation5 + $0x5a8] sm:$0xff]
    %v357 = vld [vmem:[#allocation5 + $0x5b0] sm:$0xff]
    %v358 = vld [vmem:[#allocation5 + $0x5b8] sm:$0xff]
    %v359 = vld [vmem:[#allocation5 + $0x5c0] sm:$0xff]
    %v360 = vld [vmem:[#allocation5 + $0x5c8] sm:$0xff]
    %v361 = vld [vmem:[#allocation5 + $0x5d0] sm:$0xff]
    %v362 = vld [vmem:[#allocation5 + $0x5d8] sm:$0xff]
    %v363 = vld [vmem:[#allocation5 + $0x5e0] sm:$0xff]
    %v364 = vld [vmem:[#allocation5 + $0x5e8] sm:$0xff]
    %v365 = vld [vmem:[#allocation5 + $0x5f0] sm:$0xff]
    %v366 = vld [vmem:[#allocation5 + $0x5f8] sm:$0xff]
    %v367 = vld [vmem:[#allocation5 + $0x600] sm:$0xff]
    %v368 = vld [vmem:[#allocation5 + $0x608] sm:$0xff]
    %v369 = vld [vmem:[#allocation5 + $0x610] sm:$0xff]
    %v370 = vld [vmem:[#allocation5 + $0x618] sm:$0xff]
    %v371 = vld [vmem:[#allocation5 + $0x620] sm:$0xff]
    %v372 = vld [vmem:[#allocation5 + $0x628] sm:$0xff]
    %v373 = vld [vmem:[#allocation5 + $0x630] sm:$0xff]
    %v374 = vld [vmem:[#allocation5 + $0x638] sm:$0xff]
    %v375 = vld [vmem:[#allocation5 + $0x640] sm:$0xff]
    %v376 = vld [vmem:[#allocation5 + $0x648] sm:$0xff]
    %v377 = vld [vmem:[#allocation5 + $0x650] sm:$0xff]
    %v378 = vld [vmem:[#allocation5 + $0x658] sm:$0xff]
    %v379 = vld [vmem:[#allocation5 + $0x660] sm:$0xff]
    %v380 = vld [vmem:[#allocation5 + $0x668] sm:$0xff]
    %v381 = vld [vmem:[#allocation5 + $0x670] sm:$0xff]
    %v382 = vld [vmem:[#allocation5 + $0x678] sm:$0xff]
    %v383 = vld [vmem:[#allocation5 + $0x680] sm:$0xff]
    %v384 = vld [vmem:[#allocation5 + $0x688] sm:$0xff]
    %v385 = vld [vmem:[#allocation5 + $0x690] sm:$0xff]
    %v386 = vld [vmem:[#allocation5 + $0x698] sm:$0xff]
    %v387 = vld [vmem:[#allocation5 + $0x6a0] sm:$0xff]
    %v388 = vld [vmem:[#allocation5 + $0x6a8] sm:$0xff]
    %v389 = vld [vmem:[#allocation5 + $0x6b0] sm:$0xff]
    %v390 = vld [vmem:[#allocation5 + $0x6b8] sm:$0xff]
    %v391 = vld [vmem:[#allocation5 + $0x6c0] sm:$0xff]
    %v392 = vld [vmem:[#allocation5 + $0x6c8] sm:$0xff]
    %v393 = vld [vmem:[#allocation5 + $0x6d0] sm:$0xff]
    %v394 = vld [vmem:[#allocation5 + $0x6d8] sm:$0xff]
    %v395 = vld [vmem:[#allocation5 + $0x6e0] sm:$0xff]
    %v396 = vld [vmem:[#allocation5 + $0x6e8] sm:$0xff]
    %v397 = vld [vmem:[#allocation5 + $0x6f0] sm:$0xff]
    %v398 = vld [vmem:[#allocation5 + $0x6f8] sm:$0xff]
    %v399 = vld [vmem:[#allocation7] sm:$0xf]
    %v401 = vperm.slane %v399, 0
    %v402 = vperm.slane %v399, 1
    %v403 = vperm.slane %v399, 2
    %v404 = vperm.slane %v399, 3
    %v413 = vunpack.c.l.b16 %v171
    %v414 = vunpack.c.h.b16 %v171
    %v415 = vunpack.c.l.b16 %v172
    %v416 = vunpack.c.h.b16 %v172
    %v417 = vunpack.c.l.b16 %v173
    %v418 = vunpack.c.h.b16 %v173
    %v419 = vunpack.c.l.b16 %v174
    %v420 = vpack.c.b16 %v413, %v413
    %v421 = vpack.c.b16 %v414, %v414
    %v422 = vpack.c.b16 %v415, %v415
    %v423 = vpack.c.b16 %v416, %v416
    %v424 = vpack.c.b16 %v417, %v417
    %v425 = vpack.c.b16 %v418, %v418
    %v426 = vpack.c.b16 %v419, %v419
    %v658 = vunpack.c.l.b16 %v175
    %v659 = vunpack.c.h.b16 %v175
    %v660 = vunpack.c.l.b16 %v176
    %v661 = vunpack.c.h.b16 %v176
    %v662 = vunpack.c.l.b16 %v177
    %v663 = vunpack.c.h.b16 %v177
    %v664 = vunpack.c.l.b16 %v178
    %v665 = vunpack.c.h.b16 %v178
    %v666 = vunpack.c.l.b16 %v179
    %v667 = vunpack.c.h.b16 %v179
    %v668 = vunpack.c.l.b16 %v180
    %v669 = vunpack.c.h.b16 %v180
    %v670 = vunpack.c.l.b16 %v181
    %v671 = vunpack.c.h.b16 %v181
    %v672 = vunpack.c.l.b16 %v182
    %v673 = vunpack.c.h.b16 %v182
    %v674 = vunpack.c.l.b16 %v183
    %v675 = vunpack.c.h.b16 %v183
    %v676 = vunpack.c.l.b16 %v184
    %v677 = vunpack.c.h.b16 %v184
    %v678 = vunpack.c.l.b16 %v185
    %v679 = vunpack.c.h.b16 %v185
    %v680 = vunpack.c.l.b16 %v186
    %v681 = vunpack.c.h.b16 %v186
    %v682 = vunpack.c.l.b16 %v187
    %v683 = vunpack.c.h.b16 %v187
    %v684 = vunpack.c.l.b16 %v188
    %v685 = vunpack.c.h.b16 %v188
    %v686 = vunpack.c.l.b16 %v189
    %v687 = vunpack.c.h.b16 %v189
    %v688 = vunpack.c.l.b16 %v190
    %v689 = vunpack.c.h.b16 %v190
    %v690 = vunpack.c.l.b16 %v191
    %v691 = vunpack.c.h.b16 %v191
    %v692 = vunpack.c.l.b16 %v192
    %v693 = vunpack.c.h.b16 %v192
    %v694 = vunpack.c.l.b16 %v193
    %v695 = vunpack.c.h.b16 %v193
    %v696 = vunpack.c.l.b16 %v194
    %v697 = vunpack.c.h.b16 %v194
    %v698 = vunpack.c.l.b16 %v195
    %v699 = vunpack.c.h.b16 %v195
    %v700 = vunpack.c.l.b16 %v196
    %v701 = vunpack.c.h.b16 %v196
    %v702 = vunpack.c.l.b16 %v197
    %v703 = vunpack.c.h.b16 %v197
    %v704 = vunpack.c.l.b16 %v198
    %v705 = vunpack.c.h.b16 %v198
    %v706 = vunpack.c.l.b16 %v199
    %v707 = vunpack.c.h.b16 %v199
    %v708 = vunpack.c.l.b16 %v200
    %v709 = vunpack.c.h.b16 %v200
    %v710 = vunpack.c.l.b16 %v201
    %v711 = vunpack.c.h.b16 %v201
    %v712 = vunpack.c.l.b16 %v202
    %v713 = vunpack.c.h.b16 %v202
    %v714 = vunpack.c.l.b16 %v203
    %v715 = vunpack.c.h.b16 %v203
    %v716 = vunpack.c.l.b16 %v204
    %v717 = vunpack.c.h.b16 %v204
    %v718 = vunpack.c.l.b16 %v205
    %v719 = vunpack.c.h.b16 %v205
    %v720 = vunpack.c.l.b16 %v206
    %v721 = vunpack.c.h.b16 %v206
    %v722 = vunpack.c.l.b16 %v207
    %v723 = vunpack.c.h.b16 %v207
    %v724 = vunpack.c.l.b16 %v208
    %v725 = vunpack.c.h.b16 %v208
    %v726 = vunpack.c.l.b16 %v209
    %v727 = vunpack.c.h.b16 %v209
    %v728 = vunpack.c.l.b16 %v210
    %v729 = vunpack.c.h.b16 %v210
    %v730 = vunpack.c.l.b16 %v211
    %v731 = vunpack.c.h.b16 %v211
    %v732 = vunpack.c.l.b16 %v212
    %v733 = vunpack.c.h.b16 %v212
    %v734 = vunpack.c.l.b16 %v213
    %v735 = vunpack.c.h.b16 %v213
    %v736 = vunpack.c.l.b16 %v214
    %v737 = vunpack.c.h.b16 %v214
    %v738 = vunpack.c.l.b16 %v215
    %v739 = vunpack.c.h.b16 %v215
    %v740 = vunpack.c.l.b16 %v216
    %v741 = vunpack.c.h.b16 %v216
    %v742 = vunpack.c.l.b16 %v217
    %v743 = vunpack.c.h.b16 %v217
    %v744 = vunpack.c.l.b16 %v218
    %v745 = vunpack.c.h.b16 %v218
    %v746 = vunpack.c.l.b16 %v219
    %v747 = vunpack.c.h.b16 %v219
    %v748 = vunpack.c.l.b16 %v220
    %v749 = vunpack.c.h.b16 %v220
    %v750 = vunpack.c.l.b16 %v221
    %v751 = vunpack.c.h.b16 %v221
    %v752 = vunpack.c.l.b16 %v222
    %v753 = vunpack.c.h.b16 %v222
    %v754 = vunpack.c.l.b16 %v223
    %v755 = vunpack.c.h.b16 %v223
    %v756 = vunpack.c.l.b16 %v224
    %v757 = vunpack.c.h.b16 %v224
    %v758 = vunpack.c.l.b16 %v225
    %v759 = vunpack.c.h.b16 %v225
    %v760 = vunpack.c.l.b16 %v226
    %v761 = vunpack.c.h.b16 %v226
    %v762 = vunpack.c.l.b16 %v227
    %v763 = vunpack.c.h.b16 %v227
    %v764 = vunpack.c.l.b16 %v228
    %v765 = vunpack.c.h.b16 %v228
    %v766 = vunpack.c.l.b16 %v229
    %v767 = vunpack.c.h.b16 %v229
    %v768 = vunpack.c.l.b16 %v230
    %v769 = vunpack.c.h.b16 %v230
    %v770 = vunpack.c.l.b16 %v231
    %v771 = vunpack.c.h.b16 %v231
    %v772 = vunpack.c.l.b16 %v232
    %v773 = vunpack.c.h.b16 %v232
    %v774 = vunpack.c.l.b16 %v233
    %v775 = vunpack.c.h.b16 %v233
    %v776 = vunpack.c.l.b16 %v234
    %v777 = vunpack.c.h.b16 %v234
    %v778 = vunpack.c.l.b16 %v235
    %v779 = vunpack.c.h.b16 %v235
    %v780 = vunpack.c.l.b16 %v236
    %v781 = vunpack.c.h.b16 %v236
    %v782 = vunpack.c.l.b16 %v237
    %v783 = vunpack.c.h.b16 %v237
    %v784 = vunpack.c.l.b16 %v238
    %v785 = vunpack.c.h.b16 %v238
    %v786 = vunpack.c.l.b16 %v239
    %v787 = vunpack.c.h.b16 %v239
    %v788 = vunpack.c.l.b16 %v240
    %v789 = vunpack.c.h.b16 %v240
    %v790 = vunpack.c.l.b16 %v241
    %v791 = vunpack.c.h.b16 %v241
    %v792 = vunpack.c.l.b16 %v242
    %v793 = vunpack.c.h.b16 %v242
    %v794 = vunpack.c.l.b16 %v243
    %v795 = vunpack.c.h.b16 %v243
    %v796 = vunpack.c.l.b16 %v244
    %v797 = vunpack.c.h.b16 %v244
    %v798 = vunpack.c.l.b16 %v245
    %v799 = vunpack.c.h.b16 %v245
    %v800 = vunpack.c.l.b16 %v246
    %v801 = vunpack.c.h.b16 %v246
    %v802 = vunpack.c.l.b16 %v247
    %v803 = vunpack.c.h.b16 %v247
    %v804 = vunpack.c.l.b16 %v248
    %v805 = vunpack.c.h.b16 %v248
    %v806 = vunpack.c.l.b16 %v249
    %v807 = vunpack.c.h.b16 %v249
    %v808 = vunpack.c.l.b16 %v250
    %v809 = vunpack.c.h.b16 %v250
    %v810 = vunpack.c.l.b16 %v251
    %v811 = vunpack.c.h.b16 %v251
    %v812 = vunpack.c.l.b16 %v252
    %v813 = vunpack.c.h.b16 %v252
    %v814 = vunpack.c.l.b16 %v253
    %v815 = vunpack.c.h.b16 %v253
    %v816 = vunpack.c.l.b16 %v254
    %v817 = vunpack.c.h.b16 %v254
    %v818 = vunpack.c.l.b16 %v255
    %v819 = vunpack.c.h.b16 %v255
    %v820 = vunpack.c.l.b16 %v256
    %v821 = vunpack.c.h.b16 %v256
    %v822 = vunpack.c.l.b16 %v257
    %v823 = vunpack.c.h.b16 %v257
    %v824 = vunpack.c.l.b16 %v258
    %v825 = vunpack.c.h.b16 %v258
    %v826 = vunpack.c.l.b16 %v259
    %v827 = vunpack.c.h.b16 %v259
    %v828 = vunpack.c.l.b16 %v260
    %v829 = vunpack.c.h.b16 %v260
    %v830 = vunpack.c.l.b16 %v261
    %v831 = vunpack.c.h.b16 %v261
    %v832 = vunpack.c.l.b16 %v262
    %v833 = vunpack.c.h.b16 %v262
    %v834 = vunpack.c.l.b16 %v263
    %v835 = vunpack.c.h.b16 %v263
    %v836 = vunpack.c.l.b16 %v264
    %v837 = vunpack.c.h.b16 %v264
    %v838 = vunpack.c.l.b16 %v265
    %v839 = vunpack.c.h.b16 %v265
    %v840 = vunpack.c.l.b16 %v266
    %v841 = vunpack.c.h.b16 %v266
    %v842 = vunpack.c.l.b16 %v267
    %v843 = vunpack.c.h.b16 %v267
    %v844 = vunpack.c.l.b16 %v268
    %v845 = vunpack.c.h.b16 %v268
    %v846 = vunpack.c.l.b16 %v269
    %v847 = vunpack.c.h.b16 %v269
    %v848 = vunpack.c.l.b16 %v270
    %v849 = vunpack.c.h.b16 %v270
    %v850 = vunpack.c.l.b16 %v271
    %v851 = vunpack.c.h.b16 %v271
    %v852 = vunpack.c.l.b16 %v272
    %v853 = vunpack.c.h.b16 %v272
    %v854 = vunpack.c.l.b16 %v273
    %v855 = vunpack.c.h.b16 %v273
    %v856 = vunpack.c.l.b16 %v274
    %v857 = vunpack.c.h.b16 %v274
    %v858 = vunpack.c.l.b16 %v275
    %v859 = vunpack.c.h.b16 %v275
    %v860 = vunpack.c.l.b16 %v276
    %v861 = vunpack.c.h.b16 %v276
    %v862 = vunpack.c.l.b16 %v277
    %v863 = vunpack.c.h.b16 %v277
    %v864 = vunpack.c.l.b16 %v278
    %v865 = vunpack.c.h.b16 %v278
    %v866 = vunpack.c.l.b16 %v279
    %v867 = vunpack.c.h.b16 %v279
    %v868 = vunpack.c.l.b16 %v280
    %v869 = vunpack.c.h.b16 %v280
    %v870 = vunpack.c.l.b16 %v281
    %v871 = vunpack.c.h.b16 %v281
    %v872 = vunpack.c.l.b16 %v282
    %v873 = vunpack.c.h.b16 %v282
    %v874 = vunpack.c.l.b16 %v283
    %v875 = vunpack.c.h.b16 %v283
    %v876 = vunpack.c.l.b16 %v284
    %v877 = vunpack.c.h.b16 %v284
    %v878 = vunpack.c.l.b16 %v285
    %v879 = vunpack.c.h.b16 %v285
    %v880 = vunpack.c.l.b16 %v286
    %v881 = vunpack.c.h.b16 %v286
    %v882 = vunpack.c.l.b16 %v287
    %v883 = vunpack.c.h.b16 %v287
    %v884 = vunpack.c.l.b16 %v288
    %v885 = vunpack.c.h.b16 %v288
    %v886 = vunpack.c.l.b16 %v289
    %v887 = vunpack.c.h.b16 %v289
    %v888 = vunpack.c.l.b16 %v290
    %v889 = vunpack.c.h.b16 %v290
    %v890 = vunpack.c.l.b16 %v291
    %v891 = vunpack.c.h.b16 %v291
    %v892 = vunpack.c.l.b16 %v292
    %v893 = vunpack.c.h.b16 %v292
    %v894 = vunpack.c.l.b16 %v293
    %v895 = vunpack.c.h.b16 %v293
    %v896 = vunpack.c.l.b16 %v294
    %v897 = vunpack.c.h.b16 %v294
    %v898 = vunpack.c.l.b16 %v295
    %v899 = vunpack.c.h.b16 %v295
    %v900 = vunpack.c.l.b16 %v296
    %v901 = vunpack.c.h.b16 %v296
    %v902 = vunpack.c.l.b16 %v297
    %v903 = vunpack.c.h.b16 %v297
    %v904 = vunpack.c.l.b16 %v298
    %v905 = vunpack.c.h.b16 %v298
    %v906 = vunpack.c.l.b16 %v299
    %v907 = vunpack.c.h.b16 %v299
    %v908 = vunpack.c.l.b16 %v300
    %v909 = vunpack.c.h.b16 %v300
    %v910 = vunpack.c.l.b16 %v301
    %v911 = vunpack.c.h.b16 %v301
    %v912 = vunpack.c.l.b16 %v302
    %v913 = vunpack.c.h.b16 %v302
    %v914 = vunpack.c.l.b16 %v303
    %v915 = vunpack.c.h.b16 %v303
    %v916 = vunpack.c.l.b16 %v304
    %v917 = vunpack.c.h.b16 %v304
    %v918 = vunpack.c.l.b16 %v305
    %v919 = vunpack.c.h.b16 %v305
    %v920 = vunpack.c.l.b16 %v306
    %v921 = vunpack.c.h.b16 %v306
    %v922 = vunpack.c.l.b16 %v307
    %v923 = vunpack.c.h.b16 %v307
    %v924 = vunpack.c.l.b16 %v308
    %v925 = vunpack.c.h.b16 %v308
    %v926 = vunpack.c.l.b16 %v309
    %v927 = vunpack.c.h.b16 %v309
    %v928 = vunpack.c.l.b16 %v310
    %v929 = vunpack.c.h.b16 %v310
    %v930 = vunpack.c.l.b16 %v311
    %v931 = vunpack.c.h.b16 %v311
    %v932 = vunpack.c.l.b16 %v312
    %v933 = vunpack.c.h.b16 %v312
    %v934 = vunpack.c.l.b16 %v313
    %v935 = vunpack.c.h.b16 %v313
    %v936 = vunpack.c.l.b16 %v314
    %v937 = vunpack.c.h.b16 %v314
    %v938 = vunpack.c.l.b16 %v315
    %v939 = vunpack.c.h.b16 %v315
    %v940 = vunpack.c.l.b16 %v316
    %v941 = vunpack.c.h.b16 %v316
    %v942 = vunpack.c.l.b16 %v317
    %v943 = vunpack.c.h.b16 %v317
    %v944 = vunpack.c.l.b16 %v318
    %v945 = vunpack.c.h.b16 %v318
    %v946 = vunpack.c.l.b16 %v319
    %v947 = vunpack.c.h.b16 %v319
    %v948 = vunpack.c.l.b16 %v320
    %v949 = vunpack.c.h.b16 %v320
    %v950 = vunpack.c.l.b16 %v321
    %v951 = vunpack.c.h.b16 %v321
    %v952 = vunpack.c.l.b16 %v322
    %v953 = vunpack.c.h.b16 %v322
    %v954 = vunpack.c.l.b16 %v323
    %v955 = vunpack.c.h.b16 %v323
    %v956 = vunpack.c.l.b16 %v324
    %v957 = vunpack.c.h.b16 %v324
    %v958 = vunpack.c.l.b16 %v325
    %v959 = vunpack.c.h.b16 %v325
    %v960 = vunpack.c.l.b16 %v326
    %v961 = vunpack.c.h.b16 %v326
    %v962 = vunpack.c.l.b16 %v327
    %v963 = vunpack.c.h.b16 %v327
    %v964 = vunpack.c.l.b16 %v328
    %v965 = vunpack.c.h.b16 %v328
    %v966 = vunpack.c.l.b16 %v329
    %v967 = vunpack.c.h.b16 %v329
    %v968 = vunpack.c.l.b16 %v330
    %v969 = vunpack.c.h.b16 %v330
    %v970 = vunpack.c.l.b16 %v331
    %v971 = vunpack.c.h.b16 %v331
    %v972 = vunpack.c.l.b16 %v332
    %v973 = vunpack.c.h.b16 %v332
    %v974 = vunpack.c.l.b16 %v333
    %v975 = vunpack.c.h.b16 %v333
    %v976 = vunpack.c.l.b16 %v334
    %v977 = vunpack.c.h.b16 %v334
    %v978 = vunpack.c.l.b16 %v335
    %v979 = vunpack.c.h.b16 %v335
    %v980 = vunpack.c.l.b16 %v336
    %v981 = vunpack.c.h.b16 %v336
    %v982 = vunpack.c.l.b16 %v337
    %v983 = vunpack.c.h.b16 %v337
    %v984 = vunpack.c.l.b16 %v338
    %v985 = vunpack.c.h.b16 %v338
    %v986 = vunpack.c.l.b16 %v339
    %v987 = vunpack.c.h.b16 %v339
    %v988 = vunpack.c.l.b16 %v340
    %v989 = vunpack.c.h.b16 %v340
    %v990 = vunpack.c.l.b16 %v341
    %v991 = vunpack.c.h.b16 %v341
    %v992 = vunpack.c.l.b16 %v342
    %v993 = vunpack.c.h.b16 %v342
    %v994 = vunpack.c.l.b16 %v343
    %v995 = vunpack.c.h.b16 %v343
    %v996 = vunpack.c.l.b16 %v344
    %v997 = vunpack.c.h.b16 %v344
    %v998 = vunpack.c.l.b16 %v345
    %v999 = vunpack.c.h.b16 %v345
    %v1000 = vunpack.c.l.b16 %v346
    %v1001 = vunpack.c.h.b16 %v346
    %v1002 = vunpack.c.l.b16 %v347
    %v1003 = vunpack.c.h.b16 %v347
    %v1004 = vunpack.c.l.b16 %v348
    %v1005 = vunpack.c.h.b16 %v348
    %v1006 = vunpack.c.l.b16 %v349
    %v1007 = vunpack.c.h.b16 %v349
    %v1008 = vunpack.c.l.b16 %v350
    %v1009 = vunpack.c.h.b16 %v350
    %v1010 = vunpack.c.l.b16 %v351
    %v1011 = vunpack.c.h.b16 %v351
    %v1012 = vunpack.c.l.b16 %v352
    %v1013 = vunpack.c.h.b16 %v352
    %v1014 = vunpack.c.l.b16 %v353
    %v1015 = vunpack.c.h.b16 %v353
    %v1016 = vunpack.c.l.b16 %v354
    %v1017 = vunpack.c.h.b16 %v354
    %v1018 = vunpack.c.l.b16 %v355
    %v1019 = vunpack.c.h.b16 %v355
    %v1020 = vunpack.c.l.b16 %v356
    %v1021 = vunpack.c.h.b16 %v356
    %v1022 = vunpack.c.l.b16 %v357
    %v1023 = vunpack.c.h.b16 %v357
    %v1024 = vunpack.c.l.b16 %v358
    %v1025 = vunpack.c.h.b16 %v358
    %v1026 = vunpack.c.l.b16 %v359
    %v1027 = vunpack.c.h.b16 %v359
    %v1028 = vunpack.c.l.b16 %v360
    %v1029 = vunpack.c.h.b16 %v360
    %v1030 = vunpack.c.l.b16 %v361
    %v1031 = vunpack.c.h.b16 %v361
    %v1032 = vunpack.c.l.b16 %v362
    %v1033 = vunpack.c.h.b16 %v362
    %v1034 = vunpack.c.l.b16 %v363
    %v1035 = vunpack.c.h.b16 %v363
    %v1036 = vunpack.c.l.b16 %v364
    %v1037 = vunpack.c.h.b16 %v364
    %v1038 = vunpack.c.l.b16 %v365
    %v1039 = vunpack.c.h.b16 %v365
    %v1040 = vunpack.c.l.b16 %v366
    %v1041 = vunpack.c.h.b16 %v366
    %v1042 = vunpack.c.l.b16 %v367
    %v1043 = vunpack.c.h.b16 %v367
    %v1044 = vunpack.c.l.b16 %v368
    %v1045 = vunpack.c.h.b16 %v368
    %v1046 = vunpack.c.l.b16 %v369
    %v1047 = vunpack.c.h.b16 %v369
    %v1048 = vunpack.c.l.b16 %v370
    %v1049 = vunpack.c.h.b16 %v370
    %v1050 = vunpack.c.l.b16 %v371
    %v1051 = vunpack.c.h.b16 %v371
    %v1052 = vunpack.c.l.b16 %v372
    %v1053 = vunpack.c.h.b16 %v372
    %v1054 = vunpack.c.l.b16 %v373
    %v1055 = vunpack.c.h.b16 %v373
    %v1056 = vunpack.c.l.b16 %v374
    %v1057 = vunpack.c.h.b16 %v374
    %v1058 = vunpack.c.l.b16 %v375
    %v1059 = vunpack.c.h.b16 %v375
    %v1060 = vunpack.c.l.b16 %v376
    %v1061 = vunpack.c.h.b16 %v376
    %v1062 = vunpack.c.l.b16 %v377
    %v1063 = vunpack.c.h.b16 %v377
    %v1064 = vunpack.c.l.b16 %v378
    %v1065 = vunpack.c.h.b16 %v378
    %v1066 = vunpack.c.l.b16 %v379
    %v1067 = vunpack.c.h.b16 %v379
    %v1068 = vunpack.c.l.b16 %v380
    %v1069 = vunpack.c.h.b16 %v380
    %v1070 = vunpack.c.l.b16 %v381
    %v1071 = vunpack.c.h.b16 %v381
    %v1072 = vunpack.c.l.b16 %v382
    %v1073 = vunpack.c.h.b16 %v382
    %v1074 = vunpack.c.l.b16 %v383
    %v1075 = vunpack.c.h.b16 %v383
    %v1076 = vunpack.c.l.b16 %v384
    %v1077 = vunpack.c.h.b16 %v384
    %v1078 = vunpack.c.l.b16 %v385
    %v1079 = vunpack.c.h.b16 %v385
    %v1080 = vunpack.c.l.b16 %v386
    %v1081 = vunpack.c.h.b16 %v386
    %v1082 = vunpack.c.l.b16 %v387
    %v1083 = vunpack.c.h.b16 %v387
    %v1084 = vunpack.c.l.b16 %v388
    %v1085 = vunpack.c.h.b16 %v388
    %v1086 = vunpack.c.l.b16 %v389
    %v1087 = vunpack.c.h.b16 %v389
    %v1088 = vunpack.c.l.b16 %v390
    %v1089 = vunpack.c.h.b16 %v390
    %v1090 = vunpack.c.l.b16 %v391
    %v1091 = vunpack.c.h.b16 %v391
    %v1092 = vunpack.c.l.b16 %v392
    %v1093 = vunpack.c.h.b16 %v392
    %v1094 = vunpack.c.l.b16 %v393
    %v1095 = vunpack.c.h.b16 %v393
    %v1096 = vunpack.c.l.b16 %v394
    %v1097 = vunpack.c.h.b16 %v394
    %v1098 = vunpack.c.l.b16 %v395
    %v1099 = vunpack.c.h.b16 %v395
    %v1100 = vunpack.c.l.b16 %v396
    %v1101 = vunpack.c.h.b16 %v396
    %v1102 = vunpack.c.l.b16 %v397
    %v1103 = vunpack.c.h.b16 %v397
    %v1104 = vunpack.c.l.b16 %v398
    %v1105 = vunpack.c.h.b16 %v398
    %v1106 = vpack.c.b16 %v662, %v658
    %v1107 = vpack.c.b16 %v663, %v659
    %v1108 = vpack.c.b16 %v664, %v660
    %v1109 = vpack.c.b16 %v665, %v661
    %v1110 = vpack.c.b16 %v670, %v666
    %v1111 = vpack.c.b16 %v671, %v667
    %v1112 = vpack.c.b16 %v672, %v668
    %v1113 = vpack.c.b16 %v673, %v669
    %v1114 = vpack.c.b16 %v678, %v674
    %v1115 = vpack.c.b16 %v679, %v675
    %v1116 = vpack.c.b16 %v680, %v676
    %v1117 = vpack.c.b16 %v681, %v677
    %v1118 = vpack.c.b16 %v686, %v682
    %v1119 = vpack.c.b16 %v687, %v683
    %v1120 = vpack.c.b16 %v688, %v684
    %v1121 = vpack.c.b16 %v689, %v685
    %v1122 = vpack.c.b16 %v694, %v690
    %v1123 = vpack.c.b16 %v695, %v691
    %v1124 = vpack.c.b16 %v696, %v692
    %v1125 = vpack.c.b16 %v697, %v693
    %v1126 = vpack.c.b16 %v702, %v698
    %v1127 = vpack.c.b16 %v703, %v699
    %v1128 = vpack.c.b16 %v704, %v700
    %v1129 = vpack.c.b16 %v705, %v701
    %v1130 = vpack.c.b16 %v710, %v706
    %v1131 = vpack.c.b16 %v711, %v707
    %v1132 = vpack.c.b16 %v712, %v708
    %v1133 = vpack.c.b16 %v713, %v709
    %v1134 = vpack.c.b16 %v718, %v714
    %v1135 = vpack.c.b16 %v719, %v715
    %v1136 = vpack.c.b16 %v720, %v716
    %v1137 = vpack.c.b16 %v721, %v717
    %v1138 = vpack.c.b16 %v726, %v722
    %v1139 = vpack.c.b16 %v727, %v723
    %v1140 = vpack.c.b16 %v728, %v724
    %v1141 = vpack.c.b16 %v729, %v725
    %v1142 = vpack.c.b16 %v734, %v730
    %v1143 = vpack.c.b16 %v735, %v731
    %v1144 = vpack.c.b16 %v736, %v732
    %v1145 = vpack.c.b16 %v737, %v733
    %v1146 = vpack.c.b16 %v742, %v738
    %v1147 = vpack.c.b16 %v743, %v739
    %v1148 = vpack.c.b16 %v744, %v740
    %v1149 = vpack.c.b16 %v745, %v741
    %v1150 = vpack.c.b16 %v750, %v746
    %v1151 = vpack.c.b16 %v751, %v747
    %v1152 = vpack.c.b16 %v752, %v748
    %v1153 = vpack.c.b16 %v753, %v749
    %v1154 = vpack.c.b16 %v758, %v754
    %v1155 = vpack.c.b16 %v759, %v755
    %v1156 = vpack.c.b16 %v760, %v756
    %v1157 = vpack.c.b16 %v761, %v757
    %v1158 = vpack.c.b16 %v766, %v762
    %v1159 = vpack.c.b16 %v767, %v763
    %v1160 = vpack.c.b16 %v768, %v764
    %v1161 = vpack.c.b16 %v769, %v765
    %v1162 = vpack.c.b16 %v774, %v770
    %v1163 = vpack.c.b16 %v775, %v771
    %v1164 = vpack.c.b16 %v776, %v772
    %v1165 = vpack.c.b16 %v777, %v773
    %v1166 = vpack.c.b16 %v782, %v778
    %v1167 = vpack.c.b16 %v783, %v779
    %v1168 = vpack.c.b16 %v784, %v780
    %v1169 = vpack.c.b16 %v785, %v781
    %v1170 = vpack.c.b16 %v790, %v786
    %v1171 = vpack.c.b16 %v791, %v787
    %v1172 = vpack.c.b16 %v792, %v788
    %v1173 = vpack.c.b16 %v793, %v789
    %v1174 = vpack.c.b16 %v798, %v794
    %v1175 = vpack.c.b16 %v799, %v795
    %v1176 = vpack.c.b16 %v800, %v796
    %v1177 = vpack.c.b16 %v801, %v797
    %v1178 = vpack.c.b16 %v806, %v802
    %v1179 = vpack.c.b16 %v807, %v803
    %v1180 = vpack.c.b16 %v808, %v804
    %v1181 = vpack.c.b16 %v809, %v805
    %v1182 = vpack.c.b16 %v814, %v810
    %v1183 = vpack.c.b16 %v815, %v811
    %v1184 = vpack.c.b16 %v816, %v812
    %v1185 = vpack.c.b16 %v817, %v813
    %v1186 = vpack.c.b16 %v822, %v818
    %v1187 = vpack.c.b16 %v823, %v819
    %v1188 = vpack.c.b16 %v824, %v820
    %v1189 = vpack.c.b16 %v825, %v821
    %v1190 = vpack.c.b16 %v830, %v826
    %v1191 = vpack.c.b16 %v831, %v827
    %v1192 = vpack.c.b16 %v832, %v828
    %v1193 = vpack.c.b16 %v833, %v829
    %v1194 = vpack.c.b16 %v838, %v834
    %v1195 = vpack.c.b16 %v839, %v835
    %v1196 = vpack.c.b16 %v840, %v836
    %v1197 = vpack.c.b16 %v841, %v837
    %v1198 = vpack.c.b16 %v846, %v842
    %v1199 = vpack.c.b16 %v847, %v843
    %v1200 = vpack.c.b16 %v848, %v844
    %v1201 = vpack.c.b16 %v849, %v845
    %v1202 = vpack.c.b16 %v854, %v850
    %v1203 = vpack.c.b16 %v855, %v851
    %v1204 = vpack.c.b16 %v856, %v852
    %v1205 = vpack.c.b16 %v857, %v853
    %v1206 = vpack.c.b16 %v862, %v858
    %v1207 = vpack.c.b16 %v863, %v859
    %v1208 = vpack.c.b16 %v864, %v860
    %v1209 = vpack.c.b16 %v865, %v861
    %v1210 = vpack.c.b16 %v870, %v866
    %v1211 = vpack.c.b16 %v871, %v867
    %v1212 = vpack.c.b16 %v872, %v868
    %v1213 = vpack.c.b16 %v873, %v869
    %v1214 = vpack.c.b16 %v878, %v874
    %v1215 = vpack.c.b16 %v879, %v875
    %v1216 = vpack.c.b16 %v880, %v876
    %v1217 = vpack.c.b16 %v881, %v877
    %v1218 = vpack.c.b16 %v886, %v882
    %v1219 = vpack.c.b16 %v887, %v883
    %v1220 = vpack.c.b16 %v888, %v884
    %v1221 = vpack.c.b16 %v889, %v885
    %v1222 = vpack.c.b16 %v894, %v890
    %v1223 = vpack.c.b16 %v895, %v891
    %v1224 = vpack.c.b16 %v896, %v892
    %v1225 = vpack.c.b16 %v897, %v893
    %v1226 = vpack.c.b16 %v902, %v898
    %v1227 = vpack.c.b16 %v903, %v899
    %v1228 = vpack.c.b16 %v904, %v900
    %v1229 = vpack.c.b16 %v905, %v901
    %v1230 = vpack.c.b16 %v910, %v906
    %v1231 = vpack.c.b16 %v911, %v907
    %v1232 = vpack.c.b16 %v912, %v908
    %v1233 = vpack.c.b16 %v913, %v909
    %v1234 = vpack.c.b16 %v918, %v914
    %v1235 = vpack.c.b16 %v919, %v915
    %v1236 = vpack.c.b16 %v920, %v916
    %v1237 = vpack.c.b16 %v921, %v917
    %v1238 = vpack.c.b16 %v926, %v922
    %v1239 = vpack.c.b16 %v927, %v923
    %v1240 = vpack.c.b16 %v928, %v924
    %v1241 = vpack.c.b16 %v929, %v925
    %v1242 = vpack.c.b16 %v934, %v930
    %v1243 = vpack.c.b16 %v935, %v931
    %v1244 = vpack.c.b16 %v936, %v932
    %v1245 = vpack.c.b16 %v937, %v933
    %v1246 = vpack.c.b16 %v942, %v938
    %v1247 = vpack.c.b16 %v943, %v939
    %v1248 = vpack.c.b16 %v944, %v940
    %v1249 = vpack.c.b16 %v945, %v941
    %v1250 = vpack.c.b16 %v950, %v946
    %v1251 = vpack.c.b16 %v951, %v947
    %v1252 = vpack.c.b16 %v952, %v948
    %v1253 = vpack.c.b16 %v953, %v949
    %v1254 = vpack.c.b16 %v958, %v954
    %v1255 = vpack.c.b16 %v959, %v955
    %v1256 = vpack.c.b16 %v960, %v956
    %v1257 = vpack.c.b16 %v961, %v957
    %v1258 = vpack.c.b16 %v966, %v962
    %v1259 = vpack.c.b16 %v967, %v963
    %v1260 = vpack.c.b16 %v968, %v964
    %v1261 = vpack.c.b16 %v969, %v965
    %v1262 = vpack.c.b16 %v974, %v970
    %v1263 = vpack.c.b16 %v975, %v971
    %v1264 = vpack.c.b16 %v976, %v972
    %v1265 = vpack.c.b16 %v977, %v973
    %v1266 = vpack.c.b16 %v982, %v978
    %v1267 = vpack.c.b16 %v983, %v979
    %v1268 = vpack.c.b16 %v984, %v980
    %v1269 = vpack.c.b16 %v985, %v981
    %v1270 = vpack.c.b16 %v990, %v986
    %v1271 = vpack.c.b16 %v991, %v987
    %v1272 = vpack.c.b16 %v992, %v988
    %v1273 = vpack.c.b16 %v993, %v989
    %v1274 = vpack.c.b16 %v998, %v994
    %v1275 = vpack.c.b16 %v999, %v995
    %v1276 = vpack.c.b16 %v1000, %v996
    %v1277 = vpack.c.b16 %v1001, %v997
    %v1278 = vpack.c.b16 %v1006, %v1002
    %v1279 = vpack.c.b16 %v1007, %v1003
    %v1280 = vpack.c.b16 %v1008, %v1004
    %v1281 = vpack.c.b16 %v1009, %v1005
    %v1282 = vpack.c.b16 %v1014, %v1010
    %v1283 = vpack.c.b16 %v1015, %v1011
    %v1284 = vpack.c.b16 %v1016, %v1012
    %v1285 = vpack.c.b16 %v1017, %v1013
    %v1286 = vpack.c.b16 %v1022, %v1018
    %v1287 = vpack.c.b16 %v1023, %v1019
    %v1288 = vpack.c.b16 %v1024, %v1020
    %v1289 = vpack.c.b16 %v1025, %v1021
    %v1290 = vpack.c.b16 %v1030, %v1026
    %v1291 = vpack.c.b16 %v1031, %v1027
    %v1292 = vpack.c.b16 %v1032, %v1028
    %v1293 = vpack.c.b16 %v1033, %v1029
    %v1294 = vpack.c.b16 %v1038, %v1034
    %v1295 = vpack.c.b16 %v1039, %v1035
    %v1296 = vpack.c.b16 %v1040, %v1036
    %v1297 = vpack.c.b16 %v1041, %v1037
    %v1298 = vpack.c.b16 %v1046, %v1042
    %v1299 = vpack.c.b16 %v1047, %v1043
    %v1300 = vpack.c.b16 %v1048, %v1044
    %v1301 = vpack.c.b16 %v1049, %v1045
    %v1302 = vpack.c.b16 %v1054, %v1050
    %v1303 = vpack.c.b16 %v1055, %v1051
    %v1304 = vpack.c.b16 %v1056, %v1052
    %v1305 = vpack.c.b16 %v1057, %v1053
    %v1306 = vpack.c.b16 %v1062, %v1058
    %v1307 = vpack.c.b16 %v1063, %v1059
    %v1308 = vpack.c.b16 %v1064, %v1060
    %v1309 = vpack.c.b16 %v1065, %v1061
    %v1310 = vpack.c.b16 %v1070, %v1066
    %v1311 = vpack.c.b16 %v1071, %v1067
    %v1312 = vpack.c.b16 %v1072, %v1068
    %v1313 = vpack.c.b16 %v1073, %v1069
    %v1314 = vpack.c.b16 %v1078, %v1074
    %v1315 = vpack.c.b16 %v1079, %v1075
    %v1316 = vpack.c.b16 %v1080, %v1076
    %v1317 = vpack.c.b16 %v1081, %v1077
    %v1318 = vpack.c.b16 %v1086, %v1082
    %v1319 = vpack.c.b16 %v1087, %v1083
    %v1320 = vpack.c.b16 %v1088, %v1084
    %v1321 = vpack.c.b16 %v1089, %v1085
    %v1322 = vpack.c.b16 %v1094, %v1090
    %v1323 = vpack.c.b16 %v1095, %v1091
    %v1324 = vpack.c.b16 %v1096, %v1092
    %v1325 = vpack.c.b16 %v1097, %v1093
    %v1326 = vpack.c.b16 %v1102, %v1098
    %v1327 = vpack.c.b16 %v1103, %v1099
    %v1328 = vpack.c.b16 %v1104, %v1100
    %v1329 = vpack.c.b16 %v1105, %v1101
    %1554 = vmatpush.bf16.msra.mxu0 %v1134
    %1555 = vmatpush.bf16.msra.mxu0 %v1130
    %1556 = vmatpush.bf16.msra.mxu0 %v1126
    %1557 = vmatpush.bf16.msra.mxu0 %v1122
    %1558 = vmatpush.bf16.msra.mxu0 %v1118
    %1559 = vmatpush.bf16.msra.mxu0 %v1114
    %1560 = vmatpush.bf16.msra.mxu0 %v1110
    %1561 = vmatpush.bf16.msra.mxu0 %v1106
    %1562 = vmatmul.bf16.gmra.mxu0 %v420
    %v1563 = vpop.f32.mrf.mxu0
    %v1564 = vadd.f32 %v401, %v1563
    %v1565 = vpop.f32.mrf.mxu0
    %1566 = vdwg.mxu0
    %1567 = vmatpush.bf16.msra.mxu0 %v1166
    %1568 = vmatpush.bf16.msra.mxu0 %v1162
    %1569 = vmatpush.bf16.msra.mxu0 %v1158
    %1570 = vmatpush.bf16.msra.mxu0 %v1154
    %1571 = vmatpush.bf16.msra.mxu0 %v1150
    %1572 = vmatpush.bf16.msra.mxu0 %v1146
    %1573 = vmatpush.bf16.msra.mxu0 %v1142
    %1574 = vmatpush.bf16.msra.mxu0 %v1138
    %1575 = vmatmul.bf16.gmra.mxu0 %v421
    %v1576 = vpop.f32.mrf.mxu0
    %v1577 = vadd.f32 %v1564, %v1576
    %v1578 = vpop.f32.mrf.mxu0
    %1579 = vdwg.mxu0
    %1580 = vmatpush.bf16.msra.mxu0 %v1198
    %1581 = vmatpush.bf16.msra.mxu0 %v1194
    %1582 = vmatpush.bf16.msra.mxu0 %v1190
    %1583 = vmatpush.bf16.msra.mxu0 %v1186
    %1584 = vmatpush.bf16.msra.mxu0 %v1182
    %1585 = vmatpush.bf16.msra.mxu0 %v1178
    %1586 = vmatpush.bf16.msra.mxu0 %v1174
    %1587 = vmatpush.bf16.msra.mxu0 %v1170
    %1588 = vmatmul.bf16.gmra.mxu0 %v422
    %v1589 = vpop.f32.mrf.mxu0
    %v1590 = vadd.f32 %v1577, %v1589
    %v1591 = vpop.f32.mrf.mxu0
    %1592 = vdwg.mxu0
    %1593 = vmatpush.bf16.msra.mxu0 %v1230
    %1594 = vmatpush.bf16.msra.mxu0 %v1226
    %1595 = vmatpush.bf16.msra.mxu0 %v1222
    %1596 = vmatpush.bf16.msra.mxu0 %v1218
    %1597 = vmatpush.bf16.msra.mxu0 %v1214
    %1598 = vmatpush.bf16.msra.mxu0 %v1210
    %1599 = vmatpush.bf16.msra.mxu0 %v1206
    %1600 = vmatpush.bf16.msra.mxu0 %v1202
    %1601 = vmatmul.bf16.gmra.mxu0 %v423
    %v1602 = vpop.f32.mrf.mxu0
    %v1603 = vadd.f32 %v1590, %v1602
    %v1604 = vpop.f32.mrf.mxu0
    %1605 = vdwg.mxu0
    %1606 = vmatpush.bf16.msra.mxu0 %v1262
    %1607 = vmatpush.bf16.msra.mxu0 %v1258
    %1608 = vmatpush.bf16.msra.mxu0 %v1254
    %1609 = vmatpush.bf16.msra.mxu0 %v1250
    %1610 = vmatpush.bf16.msra.mxu0 %v1246
    %1611 = vmatpush.bf16.msra.mxu0 %v1242
    %1612 = vmatpush.bf16.msra.mxu0 %v1238
    %1613 = vmatpush.bf16.msra.mxu0 %v1234
    %1614 = vmatmul.bf16.gmra.mxu0 %v424
    %v1615 = vpop.f32.mrf.mxu0
    %v1616 = vadd.f32 %v1603, %v1615
    %v1617 = vpop.f32.mrf.mxu0
    %1618 = vdwg.mxu0
    %1619 = vmatpush.bf16.msra.mxu0 %v1294
    %1620 = vmatpush.bf16.msra.mxu0 %v1290
    %1621 = vmatpush.bf16.msra.mxu0 %v1286
    %1622 = vmatpush.bf16.msra.mxu0 %v1282
    %1623 = vmatpush.bf16.msra.mxu0 %v1278
    %1624 = vmatpush.bf16.msra.mxu0 %v1274
    %1625 = vmatpush.bf16.msra.mxu0 %v1270
    %1626 = vmatpush.bf16.msra.mxu0 %v1266
    %1627 = vmatmul.bf16.gmra.mxu0 %v425
    %v1628 = vpop.f32.mrf.mxu0
    %v1629 = vadd.f32 %v1616, %v1628
    %v1630 = vpop.f32.mrf.mxu0
    %1631 = vdwg.mxu0
    %1632 = vmatpush.bf16.msra.mxu0 %v1326
    %1633 = vmatpush.bf16.msra.mxu0 %v1322
    %1634 = vmatpush.bf16.msra.mxu0 %v1318
    %1635 = vmatpush.bf16.msra.mxu0 %v1314
    %1636 = vmatpush.bf16.msra.mxu0 %v1310
    %1637 = vmatpush.bf16.msra.mxu0 %v1306
    %1638 = vmatpush.bf16.msra.mxu0 %v1302
    %1639 = vmatpush.bf16.msra.mxu0 %v1298
    %1640 = vmatmul.bf16.gmra.mxu0 %v426
    %v1641 = vpop.f32.mrf.mxu0
    %v1642 = vadd.f32 %v1629, %v1641
    %v1643 = vpop.f32.mrf.mxu0
    %1644 = vdwg.mxu0
    %1645 = vmatpush.bf16.msra.mxu0 %v1135
    %1646 = vmatpush.bf16.msra.mxu0 %v1131
    %1647 = vmatpush.bf16.msra.mxu0 %v1127
    %1648 = vmatpush.bf16.msra.mxu0 %v1123
    %1649 = vmatpush.bf16.msra.mxu0 %v1119
    %1650 = vmatpush.bf16.msra.mxu0 %v1115
    %1651 = vmatpush.bf16.msra.mxu0 %v1111
    %1652 = vmatpush.bf16.msra.mxu0 %v1107
    %1653 = vmatmul.bf16.gmra.mxu0 %v420
    %v1654 = vpop.f32.mrf.mxu0
    %v1655 = vadd.f32 %v402, %v1654
    %v1656 = vpop.f32.mrf.mxu0
    %1657 = vdwg.mxu0
    %1658 = vmatpush.bf16.msra.mxu0 %v1167
    %1659 = vmatpush.bf16.msra.mxu0 %v1163
    %1660 = vmatpush.bf16.msra.mxu0 %v1159
    %1661 = vmatpush.bf16.msra.mxu0 %v1155
    %1662 = vmatpush.bf16.msra.mxu0 %v1151
    %1663 = vmatpush.bf16.msra.mxu0 %v1147
    %1664 = vmatpush.bf16.msra.mxu0 %v1143
    %1665 = vmatpush.bf16.msra.mxu0 %v1139
    %1666 = vmatmul.bf16.gmra.mxu0 %v421
    %v1667 = vpop.f32.mrf.mxu0
    %v1668 = vadd.f32 %v1655, %v1667
    %v1669 = vpop.f32.mrf.mxu0
    %1670 = vdwg.mxu0
    %1671 = vmatpush.bf16.msra.mxu0 %v1199
    %1672 = vmatpush.bf16.msra.mxu0 %v1195
    %1673 = vmatpush.bf16.msra.mxu0 %v1191
    %1674 = vmatpush.bf16.msra.mxu0 %v1187
    %1675 = vmatpush.bf16.msra.mxu0 %v1183
    %1676 = vmatpush.bf16.msra.mxu0 %v1179
    %1677 = vmatpush.bf16.msra.mxu0 %v1175
    %1678 = vmatpush.bf16.msra.mxu0 %v1171
    %1679 = vmatmul.bf16.gmra.mxu0 %v422
    %v1680 = vpop.f32.mrf.mxu0
    %v1681 = vadd.f32 %v1668, %v1680
    %v1682 = vpop.f32.mrf.mxu0
    %1683 = vdwg.mxu0
    %1684 = vmatpush.bf16.msra.mxu0 %v1231
    %1685 = vmatpush.bf16.msra.mxu0 %v1227
    %1686 = vmatpush.bf16.msra.mxu0 %v1223
    %1687 = vmatpush.bf16.msra.mxu0 %v1219
    %1688 = vmatpush.bf16.msra.mxu0 %v1215
    %1689 = vmatpush.bf16.msra.mxu0 %v1211
    %1690 = vmatpush.bf16.msra.mxu0 %v1207
    %1691 = vmatpush.bf16.msra.mxu0 %v1203
    %1692 = vmatmul.bf16.gmra.mxu0 %v423
    %v1693 = vpop.f32.mrf.mxu0
    %v1694 = vadd.f32 %v1681, %v1693
    %v1695 = vpop.f32.mrf.mxu0
    %1696 = vdwg.mxu0
    %1697 = vmatpush.bf16.msra.mxu0 %v1263
    %1698 = vmatpush.bf16.msra.mxu0 %v1259
    %1699 = vmatpush.bf16.msra.mxu0 %v1255
    %1700 = vmatpush.bf16.msra.mxu0 %v1251
    %1701 = vmatpush.bf16.msra.mxu0 %v1247
    %1702 = vmatpush.bf16.msra.mxu0 %v1243
    %1703 = vmatpush.bf16.msra.mxu0 %v1239
    %1704 = vmatpush.bf16.msra.mxu0 %v1235
    %1705 = vmatmul.bf16.gmra.mxu0 %v424
    %v1706 = vpop.f32.mrf.mxu0
    %v1707 = vadd.f32 %v1694, %v1706
    %v1708 = vpop.f32.mrf.mxu0
    %1709 = vdwg.mxu0
    %1710 = vmatpush.bf16.msra.mxu0 %v1295
    %1711 = vmatpush.bf16.msra.mxu0 %v1291
    %1712 = vmatpush.bf16.msra.mxu0 %v1287
    %1713 = vmatpush.bf16.msra.mxu0 %v1283
    %1714 = vmatpush.bf16.msra.mxu0 %v1279
    %1715 = vmatpush.bf16.msra.mxu0 %v1275
    %1716 = vmatpush.bf16.msra.mxu0 %v1271
    %1717 = vmatpush.bf16.msra.mxu0 %v1267
    %1718 = vmatmul.bf16.gmra.mxu0 %v425
    %v1719 = vpop.f32.mrf.mxu0
    %v1720 = vadd.f32 %v1707, %v1719
    %v1721 = vpop.f32.mrf.mxu0
    %1722 = vdwg.mxu0
    %1723 = vmatpush.bf16.msra.mxu0 %v1327
    %1724 = vmatpush.bf16.msra.mxu0 %v1323
    %1725 = vmatpush.bf16.msra.mxu0 %v1319
    %1726 = vmatpush.bf16.msra.mxu0 %v1315
    %1727 = vmatpush.bf16.msra.mxu0 %v1311
    %1728 = vmatpush.bf16.msra.mxu0 %v1307
    %1729 = vmatpush.bf16.msra.mxu0 %v1303
    %1730 = vmatpush.bf16.msra.mxu0 %v1299
    %1731 = vmatmul.bf16.gmra.mxu0 %v426
    %v1732 = vpop.f32.mrf.mxu0
    %v1733 = vadd.f32 %v1720, %v1732
    %v1734 = vpop.f32.mrf.mxu0
    %1735 = vdwg.mxu0
    %1736 = vmatpush.bf16.msra.mxu0 %v1136
    %1737 = vmatpush.bf16.msra.mxu0 %v1132
    %1738 = vmatpush.bf16.msra.mxu0 %v1128
    %1739 = vmatpush.bf16.msra.mxu0 %v1124
    %1740 = vmatpush.bf16.msra.mxu0 %v1120
    %1741 = vmatpush.bf16.msra.mxu0 %v1116
    %1742 = vmatpush.bf16.msra.mxu0 %v1112
    %1743 = vmatpush.bf16.msra.mxu0 %v1108
    %1744 = vmatmul.bf16.gmra.mxu0 %v420
    %v1745 = vpop.f32.mrf.mxu0
    %v1746 = vadd.f32 %v403, %v1745
    %v1747 = vpop.f32.mrf.mxu0
    %1748 = vdwg.mxu0
    %1749 = vmatpush.bf16.msra.mxu0 %v1168
    %1750 = vmatpush.bf16.msra.mxu0 %v1164
    %1751 = vmatpush.bf16.msra.mxu0 %v1160
    %1752 = vmatpush.bf16.msra.mxu0 %v1156
    %1753 = vmatpush.bf16.msra.mxu0 %v1152
    %1754 = vmatpush.bf16.msra.mxu0 %v1148
    %1755 = vmatpush.bf16.msra.mxu0 %v1144
    %1756 = vmatpush.bf16.msra.mxu0 %v1140
    %1757 = vmatmul.bf16.gmra.mxu0 %v421
    %v1758 = vpop.f32.mrf.mxu0
    %v1759 = vadd.f32 %v1746, %v1758
    %v1760 = vpop.f32.mrf.mxu0
    %1761 = vdwg.mxu0
    %1762 = vmatpush.bf16.msra.mxu0 %v1200
    %1763 = vmatpush.bf16.msra.mxu0 %v1196
    %1764 = vmatpush.bf16.msra.mxu0 %v1192
    %1765 = vmatpush.bf16.msra.mxu0 %v1188
    %1766 = vmatpush.bf16.msra.mxu0 %v1184
    %1767 = vmatpush.bf16.msra.mxu0 %v1180
    %1768 = vmatpush.bf16.msra.mxu0 %v1176
    %1769 = vmatpush.bf16.msra.mxu0 %v1172
    %1770 = vmatmul.bf16.gmra.mxu0 %v422
    %v1771 = vpop.f32.mrf.mxu0
    %v1772 = vadd.f32 %v1759, %v1771
    %v1773 = vpop.f32.mrf.mxu0
    %1774 = vdwg.mxu0
    %1775 = vmatpush.bf16.msra.mxu0 %v1232
    %1776 = vmatpush.bf16.msra.mxu0 %v1228
    %1777 = vmatpush.bf16.msra.mxu0 %v1224
    %1778 = vmatpush.bf16.msra.mxu0 %v1220
    %1779 = vmatpush.bf16.msra.mxu0 %v1216
    %1780 = vmatpush.bf16.msra.mxu0 %v1212
    %1781 = vmatpush.bf16.msra.mxu0 %v1208
    %1782 = vmatpush.bf16.msra.mxu0 %v1204
    %1783 = vmatmul.bf16.gmra.mxu0 %v423
    %v1784 = vpop.f32.mrf.mxu0
    %v1785 = vadd.f32 %v1772, %v1784
    %v1786 = vpop.f32.mrf.mxu0
    %1787 = vdwg.mxu0
    %1788 = vmatpush.bf16.msra.mxu0 %v1264
    %1789 = vmatpush.bf16.msra.mxu0 %v1260
    %1790 = vmatpush.bf16.msra.mxu0 %v1256
    %1791 = vmatpush.bf16.msra.mxu0 %v1252
    %1792 = vmatpush.bf16.msra.mxu0 %v1248
    %1793 = vmatpush.bf16.msra.mxu0 %v1244
    %1794 = vmatpush.bf16.msra.mxu0 %v1240
    %1795 = vmatpush.bf16.msra.mxu0 %v1236
    %1796 = vmatmul.bf16.gmra.mxu0 %v424
    %v1797 = vpop.f32.mrf.mxu0
    %v1798 = vadd.f32 %v1785, %v1797
    %v1799 = vpop.f32.mrf.mxu0
    %1800 = vdwg.mxu0
    %1801 = vmatpush.bf16.msra.mxu0 %v1296
    %1802 = vmatpush.bf16.msra.mxu0 %v1292
    %1803 = vmatpush.bf16.msra.mxu0 %v1288
    %1804 = vmatpush.bf16.msra.mxu0 %v1284
    %1805 = vmatpush.bf16.msra.mxu0 %v1280
    %1806 = vmatpush.bf16.msra.mxu0 %v1276
    %1807 = vmatpush.bf16.msra.mxu0 %v1272
    %1808 = vmatpush.bf16.msra.mxu0 %v1268
    %1809 = vmatmul.bf16.gmra.mxu0 %v425
    %v1810 = vpop.f32.mrf.mxu0
    %v1811 = vadd.f32 %v1798, %v1810
    %v1812 = vpop.f32.mrf.mxu0
    %1813 = vdwg.mxu0
    %1814 = vmatpush.bf16.msra.mxu0 %v1328
    %1815 = vmatpush.bf16.msra.mxu0 %v1324
    %1816 = vmatpush.bf16.msra.mxu0 %v1320
    %1817 = vmatpush.bf16.msra.mxu0 %v1316
    %1818 = vmatpush.bf16.msra.mxu0 %v1312
    %1819 = vmatpush.bf16.msra.mxu0 %v1308
    %1820 = vmatpush.bf16.msra.mxu0 %v1304
    %1821 = vmatpush.bf16.msra.mxu0 %v1300
    %1822 = vmatmul.bf16.gmra.mxu0 %v426
    %v1823 = vpop.f32.mrf.mxu0
    %v1824 = vadd.f32 %v1811, %v1823
    %v1825 = vpop.f32.mrf.mxu0
    %1826 = vdwg.mxu0
    %1827 = vmatpush.bf16.msra.mxu0 %v1137
    %1828 = vmatpush.bf16.msra.mxu0 %v1133
    %1829 = vmatpush.bf16.msra.mxu0 %v1129
    %1830 = vmatpush.bf16.msra.mxu0 %v1125
    %1831 = vmatpush.bf16.msra.mxu0 %v1121
    %1832 = vmatpush.bf16.msra.mxu0 %v1117
    %1833 = vmatpush.bf16.msra.mxu0 %v1113
    %1834 = vmatpush.bf16.msra.mxu0 %v1109
    %1835 = vmatmul.bf16.gmra.mxu0 %v420
    %v1836 = vpop.f32.mrf.mxu0
    %v1837 = vadd.f32 %v404, %v1836
    %v1838 = vpop.f32.mrf.mxu0
    %1839 = vdwg.mxu0
    %1840 = vmatpush.bf16.msra.mxu0 %v1169
    %1841 = vmatpush.bf16.msra.mxu0 %v1165
    %1842 = vmatpush.bf16.msra.mxu0 %v1161
    %1843 = vmatpush.bf16.msra.mxu0 %v1157
    %1844 = vmatpush.bf16.msra.mxu0 %v1153
    %1845 = vmatpush.bf16.msra.mxu0 %v1149
    %1846 = vmatpush.bf16.msra.mxu0 %v1145
    %1847 = vmatpush.bf16.msra.mxu0 %v1141
    %1848 = vmatmul.bf16.gmra.mxu0 %v421
    %v1849 = vpop.f32.mrf.mxu0
    %v1850 = vadd.f32 %v1837, %v1849
    %v1851 = vpop.f32.mrf.mxu0
    %1852 = vdwg.mxu0
    %1853 = vmatpush.bf16.msra.mxu0 %v1201
    %1854 = vmatpush.bf16.msra.mxu0 %v1197
    %1855 = vmatpush.bf16.msra.mxu0 %v1193
    %1856 = vmatpush.bf16.msra.mxu0 %v1189
    %1857 = vmatpush.bf16.msra.mxu0 %v1185
    %1858 = vmatpush.bf16.msra.mxu0 %v1181
    %1859 = vmatpush.bf16.msra.mxu0 %v1177
    %1860 = vmatpush.bf16.msra.mxu0 %v1173
    %1861 = vmatmul.bf16.gmra.mxu0 %v422
    %v1862 = vpop.f32.mrf.mxu0
    %v1863 = vadd.f32 %v1850, %v1862
    %v1864 = vpop.f32.mrf.mxu0
    %1865 = vdwg.mxu0
    %1866 = vmatpush.bf16.msra.mxu0 %v1233
    %1867 = vmatpush.bf16.msra.mxu0 %v1229
    %1868 = vmatpush.bf16.msra.mxu0 %v1225
    %1869 = vmatpush.bf16.msra.mxu0 %v1221
    %1870 = vmatpush.bf16.msra.mxu0 %v1217
    %1871 = vmatpush.bf16.msra.mxu0 %v1213
    %1872 = vmatpush.bf16.msra.mxu0 %v1209
    %1873 = vmatpush.bf16.msra.mxu0 %v1205
    %1874 = vmatmul.bf16.gmra.mxu0 %v423
    %v1875 = vpop.f32.mrf.mxu0
    %v1876 = vadd.f32 %v1863, %v1875
    %v1877 = vpop.f32.mrf.mxu0
    %1878 = vdwg.mxu0
    %1879 = vmatpush.bf16.msra.mxu0 %v1265
    %1880 = vmatpush.bf16.msra.mxu0 %v1261
    %1881 = vmatpush.bf16.msra.mxu0 %v1257
    %1882 = vmatpush.bf16.msra.mxu0 %v1253
    %1883 = vmatpush.bf16.msra.mxu0 %v1249
    %1884 = vmatpush.bf16.msra.mxu0 %v1245
    %1885 = vmatpush.bf16.msra.mxu0 %v1241
    %1886 = vmatpush.bf16.msra.mxu0 %v1237
    %1887 = vmatmul.bf16.gmra.mxu0 %v424
    %v1888 = vpop.f32.mrf.mxu0
    %v1889 = vadd.f32 %v1876, %v1888
    %v1890 = vpop.f32.mrf.mxu0
    %1891 = vdwg.mxu0
    %1892 = vmatpush.bf16.msra.mxu0 %v1297
    %1893 = vmatpush.bf16.msra.mxu0 %v1293
    %1894 = vmatpush.bf16.msra.mxu0 %v1289
    %1895 = vmatpush.bf16.msra.mxu0 %v1285
    %1896 = vmatpush.bf16.msra.mxu0 %v1281
    %1897 = vmatpush.bf16.msra.mxu0 %v1277
    %1898 = vmatpush.bf16.msra.mxu0 %v1273
    %1899 = vmatpush.bf16.msra.mxu0 %v1269
    %1900 = vmatmul.bf16.gmra.mxu0 %v425
    %v1901 = vpop.f32.mrf.mxu0
    %v1902 = vadd.f32 %v1889, %v1901
    %v1903 = vpop.f32.mrf.mxu0
    %1904 = vdwg.mxu0
    %1905 = vmatpush.bf16.msra.mxu0 %v1329
    %1906 = vmatpush.bf16.msra.mxu0 %v1325
    %1907 = vmatpush.bf16.msra.mxu0 %v1321
    %1908 = vmatpush.bf16.msra.mxu0 %v1317
    %1909 = vmatpush.bf16.msra.mxu0 %v1313
    %1910 = vmatpush.bf16.msra.mxu0 %v1309
    %1911 = vmatpush.bf16.msra.mxu0 %v1305
    %1912 = vmatpush.bf16.msra.mxu0 %v1301
    %1913 = vmatmul.bf16.gmra.mxu0 %v426
    %v1914 = vpop.f32.mrf.mxu0
    %v1915 = vadd.f32 %v1902, %v1914
    %v1916 = vpop.f32.mrf.mxu0
    %1917 = vdwg.mxu0
    %v1918 = vmax.f32 %v1642, 0.0
    %v1919 = vmax.f32 %v1733, 0.0
    %v1920 = vmax.f32 %v1824, 0.0
    %v1921 = vmax.f32 %v1915, 0.0
    %v1922 = vpack.c.bf16 %v1918, %v1918
    %v1923 = vpack.c.bf16 %v1919, %v1919
    %v1924 = vpack.c.bf16 %v1920, %v1920
    %v1925 = vpack.c.bf16 %v1921, %v1921
    %v1926 = vld [vmem:[#allocation8] sm:$0xff]
    %v1927 = vld [vmem:[#allocation8 + $0x8] sm:$0xff]
    %v1928 = vld [vmem:[#allocation8 + $0x10] sm:$0xff]
    %v1929 = vld [vmem:[#allocation8 + $0x18] sm:$0xff]
    %v1930 = vld [vmem:[#allocation8 + $0x20] sm:$0xff]
    %v1931 = vld [vmem:[#allocation8 + $0x28] sm:$0xff]
    %v1932 = vld [vmem:[#allocation8 + $0x30] sm:$0xff]
    %v1933 = vld [vmem:[#allocation8 + $0x38] sm:$0xff]
    %v1934 = vld [vmem:[#allocation8 + $0x40] sm:$0xff]
    %v1935 = vld [vmem:[#allocation8 + $0x48] sm:$0xff]
    %v1936 = vld [vmem:[#allocation8 + $0x50] sm:$0xff]
    %v1937 = vld [vmem:[#allocation8 + $0x58] sm:$0xff]
    %v1938 = vld [vmem:[#allocation8 + $0x60] sm:$0xff]
    %v1939 = vld [vmem:[#allocation8 + $0x68] sm:$0xff]
    %v1940 = vld [vmem:[#allocation8 + $0x70] sm:$0xff]
    %v1941 = vld [vmem:[#allocation8 + $0x78] sm:$0xff]
    %v1942 = vld [vmem:[#allocation8 + $0x80] sm:$0xff]
    %v1943 = vld [vmem:[#allocation8 + $0x88] sm:$0xff]
    %v1944 = vld [vmem:[#allocation8 + $0x90] sm:$0xff]
    %v1945 = vld [vmem:[#allocation8 + $0x98] sm:$0xff]
    %v1946 = vld [vmem:[#allocation8 + $0xa0] sm:$0xff]
    %v1947 = vld [vmem:[#allocation8 + $0xa8] sm:$0xff]
    %v1948 = vld [vmem:[#allocation8 + $0xb0] sm:$0xff]
    %v1949 = vld [vmem:[#allocation8 + $0xb8] sm:$0xff]
    %v1950 = vld [vmem:[#allocation8 + $0xc0] sm:$0xff]
    %v1951 = vld [vmem:[#allocation8 + $0xc8] sm:$0xff]
    %v1952 = vld [vmem:[#allocation8 + $0xd0] sm:$0xff]
    %v1953 = vld [vmem:[#allocation8 + $0xd8] sm:$0xff]
    %v1954 = vld [vmem:[#allocation8 + $0xe0] sm:$0xff]
    %v1955 = vld [vmem:[#allocation8 + $0xe8] sm:$0xff]
    %v1956 = vld [vmem:[#allocation8 + $0xf0] sm:$0xff]
    %v1957 = vld [vmem:[#allocation8 + $0xf8] sm:$0xff]
    %v1958 = vld [vmem:[#allocation8 + $0x100] sm:$0xff]
    %v1959 = vld [vmem:[#allocation8 + $0x108] sm:$0xff]
    %v1960 = vld [vmem:[#allocation8 + $0x110] sm:$0xff]
    %v1961 = vld [vmem:[#allocation8 + $0x118] sm:$0xff]
    %v1962 = vld [vmem:[#allocation8 + $0x120] sm:$0xff]
    %v1963 = vld [vmem:[#allocation8 + $0x128] sm:$0xff]
    %v1964 = vld [vmem:[#allocation8 + $0x130] sm:$0xff]
    %v1965 = vld [vmem:[#allocation8 + $0x138] sm:$0xff]
    %v1966 = vld [vmem:[#allocation8 + $0x140] sm:$0xff]
    %v1967 = vld [vmem:[#allocation8 + $0x148] sm:$0xff]
    %v1968 = vld [vmem:[#allocation8 + $0x150] sm:$0xff]
    %v1969 = vld [vmem:[#allocation8 + $0x158] sm:$0xff]
    %v1970 = vld [vmem:[#allocation8 + $0x160] sm:$0xff]
    %v1971 = vld [vmem:[#allocation8 + $0x168] sm:$0xff]
    %v1972 = vld [vmem:[#allocation8 + $0x170] sm:$0xff]
    %v1973 = vld [vmem:[#allocation8 + $0x178] sm:$0xff]
    %v1974 = vld [vmem:[#allocation8 + $0x180] sm:$0xff]
    %v1975 = vld [vmem:[#allocation8 + $0x188] sm:$0xff]
    %v1976 = vld [vmem:[#allocation8 + $0x190] sm:$0xff]
    %v1977 = vld [vmem:[#allocation8 + $0x198] sm:$0xff]
    %v1978 = vld [vmem:[#allocation8 + $0x1a0] sm:$0xff]
    %v1979 = vld [vmem:[#allocation8 + $0x1a8] sm:$0xff]
    %v1980 = vld [vmem:[#allocation8 + $0x1b0] sm:$0xff]
    %v1981 = vld [vmem:[#allocation8 + $0x1b8] sm:$0xff]
    %v1982 = vld [vmem:[#allocation8 + $0x1c0] sm:$0xff]
    %v1983 = vld [vmem:[#allocation8 + $0x1c8] sm:$0xff]
    %v1984 = vld [vmem:[#allocation8 + $0x1d0] sm:$0xff]
    %v1985 = vld [vmem:[#allocation8 + $0x1d8] sm:$0xff]
    %v1986 = vld [vmem:[#allocation8 + $0x1e0] sm:$0xff]
    %v1987 = vld [vmem:[#allocation8 + $0x1e8] sm:$0xff]
    %v1988 = vld [vmem:[#allocation8 + $0x1f0] sm:$0xff]
    %v1989 = vld [vmem:[#allocation8 + $0x1f8] sm:$0xff]
    %v1990 = vld [vmem:[#allocation8 + $0x200] sm:$0xff]
    %v1991 = vld [vmem:[#allocation8 + $0x208] sm:$0xff]
    %v1992 = vld [vmem:[#allocation8 + $0x210] sm:$0xff]
    %v1993 = vld [vmem:[#allocation8 + $0x218] sm:$0xff]
    %v1994 = vld [vmem:[#allocation8 + $0x220] sm:$0xff]
    %v1995 = vld [vmem:[#allocation8 + $0x228] sm:$0xff]
    %v1996 = vld [vmem:[#allocation8 + $0x230] sm:$0xff]
    %v1997 = vld [vmem:[#allocation8 + $0x238] sm:$0xff]
    %v1998 = vld [vmem:[#allocation8 + $0x240] sm:$0xff]
    %v1999 = vld [vmem:[#allocation8 + $0x248] sm:$0xff]
    %v2000 = vld [vmem:[#allocation8 + $0x250] sm:$0xff]
    %v2001 = vld [vmem:[#allocation8 + $0x258] sm:$0xff]
    %v2002 = vld [vmem:[#allocation8 + $0x260] sm:$0xff]
    %v2003 = vld [vmem:[#allocation8 + $0x268] sm:$0xff]
    %v2004 = vld [vmem:[#allocation8 + $0x270] sm:$0xff]
    %v2005 = vld [vmem:[#allocation8 + $0x278] sm:$0xff]
    %v2006 = vld [vmem:[#allocation8 + $0x280] sm:$0xff]
    %v2007 = vld [vmem:[#allocation8 + $0x288] sm:$0xff]
    %v2008 = vld [vmem:[#allocation8 + $0x290] sm:$0xff]
    %v2009 = vld [vmem:[#allocation8 + $0x298] sm:$0xff]
    %v2010 = vld [vmem:[#allocation8 + $0x2a0] sm:$0xff]
    %v2011 = vld [vmem:[#allocation8 + $0x2a8] sm:$0xff]
    %v2012 = vld [vmem:[#allocation8 + $0x2b0] sm:$0xff]
    %v2013 = vld [vmem:[#allocation8 + $0x2b8] sm:$0xff]
    %v2014 = vld [vmem:[#allocation8 + $0x2c0] sm:$0xff]
    %v2015 = vld [vmem:[#allocation8 + $0x2c8] sm:$0xff]
    %v2016 = vld [vmem:[#allocation8 + $0x2d0] sm:$0xff]
    %v2017 = vld [vmem:[#allocation8 + $0x2d8] sm:$0xff]
    %v2018 = vld [vmem:[#allocation8 + $0x2e0] sm:$0xff]
    %v2019 = vld [vmem:[#allocation8 + $0x2e8] sm:$0xff]
    %v2020 = vld [vmem:[#allocation8 + $0x2f0] sm:$0xff]
    %v2021 = vld [vmem:[#allocation8 + $0x2f8] sm:$0xff]
    %v2022 = vld [vmem:[#allocation8 + $0x300] sm:$0xff]
    %v2023 = vld [vmem:[#allocation8 + $0x308] sm:$0xff]
    %v2024 = vld [vmem:[#allocation8 + $0x310] sm:$0xff]
    %v2025 = vld [vmem:[#allocation8 + $0x318] sm:$0xff]
    %v2026 = vld [vmem:[#allocation8 + $0x320] sm:$0xff]
    %v2027 = vld [vmem:[#allocation8 + $0x328] sm:$0xff]
    %v2028 = vld [vmem:[#allocation8 + $0x330] sm:$0xff]
    %v2029 = vld [vmem:[#allocation8 + $0x338] sm:$0xff]
    %v2030 = vld [vmem:[#allocation8 + $0x340] sm:$0xff]
    %v2031 = vld [vmem:[#allocation8 + $0x348] sm:$0xff]
    %v2032 = vld [vmem:[#allocation8 + $0x350] sm:$0xff]
    %v2033 = vld [vmem:[#allocation8 + $0x358] sm:$0xff]
    %v2034 = vld [vmem:[#allocation8 + $0x360] sm:$0xff]
    %v2035 = vld [vmem:[#allocation8 + $0x368] sm:$0xff]
    %v2036 = vld [vmem:[#allocation8 + $0x370] sm:$0xff]
    %v2037 = vld [vmem:[#allocation8 + $0x378] sm:$0xff]
    %v2038 = vld [vmem:[#allocation8 + $0x380] sm:$0xff]
    %v2039 = vld [vmem:[#allocation8 + $0x388] sm:$0xff]
    %v2040 = vld [vmem:[#allocation8 + $0x390] sm:$0xff]
    %v2041 = vld [vmem:[#allocation8 + $0x398] sm:$0xff]
    %v2042 = vld [vmem:[#allocation8 + $0x3a0] sm:$0xff]
    %v2043 = vld [vmem:[#allocation8 + $0x3a8] sm:$0xff]
    %v2044 = vld [vmem:[#allocation8 + $0x3b0] sm:$0xff]
    %v2045 = vld [vmem:[#allocation8 + $0x3b8] sm:$0xff]
    %v2046 = vld [vmem:[#allocation8 + $0x3c0] sm:$0xff]
    %v2047 = vld [vmem:[#allocation8 + $0x3c8] sm:$0xff]
    %v2048 = vld [vmem:[#allocation8 + $0x3d0] sm:$0xff]
    %v2049 = vld [vmem:[#allocation8 + $0x3d8] sm:$0xff]
    %v2050 = vld [vmem:[#allocation8 + $0x3e0] sm:$0xff]
    %v2051 = vld [vmem:[#allocation8 + $0x3e8] sm:$0xff]
    %v2052 = vld [vmem:[#allocation8 + $0x3f0] sm:$0xff]
    %v2053 = vld [vmem:[#allocation8 + $0x3f8] sm:$0xff]
    %v2054 = vld [vmem:[#allocation10] sm:$0xf]
    %v2056 = vperm.slane %v2054, 0
    %v2057 = vperm.slane %v2054, 1
    %v2058 = vperm.slane %v2054, 2
    %v2059 = vperm.slane %v2054, 3
    %v2192 = vunpack.c.l.b16 %v1926
    %v2193 = vunpack.c.h.b16 %v1926
    %v2194 = vunpack.c.l.b16 %v1927
    %v2195 = vunpack.c.h.b16 %v1927
    %v2196 = vunpack.c.l.b16 %v1928
    %v2197 = vunpack.c.h.b16 %v1928
    %v2198 = vunpack.c.l.b16 %v1929
    %v2199 = vunpack.c.h.b16 %v1929
    %v2200 = vunpack.c.l.b16 %v1930
    %v2201 = vunpack.c.h.b16 %v1930
    %v2202 = vunpack.c.l.b16 %v1931
    %v2203 = vunpack.c.h.b16 %v1931
    %v2204 = vunpack.c.l.b16 %v1932
    %v2205 = vunpack.c.h.b16 %v1932
    %v2206 = vunpack.c.l.b16 %v1933
    %v2207 = vunpack.c.h.b16 %v1933
    %v2208 = vunpack.c.l.b16 %v1934
    %v2209 = vunpack.c.h.b16 %v1934
    %v2210 = vunpack.c.l.b16 %v1935
    %v2211 = vunpack.c.h.b16 %v1935
    %v2212 = vunpack.c.l.b16 %v1936
    %v2213 = vunpack.c.h.b16 %v1936
    %v2214 = vunpack.c.l.b16 %v1937
    %v2215 = vunpack.c.h.b16 %v1937
    %v2216 = vunpack.c.l.b16 %v1938
    %v2217 = vunpack.c.h.b16 %v1938
    %v2218 = vunpack.c.l.b16 %v1939
    %v2219 = vunpack.c.h.b16 %v1939
    %v2220 = vunpack.c.l.b16 %v1940
    %v2221 = vunpack.c.h.b16 %v1940
    %v2222 = vunpack.c.l.b16 %v1941
    %v2223 = vunpack.c.h.b16 %v1941
    %v2224 = vunpack.c.l.b16 %v1942
    %v2225 = vunpack.c.h.b16 %v1942
    %v2226 = vunpack.c.l.b16 %v1943
    %v2227 = vunpack.c.h.b16 %v1943
    %v2228 = vunpack.c.l.b16 %v1944
    %v2229 = vunpack.c.h.b16 %v1944
    %v2230 = vunpack.c.l.b16 %v1945
    %v2231 = vunpack.c.h.b16 %v1945
    %v2232 = vunpack.c.l.b16 %v1946
    %v2233 = vunpack.c.h.b16 %v1946
    %v2234 = vunpack.c.l.b16 %v1947
    %v2235 = vunpack.c.h.b16 %v1947
    %v2236 = vunpack.c.l.b16 %v1948
    %v2237 = vunpack.c.h.b16 %v1948
    %v2238 = vunpack.c.l.b16 %v1949
    %v2239 = vunpack.c.h.b16 %v1949
    %v2240 = vunpack.c.l.b16 %v1950
    %v2241 = vunpack.c.h.b16 %v1950
    %v2242 = vunpack.c.l.b16 %v1951
    %v2243 = vunpack.c.h.b16 %v1951
    %v2244 = vunpack.c.l.b16 %v1952
    %v2245 = vunpack.c.h.b16 %v1952
    %v2246 = vunpack.c.l.b16 %v1953
    %v2247 = vunpack.c.h.b16 %v1953
    %v2248 = vunpack.c.l.b16 %v1954
    %v2249 = vunpack.c.h.b16 %v1954
    %v2250 = vunpack.c.l.b16 %v1955
    %v2251 = vunpack.c.h.b16 %v1955
    %v2252 = vunpack.c.l.b16 %v1956
    %v2253 = vunpack.c.h.b16 %v1956
    %v2254 = vunpack.c.l.b16 %v1957
    %v2255 = vunpack.c.h.b16 %v1957
    %v2256 = vunpack.c.l.b16 %v1958
    %v2257 = vunpack.c.h.b16 %v1958
    %v2258 = vunpack.c.l.b16 %v1959
    %v2259 = vunpack.c.h.b16 %v1959
    %v2260 = vunpack.c.l.b16 %v1960
    %v2261 = vunpack.c.h.b16 %v1960
    %v2262 = vunpack.c.l.b16 %v1961
    %v2263 = vunpack.c.h.b16 %v1961
    %v2264 = vunpack.c.l.b16 %v1962
    %v2265 = vunpack.c.h.b16 %v1962
    %v2266 = vunpack.c.l.b16 %v1963
    %v2267 = vunpack.c.h.b16 %v1963
    %v2268 = vunpack.c.l.b16 %v1964
    %v2269 = vunpack.c.h.b16 %v1964
    %v2270 = vunpack.c.l.b16 %v1965
    %v2271 = vunpack.c.h.b16 %v1965
    %v2272 = vunpack.c.l.b16 %v1966
    %v2273 = vunpack.c.h.b16 %v1966
    %v2274 = vunpack.c.l.b16 %v1967
    %v2275 = vunpack.c.h.b16 %v1967
    %v2276 = vunpack.c.l.b16 %v1968
    %v2277 = vunpack.c.h.b16 %v1968
    %v2278 = vunpack.c.l.b16 %v1969
    %v2279 = vunpack.c.h.b16 %v1969
    %v2280 = vunpack.c.l.b16 %v1970
    %v2281 = vunpack.c.h.b16 %v1970
    %v2282 = vunpack.c.l.b16 %v1971
    %v2283 = vunpack.c.h.b16 %v1971
    %v2284 = vunpack.c.l.b16 %v1972
    %v2285 = vunpack.c.h.b16 %v1972
    %v2286 = vunpack.c.l.b16 %v1973
    %v2287 = vunpack.c.h.b16 %v1973
    %v2288 = vunpack.c.l.b16 %v1974
    %v2289 = vunpack.c.h.b16 %v1974
    %v2290 = vunpack.c.l.b16 %v1975
    %v2291 = vunpack.c.h.b16 %v1975
    %v2292 = vunpack.c.l.b16 %v1976
    %v2293 = vunpack.c.h.b16 %v1976
    %v2294 = vunpack.c.l.b16 %v1977
    %v2295 = vunpack.c.h.b16 %v1977
    %v2296 = vunpack.c.l.b16 %v1978
    %v2297 = vunpack.c.h.b16 %v1978
    %v2298 = vunpack.c.l.b16 %v1979
    %v2299 = vunpack.c.h.b16 %v1979
    %v2300 = vunpack.c.l.b16 %v1980
    %v2301 = vunpack.c.h.b16 %v1980
    %v2302 = vunpack.c.l.b16 %v1981
    %v2303 = vunpack.c.h.b16 %v1981
    %v2304 = vunpack.c.l.b16 %v1982
    %v2305 = vunpack.c.h.b16 %v1982
    %v2306 = vunpack.c.l.b16 %v1983
    %v2307 = vunpack.c.h.b16 %v1983
    %v2308 = vunpack.c.l.b16 %v1984
    %v2309 = vunpack.c.h.b16 %v1984
    %v2310 = vunpack.c.l.b16 %v1985
    %v2311 = vunpack.c.h.b16 %v1985
    %v2312 = vunpack.c.l.b16 %v1986
    %v2313 = vunpack.c.h.b16 %v1986
    %v2314 = vunpack.c.l.b16 %v1987
    %v2315 = vunpack.c.h.b16 %v1987
    %v2316 = vunpack.c.l.b16 %v1988
    %v2317 = vunpack.c.h.b16 %v1988
    %v2318 = vunpack.c.l.b16 %v1989
    %v2319 = vunpack.c.h.b16 %v1989
    %v2320 = vunpack.c.l.b16 %v1990
    %v2321 = vunpack.c.h.b16 %v1990
    %v2322 = vunpack.c.l.b16 %v1991
    %v2323 = vunpack.c.h.b16 %v1991
    %v2324 = vunpack.c.l.b16 %v1992
    %v2325 = vunpack.c.h.b16 %v1992
    %v2326 = vunpack.c.l.b16 %v1993
    %v2327 = vunpack.c.h.b16 %v1993
    %v2328 = vunpack.c.l.b16 %v1994
    %v2329 = vunpack.c.h.b16 %v1994
    %v2330 = vunpack.c.l.b16 %v1995
    %v2331 = vunpack.c.h.b16 %v1995
    %v2332 = vunpack.c.l.b16 %v1996
    %v2333 = vunpack.c.h.b16 %v1996
    %v2334 = vunpack.c.l.b16 %v1997
    %v2335 = vunpack.c.h.b16 %v1997
    %v2336 = vunpack.c.l.b16 %v1998
    %v2337 = vunpack.c.h.b16 %v1998
    %v2338 = vunpack.c.l.b16 %v1999
    %v2339 = vunpack.c.h.b16 %v1999
    %v2340 = vunpack.c.l.b16 %v2000
    %v2341 = vunpack.c.h.b16 %v2000
    %v2342 = vunpack.c.l.b16 %v2001
    %v2343 = vunpack.c.h.b16 %v2001
    %v2344 = vunpack.c.l.b16 %v2002
    %v2345 = vunpack.c.h.b16 %v2002
    %v2346 = vunpack.c.l.b16 %v2003
    %v2347 = vunpack.c.h.b16 %v2003
    %v2348 = vunpack.c.l.b16 %v2004
    %v2349 = vunpack.c.h.b16 %v2004
    %v2350 = vunpack.c.l.b16 %v2005
    %v2351 = vunpack.c.h.b16 %v2005
    %v2352 = vunpack.c.l.b16 %v2006
    %v2353 = vunpack.c.h.b16 %v2006
    %v2354 = vunpack.c.l.b16 %v2007
    %v2355 = vunpack.c.h.b16 %v2007
    %v2356 = vunpack.c.l.b16 %v2008
    %v2357 = vunpack.c.h.b16 %v2008
    %v2358 = vunpack.c.l.b16 %v2009
    %v2359 = vunpack.c.h.b16 %v2009
    %v2360 = vunpack.c.l.b16 %v2010
    %v2361 = vunpack.c.h.b16 %v2010
    %v2362 = vunpack.c.l.b16 %v2011
    %v2363 = vunpack.c.h.b16 %v2011
    %v2364 = vunpack.c.l.b16 %v2012
    %v2365 = vunpack.c.h.b16 %v2012
    %v2366 = vunpack.c.l.b16 %v2013
    %v2367 = vunpack.c.h.b16 %v2013
    %v2368 = vunpack.c.l.b16 %v2014
    %v2369 = vunpack.c.h.b16 %v2014
    %v2370 = vunpack.c.l.b16 %v2015
    %v2371 = vunpack.c.h.b16 %v2015
    %v2372 = vunpack.c.l.b16 %v2016
    %v2373 = vunpack.c.h.b16 %v2016
    %v2374 = vunpack.c.l.b16 %v2017
    %v2375 = vunpack.c.h.b16 %v2017
    %v2376 = vunpack.c.l.b16 %v2018
    %v2377 = vunpack.c.h.b16 %v2018
    %v2378 = vunpack.c.l.b16 %v2019
    %v2379 = vunpack.c.h.b16 %v2019
    %v2380 = vunpack.c.l.b16 %v2020
    %v2381 = vunpack.c.h.b16 %v2020
    %v2382 = vunpack.c.l.b16 %v2021
    %v2383 = vunpack.c.h.b16 %v2021
    %v2384 = vunpack.c.l.b16 %v2022
    %v2385 = vunpack.c.h.b16 %v2022
    %v2386 = vunpack.c.l.b16 %v2023
    %v2387 = vunpack.c.h.b16 %v2023
    %v2388 = vunpack.c.l.b16 %v2024
    %v2389 = vunpack.c.h.b16 %v2024
    %v2390 = vunpack.c.l.b16 %v2025
    %v2391 = vunpack.c.h.b16 %v2025
    %v2392 = vunpack.c.l.b16 %v2026
    %v2393 = vunpack.c.h.b16 %v2026
    %v2394 = vunpack.c.l.b16 %v2027
    %v2395 = vunpack.c.h.b16 %v2027
    %v2396 = vunpack.c.l.b16 %v2028
    %v2397 = vunpack.c.h.b16 %v2028
    %v2398 = vunpack.c.l.b16 %v2029
    %v2399 = vunpack.c.h.b16 %v2029
    %v2400 = vunpack.c.l.b16 %v2030
    %v2401 = vunpack.c.h.b16 %v2030
    %v2402 = vunpack.c.l.b16 %v2031
    %v2403 = vunpack.c.h.b16 %v2031
    %v2404 = vunpack.c.l.b16 %v2032
    %v2405 = vunpack.c.h.b16 %v2032
    %v2406 = vunpack.c.l.b16 %v2033
    %v2407 = vunpack.c.h.b16 %v2033
    %v2408 = vunpack.c.l.b16 %v2034
    %v2409 = vunpack.c.h.b16 %v2034
    %v2410 = vunpack.c.l.b16 %v2035
    %v2411 = vunpack.c.h.b16 %v2035
    %v2412 = vunpack.c.l.b16 %v2036
    %v2413 = vunpack.c.h.b16 %v2036
    %v2414 = vunpack.c.l.b16 %v2037
    %v2415 = vunpack.c.h.b16 %v2037
    %v2416 = vunpack.c.l.b16 %v2038
    %v2417 = vunpack.c.h.b16 %v2038
    %v2418 = vunpack.c.l.b16 %v2039
    %v2419 = vunpack.c.h.b16 %v2039
    %v2420 = vunpack.c.l.b16 %v2040
    %v2421 = vunpack.c.h.b16 %v2040
    %v2422 = vunpack.c.l.b16 %v2041
    %v2423 = vunpack.c.h.b16 %v2041
    %v2424 = vunpack.c.l.b16 %v2042
    %v2425 = vunpack.c.h.b16 %v2042
    %v2426 = vunpack.c.l.b16 %v2043
    %v2427 = vunpack.c.h.b16 %v2043
    %v2428 = vunpack.c.l.b16 %v2044
    %v2429 = vunpack.c.h.b16 %v2044
    %v2430 = vunpack.c.l.b16 %v2045
    %v2431 = vunpack.c.h.b16 %v2045
    %v2432 = vunpack.c.l.b16 %v2046
    %v2433 = vunpack.c.h.b16 %v2046
    %v2434 = vunpack.c.l.b16 %v2047
    %v2435 = vunpack.c.h.b16 %v2047
    %v2436 = vunpack.c.l.b16 %v2048
    %v2437 = vunpack.c.h.b16 %v2048
    %v2438 = vunpack.c.l.b16 %v2049
    %v2439 = vunpack.c.h.b16 %v2049
    %v2440 = vunpack.c.l.b16 %v2050
    %v2441 = vunpack.c.h.b16 %v2050
    %v2442 = vunpack.c.l.b16 %v2051
    %v2443 = vunpack.c.h.b16 %v2051
    %v2444 = vunpack.c.l.b16 %v2052
    %v2445 = vunpack.c.h.b16 %v2052
    %v2446 = vunpack.c.l.b16 %v2053
    %v2447 = vunpack.c.h.b16 %v2053
    %v2448 = vpack.c.b16 %v2196, %v2192
    %v2449 = vpack.c.b16 %v2197, %v2193
    %v2450 = vpack.c.b16 %v2198, %v2194
    %v2451 = vpack.c.b16 %v2199, %v2195
    %v2452 = vpack.c.b16 %v2204, %v2200
    %v2453 = vpack.c.b16 %v2205, %v2201
    %v2454 = vpack.c.b16 %v2206, %v2202
    %v2455 = vpack.c.b16 %v2207, %v2203
    %v2456 = vpack.c.b16 %v2212, %v2208
    %v2457 = vpack.c.b16 %v2213, %v2209
    %v2458 = vpack.c.b16 %v2214, %v2210
    %v2459 = vpack.c.b16 %v2215, %v2211
    %v2460 = vpack.c.b16 %v2220, %v2216
    %v2461 = vpack.c.b16 %v2221, %v2217
    %v2462 = vpack.c.b16 %v2222, %v2218
    %v2463 = vpack.c.b16 %v2223, %v2219
    %v2464 = vpack.c.b16 %v2228, %v2224
    %v2465 = vpack.c.b16 %v2229, %v2225
    %v2466 = vpack.c.b16 %v2230, %v2226
    %v2467 = vpack.c.b16 %v2231, %v2227
    %v2468 = vpack.c.b16 %v2236, %v2232
    %v2469 = vpack.c.b16 %v2237, %v2233
    %v2470 = vpack.c.b16 %v2238, %v2234
    %v2471 = vpack.c.b16 %v2239, %v2235
    %v2472 = vpack.c.b16 %v2244, %v2240
    %v2473 = vpack.c.b16 %v2245, %v2241
    %v2474 = vpack.c.b16 %v2246, %v2242
    %v2475 = vpack.c.b16 %v2247, %v2243
    %v2476 = vpack.c.b16 %v2252, %v2248
    %v2477 = vpack.c.b16 %v2253, %v2249
    %v2478 = vpack.c.b16 %v2254, %v2250
    %v2479 = vpack.c.b16 %v2255, %v2251
    %v2480 = vpack.c.b16 %v2260, %v2256
    %v2481 = vpack.c.b16 %v2261, %v2257
    %v2482 = vpack.c.b16 %v2262, %v2258
    %v2483 = vpack.c.b16 %v2263, %v2259
    %v2484 = vpack.c.b16 %v2268, %v2264
    %v2485 = vpack.c.b16 %v2269, %v2265
    %v2486 = vpack.c.b16 %v2270, %v2266
    %v2487 = vpack.c.b16 %v2271, %v2267
    %v2488 = vpack.c.b16 %v2276, %v2272
    %v2489 = vpack.c.b16 %v2277, %v2273
    %v2490 = vpack.c.b16 %v2278, %v2274
    %v2491 = vpack.c.b16 %v2279, %v2275
    %v2492 = vpack.c.b16 %v2284, %v2280
    %v2493 = vpack.c.b16 %v2285, %v2281
    %v2494 = vpack.c.b16 %v2286, %v2282
    %v2495 = vpack.c.b16 %v2287, %v2283
    %v2496 = vpack.c.b16 %v2292, %v2288
    %v2497 = vpack.c.b16 %v2293, %v2289
    %v2498 = vpack.c.b16 %v2294, %v2290
    %v2499 = vpack.c.b16 %v2295, %v2291
    %v2500 = vpack.c.b16 %v2300, %v2296
    %v2501 = vpack.c.b16 %v2301, %v2297
    %v2502 = vpack.c.b16 %v2302, %v2298
    %v2503 = vpack.c.b16 %v2303, %v2299
    %v2504 = vpack.c.b16 %v2308, %v2304
    %v2505 = vpack.c.b16 %v2309, %v2305
    %v2506 = vpack.c.b16 %v2310, %v2306
    %v2507 = vpack.c.b16 %v2311, %v2307
    %v2508 = vpack.c.b16 %v2316, %v2312
    %v2509 = vpack.c.b16 %v2317, %v2313
    %v2510 = vpack.c.b16 %v2318, %v2314
    %v2511 = vpack.c.b16 %v2319, %v2315
    %v2512 = vpack.c.b16 %v2324, %v2320
    %v2513 = vpack.c.b16 %v2325, %v2321
    %v2514 = vpack.c.b16 %v2326, %v2322
    %v2515 = vpack.c.b16 %v2327, %v2323
    %v2516 = vpack.c.b16 %v2332, %v2328
    %v2517 = vpack.c.b16 %v2333, %v2329
    %v2518 = vpack.c.b16 %v2334, %v2330
    %v2519 = vpack.c.b16 %v2335, %v2331
    %v2520 = vpack.c.b16 %v2340, %v2336
    %v2521 = vpack.c.b16 %v2341, %v2337
    %v2522 = vpack.c.b16 %v2342, %v2338
    %v2523 = vpack.c.b16 %v2343, %v2339
    %v2524 = vpack.c.b16 %v2348, %v2344
    %v2525 = vpack.c.b16 %v2349, %v2345
    %v2526 = vpack.c.b16 %v2350, %v2346
    %v2527 = vpack.c.b16 %v2351, %v2347
    %v2528 = vpack.c.b16 %v2356, %v2352
    %v2529 = vpack.c.b16 %v2357, %v2353
    %v2530 = vpack.c.b16 %v2358, %v2354
    %v2531 = vpack.c.b16 %v2359, %v2355
    %v2532 = vpack.c.b16 %v2364, %v2360
    %v2533 = vpack.c.b16 %v2365, %v2361
    %v2534 = vpack.c.b16 %v2366, %v2362
    %v2535 = vpack.c.b16 %v2367, %v2363
    %v2536 = vpack.c.b16 %v2372, %v2368
    %v2537 = vpack.c.b16 %v2373, %v2369
    %v2538 = vpack.c.b16 %v2374, %v2370
    %v2539 = vpack.c.b16 %v2375, %v2371
    %v2540 = vpack.c.b16 %v2380, %v2376
    %v2541 = vpack.c.b16 %v2381, %v2377
    %v2542 = vpack.c.b16 %v2382, %v2378
    %v2543 = vpack.c.b16 %v2383, %v2379
    %v2544 = vpack.c.b16 %v2388, %v2384
    %v2545 = vpack.c.b16 %v2389, %v2385
    %v2546 = vpack.c.b16 %v2390, %v2386
    %v2547 = vpack.c.b16 %v2391, %v2387
    %v2548 = vpack.c.b16 %v2396, %v2392
    %v2549 = vpack.c.b16 %v2397, %v2393
    %v2550 = vpack.c.b16 %v2398, %v2394
    %v2551 = vpack.c.b16 %v2399, %v2395
    %v2552 = vpack.c.b16 %v2404, %v2400
    %v2553 = vpack.c.b16 %v2405, %v2401
    %v2554 = vpack.c.b16 %v2406, %v2402
    %v2555 = vpack.c.b16 %v2407, %v2403
    %v2556 = vpack.c.b16 %v2412, %v2408
    %v2557 = vpack.c.b16 %v2413, %v2409
    %v2558 = vpack.c.b16 %v2414, %v2410
    %v2559 = vpack.c.b16 %v2415, %v2411
    %v2560 = vpack.c.b16 %v2420, %v2416
    %v2561 = vpack.c.b16 %v2421, %v2417
    %v2562 = vpack.c.b16 %v2422, %v2418
    %v2563 = vpack.c.b16 %v2423, %v2419
    %v2564 = vpack.c.b16 %v2428, %v2424
    %v2565 = vpack.c.b16 %v2429, %v2425
    %v2566 = vpack.c.b16 %v2430, %v2426
    %v2567 = vpack.c.b16 %v2431, %v2427
    %v2568 = vpack.c.b16 %v2436, %v2432
    %v2569 = vpack.c.b16 %v2437, %v2433
    %v2570 = vpack.c.b16 %v2438, %v2434
    %v2571 = vpack.c.b16 %v2439, %v2435
    %v2572 = vpack.c.b16 %v2444, %v2440
    %v2573 = vpack.c.b16 %v2445, %v2441
    %v2574 = vpack.c.b16 %v2446, %v2442
    %v2575 = vpack.c.b16 %v2447, %v2443
    %2704 = vmatpush.bf16.msra.mxu0 %v2476
    %2705 = vmatpush.bf16.msra.mxu0 %v2472
    %2706 = vmatpush.bf16.msra.mxu0 %v2468
    %2707 = vmatpush.bf16.msra.mxu0 %v2464
    %2708 = vmatpush.bf16.msra.mxu0 %v2460
    %2709 = vmatpush.bf16.msra.mxu0 %v2456
    %2710 = vmatpush.bf16.msra.mxu0 %v2452
    %2711 = vmatpush.bf16.msra.mxu0 %v2448
    %2712 = vmatmul.bf16.gmra.mxu0 %v1922
    %v2713 = vpop.f32.mrf.mxu0
    %v2714 = vadd.f32 %v2056, %v2713
    %v2715 = vpop.f32.mrf.mxu0
    %2716 = vdwg.mxu0
    %2717 = vmatpush.bf16.msra.mxu0 %v2508
    %2718 = vmatpush.bf16.msra.mxu0 %v2504
    %2719 = vmatpush.bf16.msra.mxu0 %v2500
    %2720 = vmatpush.bf16.msra.mxu0 %v2496
    %2721 = vmatpush.bf16.msra.mxu0 %v2492
    %2722 = vmatpush.bf16.msra.mxu0 %v2488
    %2723 = vmatpush.bf16.msra.mxu0 %v2484
    %2724 = vmatpush.bf16.msra.mxu0 %v2480
    %2725 = vmatmul.bf16.gmra.mxu0 %v1923
    %v2726 = vpop.f32.mrf.mxu0
    %v2727 = vadd.f32 %v2714, %v2726
    %v2728 = vpop.f32.mrf.mxu0
    %2729 = vdwg.mxu0
    %2730 = vmatpush.bf16.msra.mxu0 %v2540
    %2731 = vmatpush.bf16.msra.mxu0 %v2536
    %2732 = vmatpush.bf16.msra.mxu0 %v2532
    %2733 = vmatpush.bf16.msra.mxu0 %v2528
    %2734 = vmatpush.bf16.msra.mxu0 %v2524
    %2735 = vmatpush.bf16.msra.mxu0 %v2520
    %2736 = vmatpush.bf16.msra.mxu0 %v2516
    %2737 = vmatpush.bf16.msra.mxu0 %v2512
    %2738 = vmatmul.bf16.gmra.mxu0 %v1924
    %v2739 = vpop.f32.mrf.mxu0
    %v2740 = vadd.f32 %v2727, %v2739
    %v2741 = vpop.f32.mrf.mxu0
    %2742 = vdwg.mxu0
    %2743 = vmatpush.bf16.msra.mxu0 %v2572
    %2744 = vmatpush.bf16.msra.mxu0 %v2568
    %2745 = vmatpush.bf16.msra.mxu0 %v2564
    %2746 = vmatpush.bf16.msra.mxu0 %v2560
    %2747 = vmatpush.bf16.msra.mxu0 %v2556
    %2748 = vmatpush.bf16.msra.mxu0 %v2552
    %2749 = vmatpush.bf16.msra.mxu0 %v2548
    %2750 = vmatpush.bf16.msra.mxu0 %v2544
    %2751 = vmatmul.bf16.gmra.mxu0 %v1925
    %v2752 = vpop.f32.mrf.mxu0
    %v2753 = vadd.f32 %v2740, %v2752
    %v2754 = vpop.f32.mrf.mxu0
    %2755 = vdwg.mxu0
    %2756 = vmatpush.bf16.msra.mxu0 %v2477
    %2757 = vmatpush.bf16.msra.mxu0 %v2473
    %2758 = vmatpush.bf16.msra.mxu0 %v2469
    %2759 = vmatpush.bf16.msra.mxu0 %v2465
    %2760 = vmatpush.bf16.msra.mxu0 %v2461
    %2761 = vmatpush.bf16.msra.mxu0 %v2457
    %2762 = vmatpush.bf16.msra.mxu0 %v2453
    %2763 = vmatpush.bf16.msra.mxu0 %v2449
    %2764 = vmatmul.bf16.gmra.mxu0 %v1922
    %v2765 = vpop.f32.mrf.mxu0
    %v2766 = vadd.f32 %v2057, %v2765
    %v2767 = vpop.f32.mrf.mxu0
    %2768 = vdwg.mxu0
    %2769 = vmatpush.bf16.msra.mxu0 %v2509
    %2770 = vmatpush.bf16.msra.mxu0 %v2505
    %2771 = vmatpush.bf16.msra.mxu0 %v2501
    %2772 = vmatpush.bf16.msra.mxu0 %v2497
    %2773 = vmatpush.bf16.msra.mxu0 %v2493
    %2774 = vmatpush.bf16.msra.mxu0 %v2489
    %2775 = vmatpush.bf16.msra.mxu0 %v2485
    %2776 = vmatpush.bf16.msra.mxu0 %v2481
    %2777 = vmatmul.bf16.gmra.mxu0 %v1923
    %v2778 = vpop.f32.mrf.mxu0
    %v2779 = vadd.f32 %v2766, %v2778
    %v2780 = vpop.f32.mrf.mxu0
    %2781 = vdwg.mxu0
    %2782 = vmatpush.bf16.msra.mxu0 %v2541
    %2783 = vmatpush.bf16.msra.mxu0 %v2537
    %2784 = vmatpush.bf16.msra.mxu0 %v2533
    %2785 = vmatpush.bf16.msra.mxu0 %v2529
    %2786 = vmatpush.bf16.msra.mxu0 %v2525
    %2787 = vmatpush.bf16.msra.mxu0 %v2521
    %2788 = vmatpush.bf16.msra.mxu0 %v2517
    %2789 = vmatpush.bf16.msra.mxu0 %v2513
    %2790 = vmatmul.bf16.gmra.mxu0 %v1924
    %v2791 = vpop.f32.mrf.mxu0
    %v2792 = vadd.f32 %v2779, %v2791
    %v2793 = vpop.f32.mrf.mxu0
    %2794 = vdwg.mxu0
    %2795 = vmatpush.bf16.msra.mxu0 %v2573
    %2796 = vmatpush.bf16.msra.mxu0 %v2569
    %2797 = vmatpush.bf16.msra.mxu0 %v2565
    %2798 = vmatpush.bf16.msra.mxu0 %v2561
    %2799 = vmatpush.bf16.msra.mxu0 %v2557
    %2800 = vmatpush.bf16.msra.mxu0 %v2553
    %2801 = vmatpush.bf16.msra.mxu0 %v2549
    %2802 = vmatpush.bf16.msra.mxu0 %v2545
    %2803 = vmatmul.bf16.gmra.mxu0 %v1925
    %v2804 = vpop.f32.mrf.mxu0
    %v2805 = vadd.f32 %v2792, %v2804
    %v2806 = vpop.f32.mrf.mxu0
    %2807 = vdwg.mxu0
    %2808 = vmatpush.bf16.msra.mxu0 %v2478
    %2809 = vmatpush.bf16.msra.mxu0 %v2474
    %2810 = vmatpush.bf16.msra.mxu0 %v2470
    %2811 = vmatpush.bf16.msra.mxu0 %v2466
    %2812 = vmatpush.bf16.msra.mxu0 %v2462
    %2813 = vmatpush.bf16.msra.mxu0 %v2458
    %2814 = vmatpush.bf16.msra.mxu0 %v2454
    %2815 = vmatpush.bf16.msra.mxu0 %v2450
    %2816 = vmatmul.bf16.gmra.mxu0 %v1922
    %v2817 = vpop.f32.mrf.mxu0
    %v2818 = vadd.f32 %v2058, %v2817
    %v2819 = vpop.f32.mrf.mxu0
    %2820 = vdwg.mxu0
    %2821 = vmatpush.bf16.msra.mxu0 %v2510
    %2822 = vmatpush.bf16.msra.mxu0 %v2506
    %2823 = vmatpush.bf16.msra.mxu0 %v2502
    %2824 = vmatpush.bf16.msra.mxu0 %v2498
    %2825 = vmatpush.bf16.msra.mxu0 %v2494
    %2826 = vmatpush.bf16.msra.mxu0 %v2490
    %2827 = vmatpush.bf16.msra.mxu0 %v2486
    %2828 = vmatpush.bf16.msra.mxu0 %v2482
    %2829 = vmatmul.bf16.gmra.mxu0 %v1923
    %v2830 = vpop.f32.mrf.mxu0
    %v2831 = vadd.f32 %v2818, %v2830
    %v2832 = vpop.f32.mrf.mxu0
    %2833 = vdwg.mxu0
    %2834 = vmatpush.bf16.msra.mxu0 %v2542
    %2835 = vmatpush.bf16.msra.mxu0 %v2538
    %2836 = vmatpush.bf16.msra.mxu0 %v2534
    %2837 = vmatpush.bf16.msra.mxu0 %v2530
    %2838 = vmatpush.bf16.msra.mxu0 %v2526
    %2839 = vmatpush.bf16.msra.mxu0 %v2522
    %2840 = vmatpush.bf16.msra.mxu0 %v2518
    %2841 = vmatpush.bf16.msra.mxu0 %v2514
    %2842 = vmatmul.bf16.gmra.mxu0 %v1924
    %v2843 = vpop.f32.mrf.mxu0
    %v2844 = vadd.f32 %v2831, %v2843
    %v2845 = vpop.f32.mrf.mxu0
    %2846 = vdwg.mxu0
    %2847 = vmatpush.bf16.msra.mxu0 %v2574
    %2848 = vmatpush.bf16.msra.mxu0 %v2570
    %2849 = vmatpush.bf16.msra.mxu0 %v2566
    %2850 = vmatpush.bf16.msra.mxu0 %v2562
    %2851 = vmatpush.bf16.msra.mxu0 %v2558
    %2852 = vmatpush.bf16.msra.mxu0 %v2554
    %2853 = vmatpush.bf16.msra.mxu0 %v2550
    %2854 = vmatpush.bf16.msra.mxu0 %v2546
    %2855 = vmatmul.bf16.gmra.mxu0 %v1925
    %v2856 = vpop.f32.mrf.mxu0
    %v2857 = vadd.f32 %v2844, %v2856
    %v2858 = vpop.f32.mrf.mxu0
    %2859 = vdwg.mxu0
    %2860 = vmatpush.bf16.msra.mxu0 %v2479
    %2861 = vmatpush.bf16.msra.mxu0 %v2475
    %2862 = vmatpush.bf16.msra.mxu0 %v2471
    %2863 = vmatpush.bf16.msra.mxu0 %v2467
    %2864 = vmatpush.bf16.msra.mxu0 %v2463
    %2865 = vmatpush.bf16.msra.mxu0 %v2459
    %2866 = vmatpush.bf16.msra.mxu0 %v2455
    %2867 = vmatpush.bf16.msra.mxu0 %v2451
    %2868 = vmatmul.bf16.gmra.mxu0 %v1922
    %v2869 = vpop.f32.mrf.mxu0
    %v2870 = vadd.f32 %v2059, %v2869
    %v2871 = vpop.f32.mrf.mxu0
    %2872 = vdwg.mxu0
    %2873 = vmatpush.bf16.msra.mxu0 %v2511
    %2874 = vmatpush.bf16.msra.mxu0 %v2507
    %2875 = vmatpush.bf16.msra.mxu0 %v2503
    %2876 = vmatpush.bf16.msra.mxu0 %v2499
    %2877 = vmatpush.bf16.msra.mxu0 %v2495
    %2878 = vmatpush.bf16.msra.mxu0 %v2491
    %2879 = vmatpush.bf16.msra.mxu0 %v2487
    %2880 = vmatpush.bf16.msra.mxu0 %v2483
    %2881 = vmatmul.bf16.gmra.mxu0 %v1923
    %v2882 = vpop.f32.mrf.mxu0
    %v2883 = vadd.f32 %v2870, %v2882
    %v2884 = vpop.f32.mrf.mxu0
    %2885 = vdwg.mxu0
    %2886 = vmatpush.bf16.msra.mxu0 %v2543
    %2887 = vmatpush.bf16.msra.mxu0 %v2539
    %2888 = vmatpush.bf16.msra.mxu0 %v2535
    %2889 = vmatpush.bf16.msra.mxu0 %v2531
    %2890 = vmatpush.bf16.msra.mxu0 %v2527
    %2891 = vmatpush.bf16.msra.mxu0 %v2523
    %2892 = vmatpush.bf16.msra.mxu0 %v2519
    %2893 = vmatpush.bf16.msra.mxu0 %v2515
    %2894 = vmatmul.bf16.gmra.mxu0 %v1924
    %v2895 = vpop.f32.mrf.mxu0
    %v2896 = vadd.f32 %v2883, %v2895
    %v2897 = vpop.f32.mrf.mxu0
    %2898 = vdwg.mxu0
    %2899 = vmatpush.bf16.msra.mxu0 %v2575
    %2900 = vmatpush.bf16.msra.mxu0 %v2571
    %2901 = vmatpush.bf16.msra.mxu0 %v2567
    %2902 = vmatpush.bf16.msra.mxu0 %v2563
    %2903 = vmatpush.bf16.msra.mxu0 %v2559
    %2904 = vmatpush.bf16.msra.mxu0 %v2555
    %2905 = vmatpush.bf16.msra.mxu0 %v2551
    %2906 = vmatpush.bf16.msra.mxu0 %v2547
    %2907 = vmatmul.bf16.gmra.mxu0 %v1925
    %v2908 = vpop.f32.mrf.mxu0
    %v2909 = vadd.f32 %v2896, %v2908
    %v2910 = vpop.f32.mrf.mxu0
    %2911 = vdwg.mxu0
    %v2912 = vmax.f32 %v2753, 0.0
    %v2913 = vmax.f32 %v2805, 0.0
    %v2914 = vmax.f32 %v2857, 0.0
    %v2915 = vmax.f32 %v2909, 0.0
    %v2916 = vpack.c.bf16 %v2912, %v2912
    %v2917 = vpack.c.bf16 %v2913, %v2913
    %v2918 = vpack.c.bf16 %v2914, %v2914
    %v2919 = vpack.c.bf16 %v2915, %v2915
    %v2920 = vld [vmem:[#allocation11] sm:$0xff]
    %v2921 = vld [vmem:[#allocation11 + $0x8] sm:$0xff]
    %v2922 = vld [vmem:[#allocation11 + $0x10] sm:$0xff]
    %v2923 = vld [vmem:[#allocation11 + $0x18] sm:$0xff]
    %v2924 = vld [vmem:[#allocation11 + $0x20] sm:$0xff]
    %v2925 = vld [vmem:[#allocation11 + $0x28] sm:$0xff]
    %v2926 = vld [vmem:[#allocation11 + $0x30] sm:$0xff]
    %v2927 = vld [vmem:[#allocation11 + $0x38] sm:$0xff]
    %v2928 = vld [vmem:[#allocation11 + $0x40] sm:$0xff]
    %v2929 = vld [vmem:[#allocation11 + $0x48] sm:$0xff]
    %v2930 = vld [vmem:[#allocation11 + $0x50] sm:$0xff]
    %v2931 = vld [vmem:[#allocation11 + $0x58] sm:$0xff]
    %v2932 = vld [vmem:[#allocation11 + $0x60] sm:$0xff]
    %v2933 = vld [vmem:[#allocation11 + $0x68] sm:$0xff]
    %v2934 = vld [vmem:[#allocation11 + $0x70] sm:$0xff]
    %v2935 = vld [vmem:[#allocation11 + $0x78] sm:$0xff]
    %v2936 = vld [vmem:[#allocation11 + $0x80] sm:$0xff]
    %v2937 = vld [vmem:[#allocation11 + $0x88] sm:$0xff]
    %v2938 = vld [vmem:[#allocation11 + $0x90] sm:$0xff]
    %v2939 = vld [vmem:[#allocation11 + $0x98] sm:$0xff]
    %v2940 = vld [vmem:[#allocation11 + $0xa0] sm:$0xff]
    %v2941 = vld [vmem:[#allocation11 + $0xa8] sm:$0xff]
    %v2942 = vld [vmem:[#allocation11 + $0xb0] sm:$0xff]
    %v2943 = vld [vmem:[#allocation11 + $0xb8] sm:$0xff]
    %v2944 = vld [vmem:[#allocation11 + $0xc0] sm:$0xff]
    %v2945 = vld [vmem:[#allocation11 + $0xc8] sm:$0xff]
    %v2946 = vld [vmem:[#allocation11 + $0xd0] sm:$0xff]
    %v2947 = vld [vmem:[#allocation11 + $0xd8] sm:$0xff]
    %v2948 = vld [vmem:[#allocation11 + $0xe0] sm:$0xff]
    %v2949 = vld [vmem:[#allocation11 + $0xe8] sm:$0xff]
    %v2950 = vld [vmem:[#allocation11 + $0xf0] sm:$0xff]
    %v2951 = vld [vmem:[#allocation11 + $0xf8] sm:$0xff]
    %v2952 = vld [vmem:[#allocation11 + $0x100] sm:$0xff]
    %v2953 = vld [vmem:[#allocation11 + $0x108] sm:$0xff]
    %v2954 = vld [vmem:[#allocation11 + $0x110] sm:$0xff]
    %v2955 = vld [vmem:[#allocation11 + $0x118] sm:$0xff]
    %v2956 = vld [vmem:[#allocation11 + $0x120] sm:$0xff]
    %v2957 = vld [vmem:[#allocation11 + $0x128] sm:$0xff]
    %v2958 = vld [vmem:[#allocation11 + $0x130] sm:$0xff]
    %v2959 = vld [vmem:[#allocation11 + $0x138] sm:$0xff]
    %v2960 = vld [vmem:[#allocation11 + $0x140] sm:$0xff]
    %v2961 = vld [vmem:[#allocation11 + $0x148] sm:$0xff]
    %v2962 = vld [vmem:[#allocation11 + $0x150] sm:$0xff]
    %v2963 = vld [vmem:[#allocation11 + $0x158] sm:$0xff]
    %v2964 = vld [vmem:[#allocation11 + $0x160] sm:$0xff]
    %v2965 = vld [vmem:[#allocation11 + $0x168] sm:$0xff]
    %v2966 = vld [vmem:[#allocation11 + $0x170] sm:$0xff]
    %v2967 = vld [vmem:[#allocation11 + $0x178] sm:$0xff]
    %v2968 = vld [vmem:[#allocation11 + $0x180] sm:$0xff]
    %v2969 = vld [vmem:[#allocation11 + $0x188] sm:$0xff]
    %v2970 = vld [vmem:[#allocation11 + $0x190] sm:$0xff]
    %v2971 = vld [vmem:[#allocation11 + $0x198] sm:$0xff]
    %v2972 = vld [vmem:[#allocation11 + $0x1a0] sm:$0xff]
    %v2973 = vld [vmem:[#allocation11 + $0x1a8] sm:$0xff]
    %v2974 = vld [vmem:[#allocation11 + $0x1b0] sm:$0xff]
    %v2975 = vld [vmem:[#allocation11 + $0x1b8] sm:$0xff]
    %v2976 = vld [vmem:[#allocation11 + $0x1c0] sm:$0xff]
    %v2977 = vld [vmem:[#allocation11 + $0x1c8] sm:$0xff]
    %v2978 = vld [vmem:[#allocation11 + $0x1d0] sm:$0xff]
    %v2979 = vld [vmem:[#allocation11 + $0x1d8] sm:$0xff]
    %v2980 = vld [vmem:[#allocation11 + $0x1e0] sm:$0xff]
    %v2981 = vld [vmem:[#allocation11 + $0x1e8] sm:$0xff]
    %v2982 = vld [vmem:[#allocation11 + $0x1f0] sm:$0xff]
    %v2983 = vld [vmem:[#allocation11 + $0x1f8] sm:$0xff]
    %v2984 = vld [vmem:[#allocation11 + $0x200] sm:$0xff]
    %v2985 = vld [vmem:[#allocation11 + $0x208] sm:$0xff]
    %v2986 = vld [vmem:[#allocation11 + $0x210] sm:$0xff]
    %v2987 = vld [vmem:[#allocation11 + $0x218] sm:$0xff]
    %v2988 = vld [vmem:[#allocation11 + $0x220] sm:$0xff]
    %v2989 = vld [vmem:[#allocation11 + $0x228] sm:$0xff]
    %v2990 = vld [vmem:[#allocation11 + $0x230] sm:$0xff]
    %v2991 = vld [vmem:[#allocation11 + $0x238] sm:$0xff]
    %v2992 = vld [vmem:[#allocation11 + $0x240] sm:$0xff]
    %v2993 = vld [vmem:[#allocation11 + $0x248] sm:$0xff]
    %v2994 = vld [vmem:[#allocation11 + $0x250] sm:$0xff]
    %v2995 = vld [vmem:[#allocation11 + $0x258] sm:$0xff]
    %v2996 = vld [vmem:[#allocation11 + $0x260] sm:$0xff]
    %v2997 = vld [vmem:[#allocation11 + $0x268] sm:$0xff]
    %v2998 = vld [vmem:[#allocation11 + $0x270] sm:$0xff]
    %v2999 = vld [vmem:[#allocation11 + $0x278] sm:$0xff]
    %v3000 = vld [vmem:[#allocation11 + $0x280] sm:$0xff]
    %v3001 = vld [vmem:[#allocation11 + $0x288] sm:$0xff]
    %v3002 = vld [vmem:[#allocation11 + $0x290] sm:$0xff]
    %v3003 = vld [vmem:[#allocation11 + $0x298] sm:$0xff]
    %v3004 = vld [vmem:[#allocation11 + $0x2a0] sm:$0xff]
    %v3005 = vld [vmem:[#allocation11 + $0x2a8] sm:$0xff]
    %v3006 = vld [vmem:[#allocation11 + $0x2b0] sm:$0xff]
    %v3007 = vld [vmem:[#allocation11 + $0x2b8] sm:$0xff]
    %v3008 = vld [vmem:[#allocation11 + $0x2c0] sm:$0xff]
    %v3009 = vld [vmem:[#allocation11 + $0x2c8] sm:$0xff]
    %v3010 = vld [vmem:[#allocation11 + $0x2d0] sm:$0xff]
    %v3011 = vld [vmem:[#allocation11 + $0x2d8] sm:$0xff]
    %v3012 = vld [vmem:[#allocation11 + $0x2e0] sm:$0xff]
    %v3013 = vld [vmem:[#allocation11 + $0x2e8] sm:$0xff]
    %v3014 = vld [vmem:[#allocation11 + $0x2f0] sm:$0xff]
    %v3015 = vld [vmem:[#allocation11 + $0x2f8] sm:$0xff]
    %v3016 = vld [vmem:[#allocation11 + $0x300] sm:$0xff]
    %v3017 = vld [vmem:[#allocation11 + $0x308] sm:$0xff]
    %v3018 = vld [vmem:[#allocation11 + $0x310] sm:$0xff]
    %v3019 = vld [vmem:[#allocation11 + $0x318] sm:$0xff]
    %v3020 = vld [vmem:[#allocation11 + $0x320] sm:$0xff]
    %v3021 = vld [vmem:[#allocation11 + $0x328] sm:$0xff]
    %v3022 = vld [vmem:[#allocation11 + $0x330] sm:$0xff]
    %v3023 = vld [vmem:[#allocation11 + $0x338] sm:$0xff]
    %v3024 = vld [vmem:[#allocation11 + $0x340] sm:$0xff]
    %v3025 = vld [vmem:[#allocation11 + $0x348] sm:$0xff]
    %v3026 = vld [vmem:[#allocation11 + $0x350] sm:$0xff]
    %v3027 = vld [vmem:[#allocation11 + $0x358] sm:$0xff]
    %v3028 = vld [vmem:[#allocation11 + $0x360] sm:$0xff]
    %v3029 = vld [vmem:[#allocation11 + $0x368] sm:$0xff]
    %v3030 = vld [vmem:[#allocation11 + $0x370] sm:$0xff]
    %v3031 = vld [vmem:[#allocation11 + $0x378] sm:$0xff]
    %v3032 = vld [vmem:[#allocation11 + $0x380] sm:$0xff]
    %v3033 = vld [vmem:[#allocation11 + $0x388] sm:$0xff]
    %v3034 = vld [vmem:[#allocation11 + $0x390] sm:$0xff]
    %v3035 = vld [vmem:[#allocation11 + $0x398] sm:$0xff]
    %v3036 = vld [vmem:[#allocation11 + $0x3a0] sm:$0xff]
    %v3037 = vld [vmem:[#allocation11 + $0x3a8] sm:$0xff]
    %v3038 = vld [vmem:[#allocation11 + $0x3b0] sm:$0xff]
    %v3039 = vld [vmem:[#allocation11 + $0x3b8] sm:$0xff]
    %v3040 = vld [vmem:[#allocation11 + $0x3c0] sm:$0xff]
    %v3041 = vld [vmem:[#allocation11 + $0x3c8] sm:$0xff]
    %v3042 = vld [vmem:[#allocation11 + $0x3d0] sm:$0xff]
    %v3043 = vld [vmem:[#allocation11 + $0x3d8] sm:$0xff]
    %v3044 = vld [vmem:[#allocation11 + $0x3e0] sm:$0xff]
    %v3045 = vld [vmem:[#allocation11 + $0x3e8] sm:$0xff]
    %v3046 = vld [vmem:[#allocation11 + $0x3f0] sm:$0xff]
    %v3047 = vld [vmem:[#allocation11 + $0x3f8] sm:$0xff]
    %v3048 = vld [vmem:[%s6] sm:$0xf]
    %v3050 = vperm.slane %v3048, 0
    %v3051 = vperm.slane %v3048, 1
    %v3052 = vperm.slane %v3048, 2
    %v3053 = vperm.slane %v3048, 3
    %v3186 = vunpack.c.l.b16 %v2920
    %v3187 = vunpack.c.h.b16 %v2920
    %v3188 = vunpack.c.l.b16 %v2921
    %v3189 = vunpack.c.h.b16 %v2921
    %v3190 = vunpack.c.l.b16 %v2922
    %v3191 = vunpack.c.h.b16 %v2922
    %v3192 = vunpack.c.l.b16 %v2923
    %v3193 = vunpack.c.h.b16 %v2923
    %v3194 = vunpack.c.l.b16 %v2924
    %v3195 = vunpack.c.h.b16 %v2924
    %v3196 = vunpack.c.l.b16 %v2925
    %v3197 = vunpack.c.h.b16 %v2925
    %v3198 = vunpack.c.l.b16 %v2926
    %v3199 = vunpack.c.h.b16 %v2926
    %v3200 = vunpack.c.l.b16 %v2927
    %v3201 = vunpack.c.h.b16 %v2927
    %v3202 = vunpack.c.l.b16 %v2928
    %v3203 = vunpack.c.h.b16 %v2928
    %v3204 = vunpack.c.l.b16 %v2929
    %v3205 = vunpack.c.h.b16 %v2929
    %v3206 = vunpack.c.l.b16 %v2930
    %v3207 = vunpack.c.h.b16 %v2930
    %v3208 = vunpack.c.l.b16 %v2931
    %v3209 = vunpack.c.h.b16 %v2931
    %v3210 = vunpack.c.l.b16 %v2932
    %v3211 = vunpack.c.h.b16 %v2932
    %v3212 = vunpack.c.l.b16 %v2933
    %v3213 = vunpack.c.h.b16 %v2933
    %v3214 = vunpack.c.l.b16 %v2934
    %v3215 = vunpack.c.h.b16 %v2934
    %v3216 = vunpack.c.l.b16 %v2935
    %v3217 = vunpack.c.h.b16 %v2935
    %v3218 = vunpack.c.l.b16 %v2936
    %v3219 = vunpack.c.h.b16 %v2936
    %v3220 = vunpack.c.l.b16 %v2937
    %v3221 = vunpack.c.h.b16 %v2937
    %v3222 = vunpack.c.l.b16 %v2938
    %v3223 = vunpack.c.h.b16 %v2938
    %v3224 = vunpack.c.l.b16 %v2939
    %v3225 = vunpack.c.h.b16 %v2939
    %v3226 = vunpack.c.l.b16 %v2940
    %v3227 = vunpack.c.h.b16 %v2940
    %v3228 = vunpack.c.l.b16 %v2941
    %v3229 = vunpack.c.h.b16 %v2941
    %v3230 = vunpack.c.l.b16 %v2942
    %v3231 = vunpack.c.h.b16 %v2942
    %v3232 = vunpack.c.l.b16 %v2943
    %v3233 = vunpack.c.h.b16 %v2943
    %v3234 = vunpack.c.l.b16 %v2944
    %v3235 = vunpack.c.h.b16 %v2944
    %v3236 = vunpack.c.l.b16 %v2945
    %v3237 = vunpack.c.h.b16 %v2945
    %v3238 = vunpack.c.l.b16 %v2946
    %v3239 = vunpack.c.h.b16 %v2946
    %v3240 = vunpack.c.l.b16 %v2947
    %v3241 = vunpack.c.h.b16 %v2947
    %v3242 = vunpack.c.l.b16 %v2948
    %v3243 = vunpack.c.h.b16 %v2948
    %v3244 = vunpack.c.l.b16 %v2949
    %v3245 = vunpack.c.h.b16 %v2949
    %v3246 = vunpack.c.l.b16 %v2950
    %v3247 = vunpack.c.h.b16 %v2950
    %v3248 = vunpack.c.l.b16 %v2951
    %v3249 = vunpack.c.h.b16 %v2951
    %v3250 = vunpack.c.l.b16 %v2952
    %v3251 = vunpack.c.h.b16 %v2952
    %v3252 = vunpack.c.l.b16 %v2953
    %v3253 = vunpack.c.h.b16 %v2953
    %v3254 = vunpack.c.l.b16 %v2954
    %v3255 = vunpack.c.h.b16 %v2954
    %v3256 = vunpack.c.l.b16 %v2955
    %v3257 = vunpack.c.h.b16 %v2955
    %v3258 = vunpack.c.l.b16 %v2956
    %v3259 = vunpack.c.h.b16 %v2956
    %v3260 = vunpack.c.l.b16 %v2957
    %v3261 = vunpack.c.h.b16 %v2957
    %v3262 = vunpack.c.l.b16 %v2958
    %v3263 = vunpack.c.h.b16 %v2958
    %v3264 = vunpack.c.l.b16 %v2959
    %v3265 = vunpack.c.h.b16 %v2959
    %v3266 = vunpack.c.l.b16 %v2960
    %v3267 = vunpack.c.h.b16 %v2960
    %v3268 = vunpack.c.l.b16 %v2961
    %v3269 = vunpack.c.h.b16 %v2961
    %v3270 = vunpack.c.l.b16 %v2962
    %v3271 = vunpack.c.h.b16 %v2962
    %v3272 = vunpack.c.l.b16 %v2963
    %v3273 = vunpack.c.h.b16 %v2963
    %v3274 = vunpack.c.l.b16 %v2964
    %v3275 = vunpack.c.h.b16 %v2964
    %v3276 = vunpack.c.l.b16 %v2965
    %v3277 = vunpack.c.h.b16 %v2965
    %v3278 = vunpack.c.l.b16 %v2966
    %v3279 = vunpack.c.h.b16 %v2966
    %v3280 = vunpack.c.l.b16 %v2967
    %v3281 = vunpack.c.h.b16 %v2967
    %v3282 = vunpack.c.l.b16 %v2968
    %v3283 = vunpack.c.h.b16 %v2968
    %v3284 = vunpack.c.l.b16 %v2969
    %v3285 = vunpack.c.h.b16 %v2969
    %v3286 = vunpack.c.l.b16 %v2970
    %v3287 = vunpack.c.h.b16 %v2970
    %v3288 = vunpack.c.l.b16 %v2971
    %v3289 = vunpack.c.h.b16 %v2971
    %v3290 = vunpack.c.l.b16 %v2972
    %v3291 = vunpack.c.h.b16 %v2972
    %v3292 = vunpack.c.l.b16 %v2973
    %v3293 = vunpack.c.h.b16 %v2973
    %v3294 = vunpack.c.l.b16 %v2974
    %v3295 = vunpack.c.h.b16 %v2974
    %v3296 = vunpack.c.l.b16 %v2975
    %v3297 = vunpack.c.h.b16 %v2975
    %v3298 = vunpack.c.l.b16 %v2976
    %v3299 = vunpack.c.h.b16 %v2976
    %v3300 = vunpack.c.l.b16 %v2977
    %v3301 = vunpack.c.h.b16 %v2977
    %v3302 = vunpack.c.l.b16 %v2978
    %v3303 = vunpack.c.h.b16 %v2978
    %v3304 = vunpack.c.l.b16 %v2979
    %v3305 = vunpack.c.h.b16 %v2979
    %v3306 = vunpack.c.l.b16 %v2980
    %v3307 = vunpack.c.h.b16 %v2980
    %v3308 = vunpack.c.l.b16 %v2981
    %v3309 = vunpack.c.h.b16 %v2981
    %v3310 = vunpack.c.l.b16 %v2982
    %v3311 = vunpack.c.h.b16 %v2982
    %v3312 = vunpack.c.l.b16 %v2983
    %v3313 = vunpack.c.h.b16 %v2983
    %v3314 = vunpack.c.l.b16 %v2984
    %v3315 = vunpack.c.h.b16 %v2984
    %v3316 = vunpack.c.l.b16 %v2985
    %v3317 = vunpack.c.h.b16 %v2985
    %v3318 = vunpack.c.l.b16 %v2986
    %v3319 = vunpack.c.h.b16 %v2986
    %v3320 = vunpack.c.l.b16 %v2987
    %v3321 = vunpack.c.h.b16 %v2987
    %v3322 = vunpack.c.l.b16 %v2988
    %v3323 = vunpack.c.h.b16 %v2988
    %v3324 = vunpack.c.l.b16 %v2989
    %v3325 = vunpack.c.h.b16 %v2989
    %v3326 = vunpack.c.l.b16 %v2990
    %v3327 = vunpack.c.h.b16 %v2990
    %v3328 = vunpack.c.l.b16 %v2991
    %v3329 = vunpack.c.h.b16 %v2991
    %v3330 = vunpack.c.l.b16 %v2992
    %v3331 = vunpack.c.h.b16 %v2992
    %v3332 = vunpack.c.l.b16 %v2993
    %v3333 = vunpack.c.h.b16 %v2993
    %v3334 = vunpack.c.l.b16 %v2994
    %v3335 = vunpack.c.h.b16 %v2994
    %v3336 = vunpack.c.l.b16 %v2995
    %v3337 = vunpack.c.h.b16 %v2995
    %v3338 = vunpack.c.l.b16 %v2996
    %v3339 = vunpack.c.h.b16 %v2996
    %v3340 = vunpack.c.l.b16 %v2997
    %v3341 = vunpack.c.h.b16 %v2997
    %v3342 = vunpack.c.l.b16 %v2998
    %v3343 = vunpack.c.h.b16 %v2998
    %v3344 = vunpack.c.l.b16 %v2999
    %v3345 = vunpack.c.h.b16 %v2999
    %v3346 = vunpack.c.l.b16 %v3000
    %v3347 = vunpack.c.h.b16 %v3000
    %v3348 = vunpack.c.l.b16 %v3001
    %v3349 = vunpack.c.h.b16 %v3001
    %v3350 = vunpack.c.l.b16 %v3002
    %v3351 = vunpack.c.h.b16 %v3002
    %v3352 = vunpack.c.l.b16 %v3003
    %v3353 = vunpack.c.h.b16 %v3003
    %v3354 = vunpack.c.l.b16 %v3004
    %v3355 = vunpack.c.h.b16 %v3004
    %v3356 = vunpack.c.l.b16 %v3005
    %v3357 = vunpack.c.h.b16 %v3005
    %v3358 = vunpack.c.l.b16 %v3006
    %v3359 = vunpack.c.h.b16 %v3006
    %v3360 = vunpack.c.l.b16 %v3007
    %v3361 = vunpack.c.h.b16 %v3007
    %v3362 = vunpack.c.l.b16 %v3008
    %v3363 = vunpack.c.h.b16 %v3008
    %v3364 = vunpack.c.l.b16 %v3009
    %v3365 = vunpack.c.h.b16 %v3009
    %v3366 = vunpack.c.l.b16 %v3010
    %v3367 = vunpack.c.h.b16 %v3010
    %v3368 = vunpack.c.l.b16 %v3011
    %v3369 = vunpack.c.h.b16 %v3011
    %v3370 = vunpack.c.l.b16 %v3012
    %v3371 = vunpack.c.h.b16 %v3012
    %v3372 = vunpack.c.l.b16 %v3013
    %v3373 = vunpack.c.h.b16 %v3013
    %v3374 = vunpack.c.l.b16 %v3014
    %v3375 = vunpack.c.h.b16 %v3014
    %v3376 = vunpack.c.l.b16 %v3015
    %v3377 = vunpack.c.h.b16 %v3015
    %v3378 = vunpack.c.l.b16 %v3016
    %v3379 = vunpack.c.h.b16 %v3016
    %v3380 = vunpack.c.l.b16 %v3017
    %v3381 = vunpack.c.h.b16 %v3017
    %v3382 = vunpack.c.l.b16 %v3018
    %v3383 = vunpack.c.h.b16 %v3018
    %v3384 = vunpack.c.l.b16 %v3019
    %v3385 = vunpack.c.h.b16 %v3019
    %v3386 = vunpack.c.l.b16 %v3020
    %v3387 = vunpack.c.h.b16 %v3020
    %v3388 = vunpack.c.l.b16 %v3021
    %v3389 = vunpack.c.h.b16 %v3021
    %v3390 = vunpack.c.l.b16 %v3022
    %v3391 = vunpack.c.h.b16 %v3022
    %v3392 = vunpack.c.l.b16 %v3023
    %v3393 = vunpack.c.h.b16 %v3023
    %v3394 = vunpack.c.l.b16 %v3024
    %v3395 = vunpack.c.h.b16 %v3024
    %v3396 = vunpack.c.l.b16 %v3025
    %v3397 = vunpack.c.h.b16 %v3025
    %v3398 = vunpack.c.l.b16 %v3026
    %v3399 = vunpack.c.h.b16 %v3026
    %v3400 = vunpack.c.l.b16 %v3027
    %v3401 = vunpack.c.h.b16 %v3027
    %v3402 = vunpack.c.l.b16 %v3028
    %v3403 = vunpack.c.h.b16 %v3028
    %v3404 = vunpack.c.l.b16 %v3029
    %v3405 = vunpack.c.h.b16 %v3029
    %v3406 = vunpack.c.l.b16 %v3030
    %v3407 = vunpack.c.h.b16 %v3030
    %v3408 = vunpack.c.l.b16 %v3031
    %v3409 = vunpack.c.h.b16 %v3031
    %v3410 = vunpack.c.l.b16 %v3032
    %v3411 = vunpack.c.h.b16 %v3032
    %v3412 = vunpack.c.l.b16 %v3033
    %v3413 = vunpack.c.h.b16 %v3033
    %v3414 = vunpack.c.l.b16 %v3034
    %v3415 = vunpack.c.h.b16 %v3034
    %v3416 = vunpack.c.l.b16 %v3035
    %v3417 = vunpack.c.h.b16 %v3035
    %v3418 = vunpack.c.l.b16 %v3036
    %v3419 = vunpack.c.h.b16 %v3036
    %v3420 = vunpack.c.l.b16 %v3037
    %v3421 = vunpack.c.h.b16 %v3037
    %v3422 = vunpack.c.l.b16 %v3038
    %v3423 = vunpack.c.h.b16 %v3038
    %v3424 = vunpack.c.l.b16 %v3039
    %v3425 = vunpack.c.h.b16 %v3039
    %v3426 = vunpack.c.l.b16 %v3040
    %v3427 = vunpack.c.h.b16 %v3040
    %v3428 = vunpack.c.l.b16 %v3041
    %v3429 = vunpack.c.h.b16 %v3041
    %v3430 = vunpack.c.l.b16 %v3042
    %v3431 = vunpack.c.h.b16 %v3042
    %v3432 = vunpack.c.l.b16 %v3043
    %v3433 = vunpack.c.h.b16 %v3043
    %v3434 = vunpack.c.l.b16 %v3044
    %v3435 = vunpack.c.h.b16 %v3044
    %v3436 = vunpack.c.l.b16 %v3045
    %v3437 = vunpack.c.h.b16 %v3045
    %v3438 = vunpack.c.l.b16 %v3046
    %v3439 = vunpack.c.h.b16 %v3046
    %v3440 = vunpack.c.l.b16 %v3047
    %v3441 = vunpack.c.h.b16 %v3047
    %v3442 = vpack.c.b16 %v3190, %v3186
    %v3443 = vpack.c.b16 %v3191, %v3187
    %v3444 = vpack.c.b16 %v3192, %v3188
    %v3445 = vpack.c.b16 %v3193, %v3189
    %v3446 = vpack.c.b16 %v3198, %v3194
    %v3447 = vpack.c.b16 %v3199, %v3195
    %v3448 = vpack.c.b16 %v3200, %v3196
    %v3449 = vpack.c.b16 %v3201, %v3197
    %v3450 = vpack.c.b16 %v3206, %v3202
    %v3451 = vpack.c.b16 %v3207, %v3203
    %v3452 = vpack.c.b16 %v3208, %v3204
    %v3453 = vpack.c.b16 %v3209, %v3205
    %v3454 = vpack.c.b16 %v3214, %v3210
    %v3455 = vpack.c.b16 %v3215, %v3211
    %v3456 = vpack.c.b16 %v3216, %v3212
    %v3457 = vpack.c.b16 %v3217, %v3213
    %v3458 = vpack.c.b16 %v3222, %v3218
    %v3459 = vpack.c.b16 %v3223, %v3219
    %v3460 = vpack.c.b16 %v3224, %v3220
    %v3461 = vpack.c.b16 %v3225, %v3221
    %v3462 = vpack.c.b16 %v3230, %v3226
    %v3463 = vpack.c.b16 %v3231, %v3227
    %v3464 = vpack.c.b16 %v3232, %v3228
    %v3465 = vpack.c.b16 %v3233, %v3229
    %v3466 = vpack.c.b16 %v3238, %v3234
    %v3467 = vpack.c.b16 %v3239, %v3235
    %v3468 = vpack.c.b16 %v3240, %v3236
    %v3469 = vpack.c.b16 %v3241, %v3237
    %v3470 = vpack.c.b16 %v3246, %v3242
    %v3471 = vpack.c.b16 %v3247, %v3243
    %v3472 = vpack.c.b16 %v3248, %v3244
    %v3473 = vpack.c.b16 %v3249, %v3245
    %v3474 = vpack.c.b16 %v3254, %v3250
    %v3475 = vpack.c.b16 %v3255, %v3251
    %v3476 = vpack.c.b16 %v3256, %v3252
    %v3477 = vpack.c.b16 %v3257, %v3253
    %v3478 = vpack.c.b16 %v3262, %v3258
    %v3479 = vpack.c.b16 %v3263, %v3259
    %v3480 = vpack.c.b16 %v3264, %v3260
    %v3481 = vpack.c.b16 %v3265, %v3261
    %v3482 = vpack.c.b16 %v3270, %v3266
    %v3483 = vpack.c.b16 %v3271, %v3267
    %v3484 = vpack.c.b16 %v3272, %v3268
    %v3485 = vpack.c.b16 %v3273, %v3269
    %v3486 = vpack.c.b16 %v3278, %v3274
    %v3487 = vpack.c.b16 %v3279, %v3275
    %v3488 = vpack.c.b16 %v3280, %v3276
    %v3489 = vpack.c.b16 %v3281, %v3277
    %v3490 = vpack.c.b16 %v3286, %v3282
    %v3491 = vpack.c.b16 %v3287, %v3283
    %v3492 = vpack.c.b16 %v3288, %v3284
    %v3493 = vpack.c.b16 %v3289, %v3285
    %v3494 = vpack.c.b16 %v3294, %v3290
    %v3495 = vpack.c.b16 %v3295, %v3291
    %v3496 = vpack.c.b16 %v3296, %v3292
    %v3497 = vpack.c.b16 %v3297, %v3293
    %v3498 = vpack.c.b16 %v3302, %v3298
    %v3499 = vpack.c.b16 %v3303, %v3299
    %v3500 = vpack.c.b16 %v3304, %v3300
    %v3501 = vpack.c.b16 %v3305, %v3301
    %v3502 = vpack.c.b16 %v3310, %v3306
    %v3503 = vpack.c.b16 %v3311, %v3307
    %v3504 = vpack.c.b16 %v3312, %v3308
    %v3505 = vpack.c.b16 %v3313, %v3309
    %v3506 = vpack.c.b16 %v3318, %v3314
    %v3507 = vpack.c.b16 %v3319, %v3315
    %v3508 = vpack.c.b16 %v3320, %v3316
    %v3509 = vpack.c.b16 %v3321, %v3317
    %v3510 = vpack.c.b16 %v3326, %v3322
    %v3511 = vpack.c.b16 %v3327, %v3323
    %v3512 = vpack.c.b16 %v3328, %v3324
    %v3513 = vpack.c.b16 %v3329, %v3325
    %v3514 = vpack.c.b16 %v3334, %v3330
    %v3515 = vpack.c.b16 %v3335, %v3331
    %v3516 = vpack.c.b16 %v3336, %v3332
    %v3517 = vpack.c.b16 %v3337, %v3333
    %v3518 = vpack.c.b16 %v3342, %v3338
    %v3519 = vpack.c.b16 %v3343, %v3339
    %v3520 = vpack.c.b16 %v3344, %v3340
    %v3521 = vpack.c.b16 %v3345, %v3341
    %v3522 = vpack.c.b16 %v3350, %v3346
    %v3523 = vpack.c.b16 %v3351, %v3347
    %v3524 = vpack.c.b16 %v3352, %v3348
    %v3525 = vpack.c.b16 %v3353, %v3349
    %v3526 = vpack.c.b16 %v3358, %v3354
    %v3527 = vpack.c.b16 %v3359, %v3355
    %v3528 = vpack.c.b16 %v3360, %v3356
    %v3529 = vpack.c.b16 %v3361, %v3357
    %v3530 = vpack.c.b16 %v3366, %v3362
    %v3531 = vpack.c.b16 %v3367, %v3363
    %v3532 = vpack.c.b16 %v3368, %v3364
    %v3533 = vpack.c.b16 %v3369, %v3365
    %v3534 = vpack.c.b16 %v3374, %v3370
    %v3535 = vpack.c.b16 %v3375, %v3371
    %v3536 = vpack.c.b16 %v3376, %v3372
    %v3537 = vpack.c.b16 %v3377, %v3373
    %v3538 = vpack.c.b16 %v3382, %v3378
    %v3539 = vpack.c.b16 %v3383, %v3379
    %v3540 = vpack.c.b16 %v3384, %v3380
    %v3541 = vpack.c.b16 %v3385, %v3381
    %v3542 = vpack.c.b16 %v3390, %v3386
    %v3543 = vpack.c.b16 %v3391, %v3387
    %v3544 = vpack.c.b16 %v3392, %v3388
    %v3545 = vpack.c.b16 %v3393, %v3389
    %v3546 = vpack.c.b16 %v3398, %v3394
    %v3547 = vpack.c.b16 %v3399, %v3395
    %v3548 = vpack.c.b16 %v3400, %v3396
    %v3549 = vpack.c.b16 %v3401, %v3397
    %v3550 = vpack.c.b16 %v3406, %v3402
    %v3551 = vpack.c.b16 %v3407, %v3403
    %v3552 = vpack.c.b16 %v3408, %v3404
    %v3553 = vpack.c.b16 %v3409, %v3405
    %v3554 = vpack.c.b16 %v3414, %v3410
    %v3555 = vpack.c.b16 %v3415, %v3411
    %v3556 = vpack.c.b16 %v3416, %v3412
    %v3557 = vpack.c.b16 %v3417, %v3413
    %v3558 = vpack.c.b16 %v3422, %v3418
    %v3559 = vpack.c.b16 %v3423, %v3419
    %v3560 = vpack.c.b16 %v3424, %v3420
    %v3561 = vpack.c.b16 %v3425, %v3421
    %v3562 = vpack.c.b16 %v3430, %v3426
    %v3563 = vpack.c.b16 %v3431, %v3427
    %v3564 = vpack.c.b16 %v3432, %v3428
    %v3565 = vpack.c.b16 %v3433, %v3429
    %v3566 = vpack.c.b16 %v3438, %v3434
    %v3567 = vpack.c.b16 %v3439, %v3435
    %v3568 = vpack.c.b16 %v3440, %v3436
    %v3569 = vpack.c.b16 %v3441, %v3437
    %3698 = vmatpush.bf16.msra.mxu0 %v3470
    %3699 = vmatpush.bf16.msra.mxu0 %v3466
    %3700 = vmatpush.bf16.msra.mxu0 %v3462
    %3701 = vmatpush.bf16.msra.mxu0 %v3458
    %3702 = vmatpush.bf16.msra.mxu0 %v3454
    %3703 = vmatpush.bf16.msra.mxu0 %v3450
    %3704 = vmatpush.bf16.msra.mxu0 %v3446
    %3705 = vmatpush.bf16.msra.mxu0 %v3442
    %3706 = vmatmul.bf16.gmra.mxu0 %v2916
    %v3707 = vpop.f32.mrf.mxu0
    %v3708 = vadd.f32 %v3050, %v3707
    %v3709 = vpop.f32.mrf.mxu0
    %3710 = vdwg.mxu0
    %3711 = vmatpush.bf16.msra.mxu0 %v3502
    %3712 = vmatpush.bf16.msra.mxu0 %v3498
    %3713 = vmatpush.bf16.msra.mxu0 %v3494
    %3714 = vmatpush.bf16.msra.mxu0 %v3490
    %3715 = vmatpush.bf16.msra.mxu0 %v3486
    %3716 = vmatpush.bf16.msra.mxu0 %v3482
    %3717 = vmatpush.bf16.msra.mxu0 %v3478
    %3718 = vmatpush.bf16.msra.mxu0 %v3474
    %3719 = vmatmul.bf16.gmra.mxu0 %v2917
    %v3720 = vpop.f32.mrf.mxu0
    %v3721 = vadd.f32 %v3708, %v3720
    %v3722 = vpop.f32.mrf.mxu0
    %3723 = vdwg.mxu0
    %3724 = vmatpush.bf16.msra.mxu0 %v3534
    %3725 = vmatpush.bf16.msra.mxu0 %v3530
    %3726 = vmatpush.bf16.msra.mxu0 %v3526
    %3727 = vmatpush.bf16.msra.mxu0 %v3522
    %3728 = vmatpush.bf16.msra.mxu0 %v3518
    %3729 = vmatpush.bf16.msra.mxu0 %v3514
    %3730 = vmatpush.bf16.msra.mxu0 %v3510
    %3731 = vmatpush.bf16.msra.mxu0 %v3506
    %3732 = vmatmul.bf16.gmra.mxu0 %v2918
    %v3733 = vpop.f32.mrf.mxu0
    %v3734 = vadd.f32 %v3721, %v3733
    %v3735 = vpop.f32.mrf.mxu0
    %3736 = vdwg.mxu0
    %3737 = vmatpush.bf16.msra.mxu0 %v3566
    %3738 = vmatpush.bf16.msra.mxu0 %v3562
    %3739 = vmatpush.bf16.msra.mxu0 %v3558
    %3740 = vmatpush.bf16.msra.mxu0 %v3554
    %3741 = vmatpush.bf16.msra.mxu0 %v3550
    %3742 = vmatpush.bf16.msra.mxu0 %v3546
    %3743 = vmatpush.bf16.msra.mxu0 %v3542
    %3744 = vmatpush.bf16.msra.mxu0 %v3538
    %3745 = vmatmul.bf16.gmra.mxu0 %v2919
    %v3746 = vpop.f32.mrf.mxu0
    %v3747 = vadd.f32 %v3734, %v3746
    %v3748 = vpop.f32.mrf.mxu0
    %3749 = vdwg.mxu0
    %3750 = vmatpush.bf16.msra.mxu0 %v3471
    %3751 = vmatpush.bf16.msra.mxu0 %v3467
    %3752 = vmatpush.bf16.msra.mxu0 %v3463
    %3753 = vmatpush.bf16.msra.mxu0 %v3459
    %3754 = vmatpush.bf16.msra.mxu0 %v3455
    %3755 = vmatpush.bf16.msra.mxu0 %v3451
    %3756 = vmatpush.bf16.msra.mxu0 %v3447
    %3757 = vmatpush.bf16.msra.mxu0 %v3443
    %3758 = vmatmul.bf16.gmra.mxu0 %v2916
    %v3759 = vpop.f32.mrf.mxu0
    %v3760 = vadd.f32 %v3051, %v3759
    %v3761 = vpop.f32.mrf.mxu0
    %3762 = vdwg.mxu0
    %3763 = vmatpush.bf16.msra.mxu0 %v3503
    %3764 = vmatpush.bf16.msra.mxu0 %v3499
    %3765 = vmatpush.bf16.msra.mxu0 %v3495
    %3766 = vmatpush.bf16.msra.mxu0 %v3491
    %3767 = vmatpush.bf16.msra.mxu0 %v3487
    %3768 = vmatpush.bf16.msra.mxu0 %v3483
    %3769 = vmatpush.bf16.msra.mxu0 %v3479
    %3770 = vmatpush.bf16.msra.mxu0 %v3475
    %3771 = vmatmul.bf16.gmra.mxu0 %v2917
    %v3772 = vpop.f32.mrf.mxu0
    %v3773 = vadd.f32 %v3760, %v3772
    %v3774 = vpop.f32.mrf.mxu0
    %3775 = vdwg.mxu0
    %3776 = vmatpush.bf16.msra.mxu0 %v3535
    %3777 = vmatpush.bf16.msra.mxu0 %v3531
    %3778 = vmatpush.bf16.msra.mxu0 %v3527
    %3779 = vmatpush.bf16.msra.mxu0 %v3523
    %3780 = vmatpush.bf16.msra.mxu0 %v3519
    %3781 = vmatpush.bf16.msra.mxu0 %v3515
    %3782 = vmatpush.bf16.msra.mxu0 %v3511
    %3783 = vmatpush.bf16.msra.mxu0 %v3507
    %3784 = vmatmul.bf16.gmra.mxu0 %v2918
    %v3785 = vpop.f32.mrf.mxu0
    %v3786 = vadd.f32 %v3773, %v3785
    %v3787 = vpop.f32.mrf.mxu0
    %3788 = vdwg.mxu0
    %3789 = vmatpush.bf16.msra.mxu0 %v3567
    %3790 = vmatpush.bf16.msra.mxu0 %v3563
    %3791 = vmatpush.bf16.msra.mxu0 %v3559
    %3792 = vmatpush.bf16.msra.mxu0 %v3555
    %3793 = vmatpush.bf16.msra.mxu0 %v3551
    %3794 = vmatpush.bf16.msra.mxu0 %v3547
    %3795 = vmatpush.bf16.msra.mxu0 %v3543
    %3796 = vmatpush.bf16.msra.mxu0 %v3539
    %3797 = vmatmul.bf16.gmra.mxu0 %v2919
    %v3798 = vpop.f32.mrf.mxu0
    %v3799 = vadd.f32 %v3786, %v3798
    %v3800 = vpop.f32.mrf.mxu0
    %3801 = vdwg.mxu0
    %3802 = vmatpush.bf16.msra.mxu0 %v3472
    %3803 = vmatpush.bf16.msra.mxu0 %v3468
    %3804 = vmatpush.bf16.msra.mxu0 %v3464
    %3805 = vmatpush.bf16.msra.mxu0 %v3460
    %3806 = vmatpush.bf16.msra.mxu0 %v3456
    %3807 = vmatpush.bf16.msra.mxu0 %v3452
    %3808 = vmatpush.bf16.msra.mxu0 %v3448
    %3809 = vmatpush.bf16.msra.mxu0 %v3444
    %3810 = vmatmul.bf16.gmra.mxu0 %v2916
    %v3811 = vpop.f32.mrf.mxu0
    %v3812 = vadd.f32 %v3052, %v3811
    %v3813 = vpop.f32.mrf.mxu0
    %3814 = vdwg.mxu0
    %3815 = vmatpush.bf16.msra.mxu0 %v3504
    %3816 = vmatpush.bf16.msra.mxu0 %v3500
    %3817 = vmatpush.bf16.msra.mxu0 %v3496
    %3818 = vmatpush.bf16.msra.mxu0 %v3492
    %3819 = vmatpush.bf16.msra.mxu0 %v3488
    %3820 = vmatpush.bf16.msra.mxu0 %v3484
    %3821 = vmatpush.bf16.msra.mxu0 %v3480
    %3822 = vmatpush.bf16.msra.mxu0 %v3476
    %3823 = vmatmul.bf16.gmra.mxu0 %v2917
    %v3824 = vpop.f32.mrf.mxu0
    %v3825 = vadd.f32 %v3812, %v3824
    %v3826 = vpop.f32.mrf.mxu0
    %3827 = vdwg.mxu0
    %3828 = vmatpush.bf16.msra.mxu0 %v3536
    %3829 = vmatpush.bf16.msra.mxu0 %v3532
    %3830 = vmatpush.bf16.msra.mxu0 %v3528
    %3831 = vmatpush.bf16.msra.mxu0 %v3524
    %3832 = vmatpush.bf16.msra.mxu0 %v3520
    %3833 = vmatpush.bf16.msra.mxu0 %v3516
    %3834 = vmatpush.bf16.msra.mxu0 %v3512
    %3835 = vmatpush.bf16.msra.mxu0 %v3508
    %3836 = vmatmul.bf16.gmra.mxu0 %v2918
    %v3837 = vpop.f32.mrf.mxu0
    %v3838 = vadd.f32 %v3825, %v3837
    %v3839 = vpop.f32.mrf.mxu0
    %3840 = vdwg.mxu0
    %3841 = vmatpush.bf16.msra.mxu0 %v3568
    %3842 = vmatpush.bf16.msra.mxu0 %v3564
    %3843 = vmatpush.bf16.msra.mxu0 %v3560
    %3844 = vmatpush.bf16.msra.mxu0 %v3556
    %3845 = vmatpush.bf16.msra.mxu0 %v3552
    %3846 = vmatpush.bf16.msra.mxu0 %v3548
    %3847 = vmatpush.bf16.msra.mxu0 %v3544
    %3848 = vmatpush.bf16.msra.mxu0 %v3540
    %3849 = vmatmul.bf16.gmra.mxu0 %v2919
    %v3850 = vpop.f32.mrf.mxu0
    %v3851 = vadd.f32 %v3838, %v3850
    %v3852 = vpop.f32.mrf.mxu0
    %3853 = vdwg.mxu0
    %3854 = vmatpush.bf16.msra.mxu0 %v3473
    %3855 = vmatpush.bf16.msra.mxu0 %v3469
    %3856 = vmatpush.bf16.msra.mxu0 %v3465
    %3857 = vmatpush.bf16.msra.mxu0 %v3461
    %3858 = vmatpush.bf16.msra.mxu0 %v3457
    %3859 = vmatpush.bf16.msra.mxu0 %v3453
    %3860 = vmatpush.bf16.msra.mxu0 %v3449
    %3861 = vmatpush.bf16.msra.mxu0 %v3445
    %3862 = vmatmul.bf16.gmra.mxu0 %v2916
    %v3863 = vpop.f32.mrf.mxu0
    %v3864 = vadd.f32 %v3053, %v3863
    %v3865 = vpop.f32.mrf.mxu0
    %3866 = vdwg.mxu0
    %3867 = vmatpush.bf16.msra.mxu0 %v3505
    %3868 = vmatpush.bf16.msra.mxu0 %v3501
    %3869 = vmatpush.bf16.msra.mxu0 %v3497
    %3870 = vmatpush.bf16.msra.mxu0 %v3493
    %3871 = vmatpush.bf16.msra.mxu0 %v3489
    %3872 = vmatpush.bf16.msra.mxu0 %v3485
    %3873 = vmatpush.bf16.msra.mxu0 %v3481
    %3874 = vmatpush.bf16.msra.mxu0 %v3477
    %3875 = vmatmul.bf16.gmra.mxu0 %v2917
    %v3876 = vpop.f32.mrf.mxu0
    %v3877 = vadd.f32 %v3864, %v3876
    %v3878 = vpop.f32.mrf.mxu0
    %3879 = vdwg.mxu0
    %3880 = vmatpush.bf16.msra.mxu0 %v3537
    %3881 = vmatpush.bf16.msra.mxu0 %v3533
    %3882 = vmatpush.bf16.msra.mxu0 %v3529
    %3883 = vmatpush.bf16.msra.mxu0 %v3525
    %3884 = vmatpush.bf16.msra.mxu0 %v3521
    %3885 = vmatpush.bf16.msra.mxu0 %v3517
    %3886 = vmatpush.bf16.msra.mxu0 %v3513
    %3887 = vmatpush.bf16.msra.mxu0 %v3509
    %3888 = vmatmul.bf16.gmra.mxu0 %v2918
    %v3889 = vpop.f32.mrf.mxu0
    %v3890 = vadd.f32 %v3877, %v3889
    %v3891 = vpop.f32.mrf.mxu0
    %3892 = vdwg.mxu0
    %3893 = vmatpush.bf16.msra.mxu0 %v3569
    %3894 = vmatpush.bf16.msra.mxu0 %v3565
    %3895 = vmatpush.bf16.msra.mxu0 %v3561
    %3896 = vmatpush.bf16.msra.mxu0 %v3557
    %3897 = vmatpush.bf16.msra.mxu0 %v3553
    %3898 = vmatpush.bf16.msra.mxu0 %v3549
    %3899 = vmatpush.bf16.msra.mxu0 %v3545
    %3900 = vmatpush.bf16.msra.mxu0 %v3541
    %3901 = vmatmul.bf16.gmra.mxu0 %v2919
    %v3902 = vpop.f32.mrf.mxu0
    %v3903 = vadd.f32 %v3890, %v3902
    %v3904 = vpop.f32.mrf.mxu0
    %3905 = vdwg.mxu0
    %v3906 = vmax.f32 %v3747, 0.0
    %v3907 = vmax.f32 %v3799, 0.0
    %v3908 = vmax.f32 %v3851, 0.0
    %v3909 = vmax.f32 %v3903, 0.0
    %v3910 = vpack.c.bf16 %v3906, %v3906
    %v3911 = vpack.c.bf16 %v3907, %v3907
    %v3912 = vpack.c.bf16 %v3908, %v3908
    %v3913 = vpack.c.bf16 %v3909, %v3909
    %v3914 = vld [vmem:[#allocation13] sm:$0xff]
    %v3915 = vld [vmem:[#allocation13 + $0x8] sm:$0xff]
    %v3916 = vld [vmem:[#allocation13 + $0x10] sm:$0xff]
    %v3917 = vld [vmem:[#allocation13 + $0x18] sm:$0xff]
    %v3918 = vld [vmem:[#allocation13 + $0x20] sm:$0xff]
    %v3919 = vld [vmem:[#allocation13 + $0x28] sm:$0xff]
    %v3920 = vld [vmem:[#allocation13 + $0x30] sm:$0xff]
    %v3921 = vld [vmem:[#allocation13 + $0x38] sm:$0xff]
    %v3922 = vld [vmem:[#allocation13 + $0x40] sm:$0xff]
    %v3923 = vld [vmem:[#allocation13 + $0x48] sm:$0xff]
    %v3924 = vld [vmem:[#allocation13 + $0x50] sm:$0xff]
    %v3925 = vld [vmem:[#allocation13 + $0x58] sm:$0xff]
    %v3926 = vld [vmem:[#allocation13 + $0x60] sm:$0xff]
    %v3927 = vld [vmem:[#allocation13 + $0x68] sm:$0xff]
    %v3928 = vld [vmem:[#allocation13 + $0x70] sm:$0xff]
    %v3929 = vld [vmem:[#allocation13 + $0x78] sm:$0xff]
    %v3930 = vld [vmem:[#allocation13 + $0x80] sm:$0xff]
    %v3931 = vld [vmem:[#allocation13 + $0x88] sm:$0xff]
    %v3932 = vld [vmem:[#allocation13 + $0x90] sm:$0xff]
    %v3933 = vld [vmem:[#allocation13 + $0x98] sm:$0xff]
    %v3934 = vld [vmem:[#allocation13 + $0xa0] sm:$0xff]
    %v3935 = vld [vmem:[#allocation13 + $0xa8] sm:$0xff]
    %v3936 = vld [vmem:[#allocation13 + $0xb0] sm:$0xff]
    %v3937 = vld [vmem:[#allocation13 + $0xb8] sm:$0xff]
    %v3938 = vld [vmem:[#allocation13 + $0xc0] sm:$0xff]
    %v3939 = vld [vmem:[#allocation13 + $0xc8] sm:$0xff]
    %v3940 = vld [vmem:[#allocation13 + $0xd0] sm:$0xff]
    %v3941 = vld [vmem:[#allocation13 + $0xd8] sm:$0xff]
    %v3942 = vld [vmem:[#allocation13 + $0xe0] sm:$0xff]
    %v3943 = vld [vmem:[#allocation13 + $0xe8] sm:$0xff]
    %v3944 = vld [vmem:[#allocation13 + $0xf0] sm:$0xff]
    %v3945 = vld [vmem:[#allocation13 + $0xf8] sm:$0xff]
    %v3946 = vld [vmem:[#allocation13 + $0x100] sm:$0xff]
    %v3947 = vld [vmem:[#allocation13 + $0x108] sm:$0xff]
    %v3948 = vld [vmem:[#allocation13 + $0x110] sm:$0xff]
    %v3949 = vld [vmem:[#allocation13 + $0x118] sm:$0xff]
    %v3950 = vld [vmem:[#allocation13 + $0x120] sm:$0xff]
    %v3951 = vld [vmem:[#allocation13 + $0x128] sm:$0xff]
    %v3952 = vld [vmem:[#allocation13 + $0x130] sm:$0xff]
    %v3953 = vld [vmem:[#allocation13 + $0x138] sm:$0xff]
    %v3954 = vld [vmem:[#allocation13 + $0x140] sm:$0xff]
    %v3955 = vld [vmem:[#allocation13 + $0x148] sm:$0xff]
    %v3956 = vld [vmem:[#allocation13 + $0x150] sm:$0xff]
    %v3957 = vld [vmem:[#allocation13 + $0x158] sm:$0xff]
    %v3958 = vld [vmem:[#allocation13 + $0x160] sm:$0xff]
    %v3959 = vld [vmem:[#allocation13 + $0x168] sm:$0xff]
    %v3960 = vld [vmem:[#allocation13 + $0x170] sm:$0xff]
    %v3961 = vld [vmem:[#allocation13 + $0x178] sm:$0xff]
    %v3962 = vld [vmem:[#allocation13 + $0x180] sm:$0xff]
    %v3963 = vld [vmem:[#allocation13 + $0x188] sm:$0xff]
    %v3964 = vld [vmem:[#allocation13 + $0x190] sm:$0xff]
    %v3965 = vld [vmem:[#allocation13 + $0x198] sm:$0xff]
    %v3966 = vld [vmem:[#allocation13 + $0x1a0] sm:$0xff]
    %v3967 = vld [vmem:[#allocation13 + $0x1a8] sm:$0xff]
    %v3968 = vld [vmem:[#allocation13 + $0x1b0] sm:$0xff]
    %v3969 = vld [vmem:[#allocation13 + $0x1b8] sm:$0xff]
    %v3970 = vld [vmem:[#allocation13 + $0x1c0] sm:$0xff]
    %v3971 = vld [vmem:[#allocation13 + $0x1c8] sm:$0xff]
    %v3972 = vld [vmem:[#allocation13 + $0x1d0] sm:$0xff]
    %v3973 = vld [vmem:[#allocation13 + $0x1d8] sm:$0xff]
    %v3974 = vld [vmem:[#allocation13 + $0x1e0] sm:$0xff]
    %v3975 = vld [vmem:[#allocation13 + $0x1e8] sm:$0xff]
    %v3976 = vld [vmem:[#allocation13 + $0x1f0] sm:$0xff]
    %v3977 = vld [vmem:[#allocation13 + $0x1f8] sm:$0xff]
    %v3978 = vld [vmem:[#allocation13 + $0x200] sm:$0xff]
    %v3979 = vld [vmem:[#allocation13 + $0x208] sm:$0xff]
    %v3980 = vld [vmem:[#allocation13 + $0x210] sm:$0xff]
    %v3981 = vld [vmem:[#allocation13 + $0x218] sm:$0xff]
    %v3982 = vld [vmem:[#allocation13 + $0x220] sm:$0xff]
    %v3983 = vld [vmem:[#allocation13 + $0x228] sm:$0xff]
    %v3984 = vld [vmem:[#allocation13 + $0x230] sm:$0xff]
    %v3985 = vld [vmem:[#allocation13 + $0x238] sm:$0xff]
    %v3986 = vld [vmem:[#allocation13 + $0x240] sm:$0xff]
    %v3987 = vld [vmem:[#allocation13 + $0x248] sm:$0xff]
    %v3988 = vld [vmem:[#allocation13 + $0x250] sm:$0xff]
    %v3989 = vld [vmem:[#allocation13 + $0x258] sm:$0xff]
    %v3990 = vld [vmem:[#allocation13 + $0x260] sm:$0xff]
    %v3991 = vld [vmem:[#allocation13 + $0x268] sm:$0xff]
    %v3992 = vld [vmem:[#allocation13 + $0x270] sm:$0xff]
    %v3993 = vld [vmem:[#allocation13 + $0x278] sm:$0xff]
    %v3994 = vld [vmem:[#allocation13 + $0x280] sm:$0xff]
    %v3995 = vld [vmem:[#allocation13 + $0x288] sm:$0xff]
    %v3996 = vld [vmem:[#allocation13 + $0x290] sm:$0xff]
    %v3997 = vld [vmem:[#allocation13 + $0x298] sm:$0xff]
    %v3998 = vld [vmem:[#allocation13 + $0x2a0] sm:$0xff]
    %v3999 = vld [vmem:[#allocation13 + $0x2a8] sm:$0xff]
    %v4000 = vld [vmem:[#allocation13 + $0x2b0] sm:$0xff]
    %v4001 = vld [vmem:[#allocation13 + $0x2b8] sm:$0xff]
    %v4002 = vld [vmem:[#allocation13 + $0x2c0] sm:$0xff]
    %v4003 = vld [vmem:[#allocation13 + $0x2c8] sm:$0xff]
    %v4004 = vld [vmem:[#allocation13 + $0x2d0] sm:$0xff]
    %v4005 = vld [vmem:[#allocation13 + $0x2d8] sm:$0xff]
    %v4006 = vld [vmem:[#allocation13 + $0x2e0] sm:$0xff]
    %v4007 = vld [vmem:[#allocation13 + $0x2e8] sm:$0xff]
    %v4008 = vld [vmem:[#allocation13 + $0x2f0] sm:$0xff]
    %v4009 = vld [vmem:[#allocation13 + $0x2f8] sm:$0xff]
    %v4010 = vld [vmem:[#allocation13 + $0x300] sm:$0xff]
    %v4011 = vld [vmem:[#allocation13 + $0x308] sm:$0xff]
    %v4012 = vld [vmem:[#allocation13 + $0x310] sm:$0xff]
    %v4013 = vld [vmem:[#allocation13 + $0x318] sm:$0xff]
    %v4014 = vld [vmem:[#allocation13 + $0x320] sm:$0xff]
    %v4015 = vld [vmem:[#allocation13 + $0x328] sm:$0xff]
    %v4016 = vld [vmem:[#allocation13 + $0x330] sm:$0xff]
    %v4017 = vld [vmem:[#allocation13 + $0x338] sm:$0xff]
    %v4018 = vld [vmem:[#allocation13 + $0x340] sm:$0xff]
    %v4019 = vld [vmem:[#allocation13 + $0x348] sm:$0xff]
    %v4020 = vld [vmem:[#allocation13 + $0x350] sm:$0xff]
    %v4021 = vld [vmem:[#allocation13 + $0x358] sm:$0xff]
    %v4022 = vld [vmem:[#allocation13 + $0x360] sm:$0xff]
    %v4023 = vld [vmem:[#allocation13 + $0x368] sm:$0xff]
    %v4024 = vld [vmem:[#allocation13 + $0x370] sm:$0xff]
    %v4025 = vld [vmem:[#allocation13 + $0x378] sm:$0xff]
    %v4026 = vld [vmem:[#allocation13 + $0x380] sm:$0xff]
    %v4027 = vld [vmem:[#allocation13 + $0x388] sm:$0xff]
    %v4028 = vld [vmem:[#allocation13 + $0x390] sm:$0xff]
    %v4029 = vld [vmem:[#allocation13 + $0x398] sm:$0xff]
    %v4030 = vld [vmem:[#allocation13 + $0x3a0] sm:$0xff]
    %v4031 = vld [vmem:[#allocation13 + $0x3a8] sm:$0xff]
    %v4032 = vld [vmem:[#allocation13 + $0x3b0] sm:$0xff]
    %v4033 = vld [vmem:[#allocation13 + $0x3b8] sm:$0xff]
    %v4034 = vld [vmem:[#allocation13 + $0x3c0] sm:$0xff]
    %v4035 = vld [vmem:[#allocation13 + $0x3c8] sm:$0xff]
    %v4036 = vld [vmem:[#allocation13 + $0x3d0] sm:$0xff]
    %v4037 = vld [vmem:[#allocation13 + $0x3d8] sm:$0xff]
    %v4038 = vld [vmem:[#allocation13 + $0x3e0] sm:$0xff]
    %v4039 = vld [vmem:[#allocation13 + $0x3e8] sm:$0xff]
    %v4040 = vld [vmem:[#allocation13 + $0x3f0] sm:$0xff]
    %v4041 = vld [vmem:[#allocation13 + $0x3f8] sm:$0xff]
    %v4042 = vld [vmem:[#allocation14] sm:$0xf]
    %v4044 = vperm.slane %v4042, 0
    %v4045 = vperm.slane %v4042, 1
    %v4046 = vperm.slane %v4042, 2
    %v4047 = vperm.slane %v4042, 3
    %v4180 = vunpack.c.l.b16 %v3914
    %v4181 = vunpack.c.h.b16 %v3914
    %v4182 = vunpack.c.l.b16 %v3915
    %v4183 = vunpack.c.h.b16 %v3915
    %v4184 = vunpack.c.l.b16 %v3916
    %v4185 = vunpack.c.h.b16 %v3916
    %v4186 = vunpack.c.l.b16 %v3917
    %v4187 = vunpack.c.h.b16 %v3917
    %v4188 = vunpack.c.l.b16 %v3918
    %v4189 = vunpack.c.h.b16 %v3918
    %v4190 = vunpack.c.l.b16 %v3919
    %v4191 = vunpack.c.h.b16 %v3919
    %v4192 = vunpack.c.l.b16 %v3920
    %v4193 = vunpack.c.h.b16 %v3920
    %v4194 = vunpack.c.l.b16 %v3921
    %v4195 = vunpack.c.h.b16 %v3921
    %v4196 = vunpack.c.l.b16 %v3922
    %v4197 = vunpack.c.h.b16 %v3922
    %v4198 = vunpack.c.l.b16 %v3923
    %v4199 = vunpack.c.h.b16 %v3923
    %v4200 = vunpack.c.l.b16 %v3924
    %v4201 = vunpack.c.h.b16 %v3924
    %v4202 = vunpack.c.l.b16 %v3925
    %v4203 = vunpack.c.h.b16 %v3925
    %v4204 = vunpack.c.l.b16 %v3926
    %v4205 = vunpack.c.h.b16 %v3926
    %v4206 = vunpack.c.l.b16 %v3927
    %v4207 = vunpack.c.h.b16 %v3927
    %v4208 = vunpack.c.l.b16 %v3928
    %v4209 = vunpack.c.h.b16 %v3928
    %v4210 = vunpack.c.l.b16 %v3929
    %v4211 = vunpack.c.h.b16 %v3929
    %v4212 = vunpack.c.l.b16 %v3930
    %v4213 = vunpack.c.h.b16 %v3930
    %v4214 = vunpack.c.l.b16 %v3931
    %v4215 = vunpack.c.h.b16 %v3931
    %v4216 = vunpack.c.l.b16 %v3932
    %v4217 = vunpack.c.h.b16 %v3932
    %v4218 = vunpack.c.l.b16 %v3933
    %v4219 = vunpack.c.h.b16 %v3933
    %v4220 = vunpack.c.l.b16 %v3934
    %v4221 = vunpack.c.h.b16 %v3934
    %v4222 = vunpack.c.l.b16 %v3935
    %v4223 = vunpack.c.h.b16 %v3935
    %v4224 = vunpack.c.l.b16 %v3936
    %v4225 = vunpack.c.h.b16 %v3936
    %v4226 = vunpack.c.l.b16 %v3937
    %v4227 = vunpack.c.h.b16 %v3937
    %v4228 = vunpack.c.l.b16 %v3938
    %v4229 = vunpack.c.h.b16 %v3938
    %v4230 = vunpack.c.l.b16 %v3939
    %v4231 = vunpack.c.h.b16 %v3939
    %v4232 = vunpack.c.l.b16 %v3940
    %v4233 = vunpack.c.h.b16 %v3940
    %v4234 = vunpack.c.l.b16 %v3941
    %v4235 = vunpack.c.h.b16 %v3941
    %v4236 = vunpack.c.l.b16 %v3942
    %v4237 = vunpack.c.h.b16 %v3942
    %v4238 = vunpack.c.l.b16 %v3943
    %v4239 = vunpack.c.h.b16 %v3943
    %v4240 = vunpack.c.l.b16 %v3944
    %v4241 = vunpack.c.h.b16 %v3944
    %v4242 = vunpack.c.l.b16 %v3945
    %v4243 = vunpack.c.h.b16 %v3945
    %v4244 = vunpack.c.l.b16 %v3946
    %v4245 = vunpack.c.h.b16 %v3946
    %v4246 = vunpack.c.l.b16 %v3947
    %v4247 = vunpack.c.h.b16 %v3947
    %v4248 = vunpack.c.l.b16 %v3948
    %v4249 = vunpack.c.h.b16 %v3948
    %v4250 = vunpack.c.l.b16 %v3949
    %v4251 = vunpack.c.h.b16 %v3949
    %v4252 = vunpack.c.l.b16 %v3950
    %v4253 = vunpack.c.h.b16 %v3950
    %v4254 = vunpack.c.l.b16 %v3951
    %v4255 = vunpack.c.h.b16 %v3951
    %v4256 = vunpack.c.l.b16 %v3952
    %v4257 = vunpack.c.h.b16 %v3952
    %v4258 = vunpack.c.l.b16 %v3953
    %v4259 = vunpack.c.h.b16 %v3953
    %v4260 = vunpack.c.l.b16 %v3954
    %v4261 = vunpack.c.h.b16 %v3954
    %v4262 = vunpack.c.l.b16 %v3955
    %v4263 = vunpack.c.h.b16 %v3955
    %v4264 = vunpack.c.l.b16 %v3956
    %v4265 = vunpack.c.h.b16 %v3956
    %v4266 = vunpack.c.l.b16 %v3957
    %v4267 = vunpack.c.h.b16 %v3957
    %v4268 = vunpack.c.l.b16 %v3958
    %v4269 = vunpack.c.h.b16 %v3958
    %v4270 = vunpack.c.l.b16 %v3959
    %v4271 = vunpack.c.h.b16 %v3959
    %v4272 = vunpack.c.l.b16 %v3960
    %v4273 = vunpack.c.h.b16 %v3960
    %v4274 = vunpack.c.l.b16 %v3961
    %v4275 = vunpack.c.h.b16 %v3961
    %v4276 = vunpack.c.l.b16 %v3962
    %v4277 = vunpack.c.h.b16 %v3962
    %v4278 = vunpack.c.l.b16 %v3963
    %v4279 = vunpack.c.h.b16 %v3963
    %v4280 = vunpack.c.l.b16 %v3964
    %v4281 = vunpack.c.h.b16 %v3964
    %v4282 = vunpack.c.l.b16 %v3965
    %v4283 = vunpack.c.h.b16 %v3965
    %v4284 = vunpack.c.l.b16 %v3966
    %v4285 = vunpack.c.h.b16 %v3966
    %v4286 = vunpack.c.l.b16 %v3967
    %v4287 = vunpack.c.h.b16 %v3967
    %v4288 = vunpack.c.l.b16 %v3968
    %v4289 = vunpack.c.h.b16 %v3968
    %v4290 = vunpack.c.l.b16 %v3969
    %v4291 = vunpack.c.h.b16 %v3969
    %v4292 = vunpack.c.l.b16 %v3970
    %v4293 = vunpack.c.h.b16 %v3970
    %v4294 = vunpack.c.l.b16 %v3971
    %v4295 = vunpack.c.h.b16 %v3971
    %v4296 = vunpack.c.l.b16 %v3972
    %v4297 = vunpack.c.h.b16 %v3972
    %v4298 = vunpack.c.l.b16 %v3973
    %v4299 = vunpack.c.h.b16 %v3973
    %v4300 = vunpack.c.l.b16 %v3974
    %v4301 = vunpack.c.h.b16 %v3974
    %v4302 = vunpack.c.l.b16 %v3975
    %v4303 = vunpack.c.h.b16 %v3975
    %v4304 = vunpack.c.l.b16 %v3976
    %v4305 = vunpack.c.h.b16 %v3976
    %v4306 = vunpack.c.l.b16 %v3977
    %v4307 = vunpack.c.h.b16 %v3977
    %v4308 = vunpack.c.l.b16 %v3978
    %v4309 = vunpack.c.h.b16 %v3978
    %v4310 = vunpack.c.l.b16 %v3979
    %v4311 = vunpack.c.h.b16 %v3979
    %v4312 = vunpack.c.l.b16 %v3980
    %v4313 = vunpack.c.h.b16 %v3980
    %v4314 = vunpack.c.l.b16 %v3981
    %v4315 = vunpack.c.h.b16 %v3981
    %v4316 = vunpack.c.l.b16 %v3982
    %v4317 = vunpack.c.h.b16 %v3982
    %v4318 = vunpack.c.l.b16 %v3983
    %v4319 = vunpack.c.h.b16 %v3983
    %v4320 = vunpack.c.l.b16 %v3984
    %v4321 = vunpack.c.h.b16 %v3984
    %v4322 = vunpack.c.l.b16 %v3985
    %v4323 = vunpack.c.h.b16 %v3985
    %v4324 = vunpack.c.l.b16 %v3986
    %v4325 = vunpack.c.h.b16 %v3986
    %v4326 = vunpack.c.l.b16 %v3987
    %v4327 = vunpack.c.h.b16 %v3987
    %v4328 = vunpack.c.l.b16 %v3988
    %v4329 = vunpack.c.h.b16 %v3988
    %v4330 = vunpack.c.l.b16 %v3989
    %v4331 = vunpack.c.h.b16 %v3989
    %v4332 = vunpack.c.l.b16 %v3990
    %v4333 = vunpack.c.h.b16 %v3990
    %v4334 = vunpack.c.l.b16 %v3991
    %v4335 = vunpack.c.h.b16 %v3991
    %v4336 = vunpack.c.l.b16 %v3992
    %v4337 = vunpack.c.h.b16 %v3992
    %v4338 = vunpack.c.l.b16 %v3993
    %v4339 = vunpack.c.h.b16 %v3993
    %v4340 = vunpack.c.l.b16 %v3994
    %v4341 = vunpack.c.h.b16 %v3994
    %v4342 = vunpack.c.l.b16 %v3995
    %v4343 = vunpack.c.h.b16 %v3995
    %v4344 = vunpack.c.l.b16 %v3996
    %v4345 = vunpack.c.h.b16 %v3996
    %v4346 = vunpack.c.l.b16 %v3997
    %v4347 = vunpack.c.h.b16 %v3997
    %v4348 = vunpack.c.l.b16 %v3998
    %v4349 = vunpack.c.h.b16 %v3998
    %v4350 = vunpack.c.l.b16 %v3999
    %v4351 = vunpack.c.h.b16 %v3999
    %v4352 = vunpack.c.l.b16 %v4000
    %v4353 = vunpack.c.h.b16 %v4000
    %v4354 = vunpack.c.l.b16 %v4001
    %v4355 = vunpack.c.h.b16 %v4001
    %v4356 = vunpack.c.l.b16 %v4002
    %v4357 = vunpack.c.h.b16 %v4002
    %v4358 = vunpack.c.l.b16 %v4003
    %v4359 = vunpack.c.h.b16 %v4003
    %v4360 = vunpack.c.l.b16 %v4004
    %v4361 = vunpack.c.h.b16 %v4004
    %v4362 = vunpack.c.l.b16 %v4005
    %v4363 = vunpack.c.h.b16 %v4005
    %v4364 = vunpack.c.l.b16 %v4006
    %v4365 = vunpack.c.h.b16 %v4006
    %v4366 = vunpack.c.l.b16 %v4007
    %v4367 = vunpack.c.h.b16 %v4007
    %v4368 = vunpack.c.l.b16 %v4008
    %v4369 = vunpack.c.h.b16 %v4008
    %v4370 = vunpack.c.l.b16 %v4009
    %v4371 = vunpack.c.h.b16 %v4009
    %v4372 = vunpack.c.l.b16 %v4010
    %v4373 = vunpack.c.h.b16 %v4010
    %v4374 = vunpack.c.l.b16 %v4011
    %v4375 = vunpack.c.h.b16 %v4011
    %v4376 = vunpack.c.l.b16 %v4012
    %v4377 = vunpack.c.h.b16 %v4012
    %v4378 = vunpack.c.l.b16 %v4013
    %v4379 = vunpack.c.h.b16 %v4013
    %v4380 = vunpack.c.l.b16 %v4014
    %v4381 = vunpack.c.h.b16 %v4014
    %v4382 = vunpack.c.l.b16 %v4015
    %v4383 = vunpack.c.h.b16 %v4015
    %v4384 = vunpack.c.l.b16 %v4016
    %v4385 = vunpack.c.h.b16 %v4016
    %v4386 = vunpack.c.l.b16 %v4017
    %v4387 = vunpack.c.h.b16 %v4017
    %v4388 = vunpack.c.l.b16 %v4018
    %v4389 = vunpack.c.h.b16 %v4018
    %v4390 = vunpack.c.l.b16 %v4019
    %v4391 = vunpack.c.h.b16 %v4019
    %v4392 = vunpack.c.l.b16 %v4020
    %v4393 = vunpack.c.h.b16 %v4020
    %v4394 = vunpack.c.l.b16 %v4021
    %v4395 = vunpack.c.h.b16 %v4021
    %v4396 = vunpack.c.l.b16 %v4022
    %v4397 = vunpack.c.h.b16 %v4022
    %v4398 = vunpack.c.l.b16 %v4023
    %v4399 = vunpack.c.h.b16 %v4023
    %v4400 = vunpack.c.l.b16 %v4024
    %v4401 = vunpack.c.h.b16 %v4024
    %v4402 = vunpack.c.l.b16 %v4025
    %v4403 = vunpack.c.h.b16 %v4025
    %v4404 = vunpack.c.l.b16 %v4026
    %v4405 = vunpack.c.h.b16 %v4026
    %v4406 = vunpack.c.l.b16 %v4027
    %v4407 = vunpack.c.h.b16 %v4027
    %v4408 = vunpack.c.l.b16 %v4028
    %v4409 = vunpack.c.h.b16 %v4028
    %v4410 = vunpack.c.l.b16 %v4029
    %v4411 = vunpack.c.h.b16 %v4029
    %v4412 = vunpack.c.l.b16 %v4030
    %v4413 = vunpack.c.h.b16 %v4030
    %v4414 = vunpack.c.l.b16 %v4031
    %v4415 = vunpack.c.h.b16 %v4031
    %v4416 = vunpack.c.l.b16 %v4032
    %v4417 = vunpack.c.h.b16 %v4032
    %v4418 = vunpack.c.l.b16 %v4033
    %v4419 = vunpack.c.h.b16 %v4033
    %v4420 = vunpack.c.l.b16 %v4034
    %v4421 = vunpack.c.h.b16 %v4034
    %v4422 = vunpack.c.l.b16 %v4035
    %v4423 = vunpack.c.h.b16 %v4035
    %v4424 = vunpack.c.l.b16 %v4036
    %v4425 = vunpack.c.h.b16 %v4036
    %v4426 = vunpack.c.l.b16 %v4037
    %v4427 = vunpack.c.h.b16 %v4037
    %v4428 = vunpack.c.l.b16 %v4038
    %v4429 = vunpack.c.h.b16 %v4038
    %v4430 = vunpack.c.l.b16 %v4039
    %v4431 = vunpack.c.h.b16 %v4039
    %v4432 = vunpack.c.l.b16 %v4040
    %v4433 = vunpack.c.h.b16 %v4040
    %v4434 = vunpack.c.l.b16 %v4041
    %v4435 = vunpack.c.h.b16 %v4041
    %v4436 = vpack.c.b16 %v4184, %v4180
    %v4437 = vpack.c.b16 %v4185, %v4181
    %v4438 = vpack.c.b16 %v4186, %v4182
    %v4439 = vpack.c.b16 %v4187, %v4183
    %v4440 = vpack.c.b16 %v4192, %v4188
    %v4441 = vpack.c.b16 %v4193, %v4189
    %v4442 = vpack.c.b16 %v4194, %v4190
    %v4443 = vpack.c.b16 %v4195, %v4191
    %v4444 = vpack.c.b16 %v4200, %v4196
    %v4445 = vpack.c.b16 %v4201, %v4197
    %v4446 = vpack.c.b16 %v4202, %v4198
    %v4447 = vpack.c.b16 %v4203, %v4199
    %v4448 = vpack.c.b16 %v4208, %v4204
    %v4449 = vpack.c.b16 %v4209, %v4205
    %v4450 = vpack.c.b16 %v4210, %v4206
    %v4451 = vpack.c.b16 %v4211, %v4207
    %v4452 = vpack.c.b16 %v4216, %v4212
    %v4453 = vpack.c.b16 %v4217, %v4213
    %v4454 = vpack.c.b16 %v4218, %v4214
    %v4455 = vpack.c.b16 %v4219, %v4215
    %v4456 = vpack.c.b16 %v4224, %v4220
    %v4457 = vpack.c.b16 %v4225, %v4221
    %v4458 = vpack.c.b16 %v4226, %v4222
    %v4459 = vpack.c.b16 %v4227, %v4223
    %v4460 = vpack.c.b16 %v4232, %v4228
    %v4461 = vpack.c.b16 %v4233, %v4229
    %v4462 = vpack.c.b16 %v4234, %v4230
    %v4463 = vpack.c.b16 %v4235, %v4231
    %v4464 = vpack.c.b16 %v4240, %v4236
    %v4465 = vpack.c.b16 %v4241, %v4237
    %v4466 = vpack.c.b16 %v4242, %v4238
    %v4467 = vpack.c.b16 %v4243, %v4239
    %v4468 = vpack.c.b16 %v4248, %v4244
    %v4469 = vpack.c.b16 %v4249, %v4245
    %v4470 = vpack.c.b16 %v4250, %v4246
    %v4471 = vpack.c.b16 %v4251, %v4247
    %v4472 = vpack.c.b16 %v4256, %v4252
    %v4473 = vpack.c.b16 %v4257, %v4253
    %v4474 = vpack.c.b16 %v4258, %v4254
    %v4475 = vpack.c.b16 %v4259, %v4255
    %v4476 = vpack.c.b16 %v4264, %v4260
    %v4477 = vpack.c.b16 %v4265, %v4261
    %v4478 = vpack.c.b16 %v4266, %v4262
    %v4479 = vpack.c.b16 %v4267, %v4263
    %v4480 = vpack.c.b16 %v4272, %v4268
    %v4481 = vpack.c.b16 %v4273, %v4269
    %v4482 = vpack.c.b16 %v4274, %v4270
    %v4483 = vpack.c.b16 %v4275, %v4271
    %v4484 = vpack.c.b16 %v4280, %v4276
    %v4485 = vpack.c.b16 %v4281, %v4277
    %v4486 = vpack.c.b16 %v4282, %v4278
    %v4487 = vpack.c.b16 %v4283, %v4279
    %v4488 = vpack.c.b16 %v4288, %v4284
    %v4489 = vpack.c.b16 %v4289, %v4285
    %v4490 = vpack.c.b16 %v4290, %v4286
    %v4491 = vpack.c.b16 %v4291, %v4287
    %v4492 = vpack.c.b16 %v4296, %v4292
    %v4493 = vpack.c.b16 %v4297, %v4293
    %v4494 = vpack.c.b16 %v4298, %v4294
    %v4495 = vpack.c.b16 %v4299, %v4295
    %v4496 = vpack.c.b16 %v4304, %v4300
    %v4497 = vpack.c.b16 %v4305, %v4301
    %v4498 = vpack.c.b16 %v4306, %v4302
    %v4499 = vpack.c.b16 %v4307, %v4303
    %v4500 = vpack.c.b16 %v4312, %v4308
    %v4501 = vpack.c.b16 %v4313, %v4309
    %v4502 = vpack.c.b16 %v4314, %v4310
    %v4503 = vpack.c.b16 %v4315, %v4311
    %v4504 = vpack.c.b16 %v4320, %v4316
    %v4505 = vpack.c.b16 %v4321, %v4317
    %v4506 = vpack.c.b16 %v4322, %v4318
    %v4507 = vpack.c.b16 %v4323, %v4319
    %v4508 = vpack.c.b16 %v4328, %v4324
    %v4509 = vpack.c.b16 %v4329, %v4325
    %v4510 = vpack.c.b16 %v4330, %v4326
    %v4511 = vpack.c.b16 %v4331, %v4327
    %v4512 = vpack.c.b16 %v4336, %v4332
    %v4513 = vpack.c.b16 %v4337, %v4333
    %v4514 = vpack.c.b16 %v4338, %v4334
    %v4515 = vpack.c.b16 %v4339, %v4335
    %v4516 = vpack.c.b16 %v4344, %v4340
    %v4517 = vpack.c.b16 %v4345, %v4341
    %v4518 = vpack.c.b16 %v4346, %v4342
    %v4519 = vpack.c.b16 %v4347, %v4343
    %v4520 = vpack.c.b16 %v4352, %v4348
    %v4521 = vpack.c.b16 %v4353, %v4349
    %v4522 = vpack.c.b16 %v4354, %v4350
    %v4523 = vpack.c.b16 %v4355, %v4351
    %v4524 = vpack.c.b16 %v4360, %v4356
    %v4525 = vpack.c.b16 %v4361, %v4357
    %v4526 = vpack.c.b16 %v4362, %v4358
    %v4527 = vpack.c.b16 %v4363, %v4359
    %v4528 = vpack.c.b16 %v4368, %v4364
    %v4529 = vpack.c.b16 %v4369, %v4365
    %v4530 = vpack.c.b16 %v4370, %v4366
    %v4531 = vpack.c.b16 %v4371, %v4367
    %v4532 = vpack.c.b16 %v4376, %v4372
    %v4533 = vpack.c.b16 %v4377, %v4373
    %v4534 = vpack.c.b16 %v4378, %v4374
    %v4535 = vpack.c.b16 %v4379, %v4375
    %v4536 = vpack.c.b16 %v4384, %v4380
    %v4537 = vpack.c.b16 %v4385, %v4381
    %v4538 = vpack.c.b16 %v4386, %v4382
    %v4539 = vpack.c.b16 %v4387, %v4383
    %v4540 = vpack.c.b16 %v4392, %v4388
    %v4541 = vpack.c.b16 %v4393, %v4389
    %v4542 = vpack.c.b16 %v4394, %v4390
    %v4543 = vpack.c.b16 %v4395, %v4391
    %v4544 = vpack.c.b16 %v4400, %v4396
    %v4545 = vpack.c.b16 %v4401, %v4397
    %v4546 = vpack.c.b16 %v4402, %v4398
    %v4547 = vpack.c.b16 %v4403, %v4399
    %v4548 = vpack.c.b16 %v4408, %v4404
    %v4549 = vpack.c.b16 %v4409, %v4405
    %v4550 = vpack.c.b16 %v4410, %v4406
    %v4551 = vpack.c.b16 %v4411, %v4407
    %v4552 = vpack.c.b16 %v4416, %v4412
    %v4553 = vpack.c.b16 %v4417, %v4413
    %v4554 = vpack.c.b16 %v4418, %v4414
    %v4555 = vpack.c.b16 %v4419, %v4415
    %v4556 = vpack.c.b16 %v4424, %v4420
    %v4557 = vpack.c.b16 %v4425, %v4421
    %v4558 = vpack.c.b16 %v4426, %v4422
    %v4559 = vpack.c.b16 %v4427, %v4423
    %v4560 = vpack.c.b16 %v4432, %v4428
    %v4561 = vpack.c.b16 %v4433, %v4429
    %v4562 = vpack.c.b16 %v4434, %v4430
    %v4563 = vpack.c.b16 %v4435, %v4431
    %4692 = vmatpush.bf16.msra.mxu0 %v4464
    %4693 = vmatpush.bf16.msra.mxu0 %v4460
    %4694 = vmatpush.bf16.msra.mxu0 %v4456
    %4695 = vmatpush.bf16.msra.mxu0 %v4452
    %4696 = vmatpush.bf16.msra.mxu0 %v4448
    %4697 = vmatpush.bf16.msra.mxu0 %v4444
    %4698 = vmatpush.bf16.msra.mxu0 %v4440
    %4699 = vmatpush.bf16.msra.mxu0 %v4436
    %4700 = vmatmul.bf16.gmra.mxu0 %v3910
    %v4701 = vpop.f32.mrf.mxu0
    %v4702 = vadd.f32 %v4044, %v4701
    %v4703 = vpop.f32.mrf.mxu0
    %4704 = vdwg.mxu0
    %4705 = vmatpush.bf16.msra.mxu0 %v4496
    %4706 = vmatpush.bf16.msra.mxu0 %v4492
    %4707 = vmatpush.bf16.msra.mxu0 %v4488
    %4708 = vmatpush.bf16.msra.mxu0 %v4484
    %4709 = vmatpush.bf16.msra.mxu0 %v4480
    %4710 = vmatpush.bf16.msra.mxu0 %v4476
    %4711 = vmatpush.bf16.msra.mxu0 %v4472
    %4712 = vmatpush.bf16.msra.mxu0 %v4468
    %4713 = vmatmul.bf16.gmra.mxu0 %v3911
    %v4714 = vpop.f32.mrf.mxu0
    %v4715 = vadd.f32 %v4702, %v4714
    %v4716 = vpop.f32.mrf.mxu0
    %4717 = vdwg.mxu0
    %4718 = vmatpush.bf16.msra.mxu0 %v4528
    %4719 = vmatpush.bf16.msra.mxu0 %v4524
    %4720 = vmatpush.bf16.msra.mxu0 %v4520
    %4721 = vmatpush.bf16.msra.mxu0 %v4516
    %4722 = vmatpush.bf16.msra.mxu0 %v4512
    %4723 = vmatpush.bf16.msra.mxu0 %v4508
    %4724 = vmatpush.bf16.msra.mxu0 %v4504
    %4725 = vmatpush.bf16.msra.mxu0 %v4500
    %4726 = vmatmul.bf16.gmra.mxu0 %v3912
    %v4727 = vpop.f32.mrf.mxu0
    %v4728 = vadd.f32 %v4715, %v4727
    %v4729 = vpop.f32.mrf.mxu0
    %4730 = vdwg.mxu0
    %4731 = vmatpush.bf16.msra.mxu0 %v4560
    %4732 = vmatpush.bf16.msra.mxu0 %v4556
    %4733 = vmatpush.bf16.msra.mxu0 %v4552
    %4734 = vmatpush.bf16.msra.mxu0 %v4548
    %4735 = vmatpush.bf16.msra.mxu0 %v4544
    %4736 = vmatpush.bf16.msra.mxu0 %v4540
    %4737 = vmatpush.bf16.msra.mxu0 %v4536
    %4738 = vmatpush.bf16.msra.mxu0 %v4532
    %4739 = vmatmul.bf16.gmra.mxu0 %v3913
    %v4740 = vpop.f32.mrf.mxu0
    %v4741 = vadd.f32 %v4728, %v4740
    %v4742 = vpop.f32.mrf.mxu0
    %4743 = vdwg.mxu0
    %4744 = vmatpush.bf16.msra.mxu0 %v4465
    %4745 = vmatpush.bf16.msra.mxu0 %v4461
    %4746 = vmatpush.bf16.msra.mxu0 %v4457
    %4747 = vmatpush.bf16.msra.mxu0 %v4453
    %4748 = vmatpush.bf16.msra.mxu0 %v4449
    %4749 = vmatpush.bf16.msra.mxu0 %v4445
    %4750 = vmatpush.bf16.msra.mxu0 %v4441
    %4751 = vmatpush.bf16.msra.mxu0 %v4437
    %4752 = vmatmul.bf16.gmra.mxu0 %v3910
    %v4753 = vpop.f32.mrf.mxu0
    %v4754 = vadd.f32 %v4045, %v4753
    %v4755 = vpop.f32.mrf.mxu0
    %4756 = vdwg.mxu0
    %4757 = vmatpush.bf16.msra.mxu0 %v4497
    %4758 = vmatpush.bf16.msra.mxu0 %v4493
    %4759 = vmatpush.bf16.msra.mxu0 %v4489
    %4760 = vmatpush.bf16.msra.mxu0 %v4485
    %4761 = vmatpush.bf16.msra.mxu0 %v4481
    %4762 = vmatpush.bf16.msra.mxu0 %v4477
    %4763 = vmatpush.bf16.msra.mxu0 %v4473
    %4764 = vmatpush.bf16.msra.mxu0 %v4469
    %4765 = vmatmul.bf16.gmra.mxu0 %v3911
    %v4766 = vpop.f32.mrf.mxu0
    %v4767 = vadd.f32 %v4754, %v4766
    %v4768 = vpop.f32.mrf.mxu0
    %4769 = vdwg.mxu0
    %4770 = vmatpush.bf16.msra.mxu0 %v4529
    %4771 = vmatpush.bf16.msra.mxu0 %v4525
    %4772 = vmatpush.bf16.msra.mxu0 %v4521
    %4773 = vmatpush.bf16.msra.mxu0 %v4517
    %4774 = vmatpush.bf16.msra.mxu0 %v4513
    %4775 = vmatpush.bf16.msra.mxu0 %v4509
    %4776 = vmatpush.bf16.msra.mxu0 %v4505
    %4777 = vmatpush.bf16.msra.mxu0 %v4501
    %4778 = vmatmul.bf16.gmra.mxu0 %v3912
    %v4779 = vpop.f32.mrf.mxu0
    %v4780 = vadd.f32 %v4767, %v4779
    %v4781 = vpop.f32.mrf.mxu0
    %4782 = vdwg.mxu0
    %4783 = vmatpush.bf16.msra.mxu0 %v4561
    %4784 = vmatpush.bf16.msra.mxu0 %v4557
    %4785 = vmatpush.bf16.msra.mxu0 %v4553
    %4786 = vmatpush.bf16.msra.mxu0 %v4549
    %4787 = vmatpush.bf16.msra.mxu0 %v4545
    %4788 = vmatpush.bf16.msra.mxu0 %v4541
    %4789 = vmatpush.bf16.msra.mxu0 %v4537
    %4790 = vmatpush.bf16.msra.mxu0 %v4533
    %4791 = vmatmul.bf16.gmra.mxu0 %v3913
    %v4792 = vpop.f32.mrf.mxu0
    %v4793 = vadd.f32 %v4780, %v4792
    %v4794 = vpop.f32.mrf.mxu0
    %4795 = vdwg.mxu0
    %4796 = vmatpush.bf16.msra.mxu0 %v4466
    %4797 = vmatpush.bf16.msra.mxu0 %v4462
    %4798 = vmatpush.bf16.msra.mxu0 %v4458
    %4799 = vmatpush.bf16.msra.mxu0 %v4454
    %4800 = vmatpush.bf16.msra.mxu0 %v4450
    %4801 = vmatpush.bf16.msra.mxu0 %v4446
    %4802 = vmatpush.bf16.msra.mxu0 %v4442
    %4803 = vmatpush.bf16.msra.mxu0 %v4438
    %4804 = vmatmul.bf16.gmra.mxu0 %v3910
    %v4805 = vpop.f32.mrf.mxu0
    %v4806 = vadd.f32 %v4046, %v4805
    %v4807 = vpop.f32.mrf.mxu0
    %4808 = vdwg.mxu0
    %4809 = vmatpush.bf16.msra.mxu0 %v4498
    %4810 = vmatpush.bf16.msra.mxu0 %v4494
    %4811 = vmatpush.bf16.msra.mxu0 %v4490
    %4812 = vmatpush.bf16.msra.mxu0 %v4486
    %4813 = vmatpush.bf16.msra.mxu0 %v4482
    %4814 = vmatpush.bf16.msra.mxu0 %v4478
    %4815 = vmatpush.bf16.msra.mxu0 %v4474
    %4816 = vmatpush.bf16.msra.mxu0 %v4470
    %4817 = vmatmul.bf16.gmra.mxu0 %v3911
    %v4818 = vpop.f32.mrf.mxu0
    %v4819 = vadd.f32 %v4806, %v4818
    %v4820 = vpop.f32.mrf.mxu0
    %4821 = vdwg.mxu0
    %4822 = vmatpush.bf16.msra.mxu0 %v4530
    %4823 = vmatpush.bf16.msra.mxu0 %v4526
    %4824 = vmatpush.bf16.msra.mxu0 %v4522
    %4825 = vmatpush.bf16.msra.mxu0 %v4518
    %4826 = vmatpush.bf16.msra.mxu0 %v4514
    %4827 = vmatpush.bf16.msra.mxu0 %v4510
    %4828 = vmatpush.bf16.msra.mxu0 %v4506
    %4829 = vmatpush.bf16.msra.mxu0 %v4502
    %4830 = vmatmul.bf16.gmra.mxu0 %v3912
    %v4831 = vpop.f32.mrf.mxu0
    %v4832 = vadd.f32 %v4819, %v4831
    %v4833 = vpop.f32.mrf.mxu0
    %4834 = vdwg.mxu0
    %4835 = vmatpush.bf16.msra.mxu0 %v4562
    %4836 = vmatpush.bf16.msra.mxu0 %v4558
    %4837 = vmatpush.bf16.msra.mxu0 %v4554
    %4838 = vmatpush.bf16.msra.mxu0 %v4550
    %4839 = vmatpush.bf16.msra.mxu0 %v4546
    %4840 = vmatpush.bf16.msra.mxu0 %v4542
    %4841 = vmatpush.bf16.msra.mxu0 %v4538
    %4842 = vmatpush.bf16.msra.mxu0 %v4534
    %4843 = vmatmul.bf16.gmra.mxu0 %v3913
    %v4844 = vpop.f32.mrf.mxu0
    %v4845 = vadd.f32 %v4832, %v4844
    %v4846 = vpop.f32.mrf.mxu0
    %4847 = vdwg.mxu0
    %4848 = vmatpush.bf16.msra.mxu0 %v4467
    %4849 = vmatpush.bf16.msra.mxu0 %v4463
    %4850 = vmatpush.bf16.msra.mxu0 %v4459
    %4851 = vmatpush.bf16.msra.mxu0 %v4455
    %4852 = vmatpush.bf16.msra.mxu0 %v4451
    %4853 = vmatpush.bf16.msra.mxu0 %v4447
    %4854 = vmatpush.bf16.msra.mxu0 %v4443
    %4855 = vmatpush.bf16.msra.mxu0 %v4439
    %4856 = vmatmul.bf16.gmra.mxu0 %v3910
    %v4857 = vpop.f32.mrf.mxu0
    %v4858 = vadd.f32 %v4047, %v4857
    %v4859 = vpop.f32.mrf.mxu0
    %4860 = vdwg.mxu0
    %4861 = vmatpush.bf16.msra.mxu0 %v4499
    %4862 = vmatpush.bf16.msra.mxu0 %v4495
    %4863 = vmatpush.bf16.msra.mxu0 %v4491
    %4864 = vmatpush.bf16.msra.mxu0 %v4487
    %4865 = vmatpush.bf16.msra.mxu0 %v4483
    %4866 = vmatpush.bf16.msra.mxu0 %v4479
    %4867 = vmatpush.bf16.msra.mxu0 %v4475
    %4868 = vmatpush.bf16.msra.mxu0 %v4471
    %4869 = vmatmul.bf16.gmra.mxu0 %v3911
    %v4870 = vpop.f32.mrf.mxu0
    %v4871 = vadd.f32 %v4858, %v4870
    %v4872 = vpop.f32.mrf.mxu0
    %4873 = vdwg.mxu0
    %4874 = vmatpush.bf16.msra.mxu0 %v4531
    %4875 = vmatpush.bf16.msra.mxu0 %v4527
    %4876 = vmatpush.bf16.msra.mxu0 %v4523
    %4877 = vmatpush.bf16.msra.mxu0 %v4519
    %4878 = vmatpush.bf16.msra.mxu0 %v4515
    %4879 = vmatpush.bf16.msra.mxu0 %v4511
    %4880 = vmatpush.bf16.msra.mxu0 %v4507
    %4881 = vmatpush.bf16.msra.mxu0 %v4503
    %4882 = vmatmul.bf16.gmra.mxu0 %v3912
    %v4883 = vpop.f32.mrf.mxu0
    %v4884 = vadd.f32 %v4871, %v4883
    %v4885 = vpop.f32.mrf.mxu0
    %4886 = vdwg.mxu0
    %4887 = vmatpush.bf16.msra.mxu0 %v4563
    %4888 = vmatpush.bf16.msra.mxu0 %v4559
    %4889 = vmatpush.bf16.msra.mxu0 %v4555
    %4890 = vmatpush.bf16.msra.mxu0 %v4551
    %4891 = vmatpush.bf16.msra.mxu0 %v4547
    %4892 = vmatpush.bf16.msra.mxu0 %v4543
    %4893 = vmatpush.bf16.msra.mxu0 %v4539
    %4894 = vmatpush.bf16.msra.mxu0 %v4535
    %4895 = vmatmul.bf16.gmra.mxu0 %v3913
    %v4896 = vpop.f32.mrf.mxu0
    %v4897 = vadd.f32 %v4884, %v4896
    %v4898 = vpop.f32.mrf.mxu0
    %4899 = vdwg.mxu0
    %v4900 = vmax.f32 %v4741, 0.0
    %v4901 = vmax.f32 %v4793, 0.0
    %v4902 = vmax.f32 %v4845, 0.0
    %v4903 = vmax.f32 %v4897, 0.0
    %v4904 = vpack.c.bf16 %v4900, %v4900
    %v4905 = vpack.c.bf16 %v4901, %v4901
    %v4906 = vpack.c.bf16 %v4902, %v4902
    %v4907 = vpack.c.bf16 %v4903, %v4903
    %v4908 = vld [vmem:[#allocation16] sm:$0xf]
    %v4909 = vld [vmem:[#allocation16 + $0x4] sm:$0xf]
    %v4910 = vld [vmem:[#allocation16 + $0x8] sm:$0xf]
    %v4911 = vld [vmem:[#allocation16 + $0xc] sm:$0xf]
    %v4912 = vld [vmem:[#allocation16 + $0x10] sm:$0xf]
    %v4913 = vld [vmem:[#allocation16 + $0x14] sm:$0xf]
    %v4914 = vld [vmem:[#allocation16 + $0x18] sm:$0xf]
    %v4915 = vld [vmem:[#allocation16 + $0x1c] sm:$0xf]
    %v4916 = vld [vmem:[#allocation16 + $0x20] sm:$0xf]
    %v4917 = vld [vmem:[#allocation16 + $0x24] sm:$0xf]
    %v4918 = vld [vmem:[#allocation16 + $0x28] sm:$0xf]
    %v4919 = vld [vmem:[#allocation16 + $0x2c] sm:$0xf]
    %v4920 = vld [vmem:[#allocation16 + $0x30] sm:$0xf]
    %v4921 = vld [vmem:[#allocation16 + $0x34] sm:$0xf]
    %v4922 = vld [vmem:[#allocation16 + $0x38] sm:$0xf]
    %v4923 = vld [vmem:[#allocation16 + $0x3c] sm:$0xf]
    %v4924 = vld [vmem:[#allocation16 + $0x40] sm:$0xf]
    %v4925 = vld [vmem:[#allocation16 + $0x44] sm:$0xf]
    %v4926 = vld [vmem:[#allocation16 + $0x48] sm:$0xf]
    %v4927 = vld [vmem:[#allocation16 + $0x4c] sm:$0xf]
    %v4928 = vld [vmem:[#allocation16 + $0x50] sm:$0xf]
    %v4929 = vld [vmem:[#allocation16 + $0x54] sm:$0xf]
    %v4930 = vld [vmem:[#allocation16 + $0x58] sm:$0xf]
    %v4931 = vld [vmem:[#allocation16 + $0x5c] sm:$0xf]
    %v4932 = vld [vmem:[#allocation16 + $0x60] sm:$0xf]
    %v4933 = vld [vmem:[#allocation16 + $0x64] sm:$0xf]
    %v4934 = vld [vmem:[#allocation16 + $0x68] sm:$0xf]
    %v4935 = vld [vmem:[#allocation16 + $0x6c] sm:$0xf]
    %v4936 = vld [vmem:[#allocation16 + $0x70] sm:$0xf]
    %v4937 = vld [vmem:[#allocation16 + $0x74] sm:$0xf]
    %v4938 = vld [vmem:[#allocation16 + $0x78] sm:$0xf]
    %v4939 = vld [vmem:[#allocation16 + $0x7c] sm:$0xf]
    %v4940 = vld [vmem:[#allocation16 + $0x80] sm:$0xf]
    %v4941 = vld [vmem:[#allocation16 + $0x84] sm:$0xf]
    %v4942 = vld [vmem:[#allocation16 + $0x88] sm:$0xf]
    %v4943 = vld [vmem:[#allocation16 + $0x8c] sm:$0xf]
    %v4944 = vld [vmem:[#allocation16 + $0x90] sm:$0xf]
    %v4945 = vld [vmem:[#allocation16 + $0x94] sm:$0xf]
    %v4946 = vld [vmem:[#allocation16 + $0x98] sm:$0xf]
    %v4947 = vld [vmem:[#allocation16 + $0x9c] sm:$0xf]
    %v4948 = vld [vmem:[#allocation16 + $0xa0] sm:$0xf]
    %v4949 = vld [vmem:[#allocation16 + $0xa4] sm:$0xf]
    %v4950 = vld [vmem:[#allocation16 + $0xa8] sm:$0xf]
    %v4951 = vld [vmem:[#allocation16 + $0xac] sm:$0xf]
    %v4952 = vld [vmem:[#allocation16 + $0xb0] sm:$0xf]
    %v4953 = vld [vmem:[#allocation16 + $0xb4] sm:$0xf]
    %v4954 = vld [vmem:[#allocation16 + $0xb8] sm:$0xf]
    %v4955 = vld [vmem:[#allocation16 + $0xbc] sm:$0xf]
    %v4956 = vld [vmem:[#allocation16 + $0xc0] sm:$0xf]
    %v4957 = vld [vmem:[#allocation16 + $0xc4] sm:$0xf]
    %v4958 = vld [vmem:[#allocation16 + $0xc8] sm:$0xf]
    %v4959 = vld [vmem:[#allocation16 + $0xcc] sm:$0xf]
    %v4960 = vld [vmem:[#allocation16 + $0xd0] sm:$0xf]
    %v4961 = vld [vmem:[#allocation16 + $0xd4] sm:$0xf]
    %v4962 = vld [vmem:[#allocation16 + $0xd8] sm:$0xf]
    %v4963 = vld [vmem:[#allocation16 + $0xdc] sm:$0xf]
    %v4964 = vld [vmem:[#allocation16 + $0xe0] sm:$0xf]
    %v4965 = vld [vmem:[#allocation16 + $0xe4] sm:$0xf]
    %v4966 = vld [vmem:[#allocation16 + $0xe8] sm:$0xf]
    %v4967 = vld [vmem:[#allocation16 + $0xec] sm:$0xf]
    %v4968 = vld [vmem:[#allocation16 + $0xf0] sm:$0xf]
    %v4969 = vld [vmem:[#allocation16 + $0xf4] sm:$0xf]
    %v4970 = vld [vmem:[#allocation16 + $0xf8] sm:$0xf]
    %v4971 = vld [vmem:[#allocation16 + $0xfc] sm:$0xf]
    %v4972 = vld [vmem:[%s10] sm:$0x1]
    %v4974 = vperm.slane %v4972, 0
    %v5040 = vunpack.c.l.b16 %v4908
    %v5041 = vunpack.c.l.b16 %v4909
    %v5042 = vunpack.c.l.b16 %v4910
    %v5043 = vunpack.c.l.b16 %v4911
    %v5044 = vunpack.c.l.b16 %v4912
    %v5045 = vunpack.c.l.b16 %v4913
    %v5046 = vunpack.c.l.b16 %v4914
    %v5047 = vunpack.c.l.b16 %v4915
    %v5048 = vunpack.c.l.b16 %v4916
    %v5049 = vunpack.c.l.b16 %v4917
    %v5050 = vunpack.c.l.b16 %v4918
    %v5051 = vunpack.c.l.b16 %v4919
    %v5052 = vunpack.c.l.b16 %v4920
    %v5053 = vunpack.c.l.b16 %v4921
    %v5054 = vunpack.c.l.b16 %v4922
    %v5055 = vunpack.c.l.b16 %v4923
    %v5056 = vunpack.c.l.b16 %v4924
    %v5057 = vunpack.c.l.b16 %v4925
    %v5058 = vunpack.c.l.b16 %v4926
    %v5059 = vunpack.c.l.b16 %v4927
    %v5060 = vunpack.c.l.b16 %v4928
    %v5061 = vunpack.c.l.b16 %v4929
    %v5062 = vunpack.c.l.b16 %v4930
    %v5063 = vunpack.c.l.b16 %v4931
    %v5064 = vunpack.c.l.b16 %v4932
    %v5065 = vunpack.c.l.b16 %v4933
    %v5066 = vunpack.c.l.b16 %v4934
    %v5067 = vunpack.c.l.b16 %v4935
    %v5068 = vunpack.c.l.b16 %v4936
    %v5069 = vunpack.c.l.b16 %v4937
    %v5070 = vunpack.c.l.b16 %v4938
    %v5071 = vunpack.c.l.b16 %v4939
    %v5072 = vunpack.c.l.b16 %v4940
    %v5073 = vunpack.c.l.b16 %v4941
    %v5074 = vunpack.c.l.b16 %v4942
    %v5075 = vunpack.c.l.b16 %v4943
    %v5076 = vunpack.c.l.b16 %v4944
    %v5077 = vunpack.c.l.b16 %v4945
    %v5078 = vunpack.c.l.b16 %v4946
    %v5079 = vunpack.c.l.b16 %v4947
    %v5080 = vunpack.c.l.b16 %v4948
    %v5081 = vunpack.c.l.b16 %v4949
    %v5082 = vunpack.c.l.b16 %v4950
    %v5083 = vunpack.c.l.b16 %v4951
    %v5084 = vunpack.c.l.b16 %v4952
    %v5085 = vunpack.c.l.b16 %v4953
    %v5086 = vunpack.c.l.b16 %v4954
    %v5087 = vunpack.c.l.b16 %v4955
    %v5088 = vunpack.c.l.b16 %v4956
    %v5089 = vunpack.c.l.b16 %v4957
    %v5090 = vunpack.c.l.b16 %v4958
    %v5091 = vunpack.c.l.b16 %v4959
    %v5092 = vunpack.c.l.b16 %v4960
    %v5093 = vunpack.c.l.b16 %v4961
    %v5094 = vunpack.c.l.b16 %v4962
    %v5095 = vunpack.c.l.b16 %v4963
    %v5096 = vunpack.c.l.b16 %v4964
    %v5097 = vunpack.c.l.b16 %v4965
    %v5098 = vunpack.c.l.b16 %v4966
    %v5099 = vunpack.c.l.b16 %v4967
    %v5100 = vunpack.c.l.b16 %v4968
    %v5101 = vunpack.c.l.b16 %v4969
    %v5102 = vunpack.c.l.b16 %v4970
    %v5103 = vunpack.c.l.b16 %v4971
    %v5104 = vpack.c.b16 %v5041, %v5040
    %v5105 = vpack.c.b16 %v5043, %v5042
    %v5106 = vpack.c.b16 %v5045, %v5044
    %v5107 = vpack.c.b16 %v5047, %v5046
    %v5108 = vpack.c.b16 %v5049, %v5048
    %v5109 = vpack.c.b16 %v5051, %v5050
    %v5110 = vpack.c.b16 %v5053, %v5052
    %v5111 = vpack.c.b16 %v5055, %v5054
    %v5112 = vpack.c.b16 %v5057, %v5056
    %v5113 = vpack.c.b16 %v5059, %v5058
    %v5114 = vpack.c.b16 %v5061, %v5060
    %v5115 = vpack.c.b16 %v5063, %v5062
    %v5116 = vpack.c.b16 %v5065, %v5064
    %v5117 = vpack.c.b16 %v5067, %v5066
    %v5118 = vpack.c.b16 %v5069, %v5068
    %v5119 = vpack.c.b16 %v5071, %v5070
    %v5120 = vpack.c.b16 %v5073, %v5072
    %v5121 = vpack.c.b16 %v5075, %v5074
    %v5122 = vpack.c.b16 %v5077, %v5076
    %v5123 = vpack.c.b16 %v5079, %v5078
    %v5124 = vpack.c.b16 %v5081, %v5080
    %v5125 = vpack.c.b16 %v5083, %v5082
    %v5126 = vpack.c.b16 %v5085, %v5084
    %v5127 = vpack.c.b16 %v5087, %v5086
    %v5128 = vpack.c.b16 %v5089, %v5088
    %v5129 = vpack.c.b16 %v5091, %v5090
    %v5130 = vpack.c.b16 %v5093, %v5092
    %v5131 = vpack.c.b16 %v5095, %v5094
    %v5132 = vpack.c.b16 %v5097, %v5096
    %v5133 = vpack.c.b16 %v5099, %v5098
    %v5134 = vpack.c.b16 %v5101, %v5100
    %v5135 = vpack.c.b16 %v5103, %v5102
    %5168 = vmatpush.bf16.msra.mxu0 %v5111
    %5169 = vmatpush.bf16.msra.mxu0 %v5110
    %5170 = vmatpush.bf16.msra.mxu0 %v5109
    %5171 = vmatpush.bf16.msra.mxu0 %v5108
    %5172 = vmatpush.bf16.msra.mxu0 %v5107
    %5173 = vmatpush.bf16.msra.mxu0 %v5106
    %5174 = vmatpush.bf16.msra.mxu0 %v5105
    %5175 = vmatpush.bf16.msra.mxu0 %v5104
    %5176 = vmatmul.bf16.gmra.mxu0 %v4904
    %v5177 = vpop.f32.mrf.mxu0
    %v5178 = vadd.f32 %v4974, %v5177
    %v5179 = vpop.f32.mrf.mxu0
    %5180 = vdwg.mxu0
    %5181 = vmatpush.bf16.msra.mxu0 %v5119
    %5182 = vmatpush.bf16.msra.mxu0 %v5118
    %5183 = vmatpush.bf16.msra.mxu0 %v5117
    %5184 = vmatpush.bf16.msra.mxu0 %v5116
    %5185 = vmatpush.bf16.msra.mxu0 %v5115
    %5186 = vmatpush.bf16.msra.mxu0 %v5114
    %5187 = vmatpush.bf16.msra.mxu0 %v5113
    %5188 = vmatpush.bf16.msra.mxu0 %v5112
    %5189 = vmatmul.bf16.gmra.mxu0 %v4905
    %v5190 = vpop.f32.mrf.mxu0
    %v5191 = vadd.f32 %v5178, %v5190
    %v5192 = vpop.f32.mrf.mxu0
    %5193 = vdwg.mxu0
    %5194 = vmatpush.bf16.msra.mxu0 %v5127
    %5195 = vmatpush.bf16.msra.mxu0 %v5126
    %5196 = vmatpush.bf16.msra.mxu0 %v5125
    %5197 = vmatpush.bf16.msra.mxu0 %v5124
    %5198 = vmatpush.bf16.msra.mxu0 %v5123
    %5199 = vmatpush.bf16.msra.mxu0 %v5122
    %5200 = vmatpush.bf16.msra.mxu0 %v5121
    %5201 = vmatpush.bf16.msra.mxu0 %v5120
    %5202 = vmatmul.bf16.gmra.mxu0 %v4906
    %v5203 = vpop.f32.mrf.mxu0
    %v5204 = vadd.f32 %v5191, %v5203
    %v5205 = vpop.f32.mrf.mxu0
    %5206 = vdwg.mxu0
    %5207 = vmatpush.bf16.msra.mxu0 %v5135
    %5208 = vmatpush.bf16.msra.mxu0 %v5134
    %5209 = vmatpush.bf16.msra.mxu0 %v5133
    %5210 = vmatpush.bf16.msra.mxu0 %v5132
    %5211 = vmatpush.bf16.msra.mxu0 %v5131
    %5212 = vmatpush.bf16.msra.mxu0 %v5130
    %5213 = vmatpush.bf16.msra.mxu0 %v5129
    %5214 = vmatpush.bf16.msra.mxu0 %v5128
    %5215 = vmatmul.bf16.gmra.mxu0 %v4907
    %v5216 = vpop.f32.mrf.mxu0
    %v5217 = vadd.f32 %v5204, %v5216
    %v5218 = vpop.f32.mrf.mxu0
    %5219 = vdwg.mxu0
    %5220 = vst [vmem:[#allocation17] sm:$0xff] %v5217
    // Predicated region
    $region82: #{tpu_custom_call.1} parent=1 // pred_check
      _
    $region83: #{tpu_custom_call.1} parent=1 // pred_check_branch
      %5222 = sbr.rel (0) target = $region85
    $region84: #{tpu_custom_call.1} parent=1 // pred_region
      %5224 = vsyncadd [#allocation4], 0
      %s5226 = sshll.u32 [#allocation17], 4
      %s5227 = int_to_ptr.vmem [resolvable:$true] %s5226
      %s5228 = sshll.u32 %s11, 4
      %s5229 = int_to_ptr.hbm [resolvable:$true] %s5228
      %5231 = dma.vmem_to_hbm [thread:$0]  %s5227, 128, %s5229, [#allocation4]
    $region85: #{tpu_custom_call.1} parent=1 // pred_fallthru
      _
    // Predicated region
    $region86: #{tpu_custom_call.1} parent=1 // pred_check
      _
    $region87: #{tpu_custom_call.1} parent=1 // pred_check_branch
      %5233 = sbr.rel (0) target = $region89
    $region88: #{tpu_custom_call.1} parent=1 // pred_region
      %5235 = dma.done [#allocation4], 128
    $region89: #{tpu_custom_call.1} parent=1 // pred_fallthru
      _
    %5236 = vsyncpa [#allocation3], 1
    %5237 = vsyncpa [#allocation6], 1
    %5238 = vsyncpa [#allocation9], 1
    %5239 = vsyncpa [#allocation12], 1
    %5240 = vsyncpa [#allocation15], 1
    %5241 = vsyncpa [#allocation4], 1

</llo_original>
